<compile_context>
chip_gen: v6e
topology: v6e:2x2x1
jax: 0.10.0
libtpu: 0.0.40
codegen_flags: <defaults>
</compile_context>

<pallas_src>
import functools
import math

import jax
import jax.numpy as jnp
from jax.experimental import pallas as pl
from jax.experimental.pallas import tpu as pltpu


# ----------------------------------------------------------------------------
# Kernel
# ----------------------------------------------------------------------------
def _update_block_kernel(vec_ref, s_ref,
                         wvuv_ref, w1_ref, b1_ref, w2_ref, b2_ref,
                         vec_out_ref, s_out_ref,
                         *, split_w1, bf16_epilogue):
    f32 = jnp.float32
    tn, d = s_ref.shape
    cdt = wvuv_ref.dtype                         # matmul compute dtype (bf16/f32)

    # --- fused U/V projection: one [3*tn, D] @ [D, 2D] MXU matmul ------------
    # [3, tn, D] -> [3*tn, D] merge is layout-preserving (tn % 16 == 0); the
    # f32 -> compute-dtype cast of the streamed activations happens in-kernel.
    vec_slab = vec_ref[...].reshape(3 * tn, d).astype(cdt)
    uv = jnp.dot(vec_slab, wvuv_ref[...], preferred_element_type=f32)  # [3tn, 2D] f32

    # Work on the slab directly: lane slice at d (d % 128 == 0) and sublane
    # slices at tn (tn % 16 == 0) are tile-aligned -> no relayout copies.
    u = uv[:, :d]                                # U, xyz-major   [3tn, D]
    v = uv[:, d:]                                # V, xyz-major   [3tn, D]
    sum_v = v[0:tn] + v[tn:2 * tn] + v[2 * tn:]  # sum over xyz   [tn, D]
    prod = u * v
    sp = prod[0:tn] + prod[tn:2 * tn] + prod[2 * tn:]     # sum(U*V)  [tn, D]

    # --- h = ScaledSiLU([s || sum_v] @ W1 + b1) -------------------------------
    s_c = s_ref[...].astype(cdt)
    if split_w1:
        # v5e: two K=D matmuls cost the same MXU time on the 128-deep MXU but
        # avoid the lane-dim concat copy (single vector-store slot on v5e).
        h = (jnp.dot(s_c, w1_ref[:d, :], preferred_element_type=f32)
             + jnp.dot(sum_v.astype(cdt), w1_ref[d:, :], preferred_element_type=f32)
             + b1_ref[...])
    else:
        lhs = jnp.concatenate([s_c, sum_v.astype(cdt)], axis=-1)       # [tn, 2D]
        h = jnp.dot(lhs, w1_ref[...], preferred_element_type=f32) + b1_ref[...]
    h = (h * jax.nn.sigmoid(h)) * (1.0 / 0.6)    # ScaledSiLU (f32 VPU/EUP)

    # --- a = h @ [W2vv | W2sv | W2ss] + b2: one [tn,D]@[D,3D] matmul ----------
    a = jnp.dot(h.astype(cdt), w2_ref[...], preferred_element_type=f32) + b2_ref[...]
    a_vv = a[:, :d]
    a_sv = a[:, d:2 * d]
    a_ss = a[:, 2 * d:]

    # --- outputs --------------------------------------------------------------
    s_out_ref[...] = (a_ss + a_sv * sp).astype(s_out_ref.dtype)

    # Largest elementwise op; run it in bf16 on v6e/v7x when the output is
    # bf16 anyway (halves VALU work / vreg pressure), f32 otherwise.
    ep_dt = jnp.bfloat16 if bf16_epilogue else f32
    a_vv_e = a_vv.astype(ep_dt)
    for x in range(3):                           # sublane-aligned slice of U per xyz
        vec_out_ref[x] = (u[x * tn:(x + 1) * tn].astype(ep_dt)
                          * a_vv_e).astype(vec_out_ref.dtype)


# ----------------------------------------------------------------------------
# Wrapper
# ----------------------------------------------------------------------------
def _round_up(x, m):
    return ((x + m - 1) // m) * m


def _device_kind():
    try:
        return jax.devices()[0].device_kind.lower()
    except Exception:
        return ""


def _vmem_capacity_bytes():
    try:
        return int(pltpu.get_tpu_info().vmem_capacity_bytes)
    except Exception:
        return 64 * 1024 * 1024                  # conservative (v7x-sized) fallback


def _choose_tile_n(D, in_isz, out_isz, w_isz, vmem_bytes):
    """Largest node tile (<=512) whose resident weights + double-buffered IO
    tiles + ~24*D*4 B/row of live f32 intermediates fit the VMEM budget."""
    budget = int(0.70 * vmem_bytes)
    w_bytes = 2 * (7 * D * D * w_isz + 4 * D * 4)        # weights (<=2 bufs) + biases
    per_row = 2 * 4 * D * (in_isz + out_isz) + 24 * D * 4
    cap_rows = max(64, (budget - w_bytes) // max(per_row, 1))
    tn = 64
    while tn * 2 <= min(cap_rows, 512):
        tn *= 2
    return tn


def update_block_pallas(vec_3nd, scal_nd, params, *,
                        compute_dtype=jnp.bfloat16, out_dtype=None, tile_n=None):
    """PaiNN UpdateBlock forward.

    vec_3nd: [3, N, D] vectorial features (xyz-major canonical layout)
    scal_nd: [N, D]    scalar features
    Inputs are streamed as-is (no wrapper cast/pad/slice); matmuls run in
    `compute_dtype` with f32 accumulation, elementwise math in f32.
    Returns (vectorial_update [3, N, D], scalar_update [N, D]) in `out_dtype`
    (default: the input dtype).
    """
    three, N, D = vec_3nd.shape
    assert three == 3 and scal_nd.shape == (N, D)
    assert D % 128 == 0, "embedding_dim must be a multiple of 128 (lane tile)"

    if out_dtype is None:
        out_dtype = vec_3nd.dtype
    kind = _device_kind()
    is_v5e = any(t in kind for t in ("v5e", "v5 lite", "v5lite"))
    has_bf16_vpu = any(t in kind for t in ("v6", "v7", "7x"))
    vmem_cap = _vmem_capacity_bytes()

    in_isz = jnp.dtype(vec_3nd.dtype).itemsize
    out_isz = jnp.dtype(out_dtype).itemsize
    w_isz = jnp.dtype(compute_dtype).itemsize

    if tile_n is None:
        tile_n = _choose_tile_n(D, in_isz, out_isz, w_isz, vmem_cap)
        # >= 2 grid steps when N allows, so ("parallel",) can shard the node
        # axis across v7x's two TensorCores (floor of 256).
        tile_n = min(tile_n, max(256, _round_up(-(-N // 2), 16)))
    n_cap = max(16, (N // 16) * 16)              # keep the block within the array
    tile_n = max(16, min(_round_up(int(tile_n), 16), n_cap))
    grid = (pl.cdiv(N, tile_n),)                 # ragged tail handled by Pallas masking

    # Small one-time weight-packing casts (7*D^2 elements), biases kept in f32.
    wvuv = params["wvuv"].astype(compute_dtype)  # [D, 2D]  = [WvU | WvV]
    w1 = params["w1"].astype(compute_dtype)      # [2D, D]
    w2 = params["w2"].astype(compute_dtype)      # [D, 3D]  = [W2vv | W2sv | W2ss]
    b1 = params["b1"].astype(jnp.float32)        # [1, D]
    b2 = params["b2"].astype(jnp.float32)        # [1, 3D]

    vec_spec = pl.BlockSpec((3, tile_n, D), lambda i: (0, i, 0))
    scal_spec = pl.BlockSpec((tile_n, D), lambda i: (i, 0))
    # TODO(synk): if profiling on v7x shows exposed DMA, add
    # pipeline_mode=pl.Buffered(3) to vec_spec/scal_spec instead of retiling.

    kernel = functools.partial(
        _update_block_kernel,
        split_w1=is_v5e,
        bf16_epilogue=bool(has_bf16_vpu
                           and jnp.dtype(out_dtype) == jnp.dtype(jnp.bfloat16)),
    )

    # Advisory cost estimate (three fused matmuls: 12 + 4 + 6 = 22 N D^2 MACs).
    cost = pl.CostEstimate(
        flops=int(22 * N * D * D),
        transcendentals=int(N * D),
        bytes_accessed=int(4 * N * D * (in_isz + out_isz)
                           + 7 * D * D * w_isz + 4 * 4 * D),
    )

    # VMEM: resident weights (+biases) + double-buffered IO tiles + f32 temps.
    w_bytes = 7 * D * D * w_isz + 4 * D * 4
    per_row = 2 * 4 * D * (in_isz + out_isz) + 24 * D * 4
    est = 2 * w_bytes + tile_n * per_row
    vmem_limit = int(min(max(int(1.25 * est), 32 * 2 ** 20), int(0.9 * vmem_cap)))

    out_shape = (jax.ShapeDtypeStruct((3, N, D), out_dtype),
                 jax.ShapeDtypeStruct((N, D), out_dtype))

    def _build(weight_mode):
        def resident(shape):
            imap = lambda i: (0,) * len(shape)
            if weight_mode is None:
                return pl.BlockSpec(shape, imap)
            return pl.BlockSpec(shape, imap, pipeline_mode=weight_mode)
        return pl.pallas_call(
            kernel,
            grid=grid,
            out_shape=out_shape,
            in_specs=[vec_spec, scal_spec,
                      resident(wvuv.shape), resident(w1.shape), resident(b1.shape),
                      resident(w2.shape), resident(b2.shape)],
            out_specs=(vec_spec, scal_spec),
            compiler_params=pltpu.CompilerParams(
                dimension_semantics=("parallel",),
                vmem_limit_bytes=vmem_limit,
            ),
            cost_estimate=cost,
        )

    args = (vec_3nd, scal_nd, wvuv, w1, b1, w2, b2)
    try:
        # Constant-index weights are DMA'd once; single-buffer them to save VMEM.
        return _build(pl.Buffered(1))(*args)
    except Exception:
        # Fallback if this JAX build rejects pipeline_mode / Buffered(1).
        return _build(None)(*args)


# ----------------------------------------------------------------------------
# Parameters (PyTorch convention -> packed kernel layout)
# ----------------------------------------------------------------------------
def _xavier_uniform(key, shape):
    # shape = (fan_out, fan_in), PyTorch nn.Linear weight convention.
    fan_out, fan_in = shape
    bound = math.sqrt(6.0 / (fan_in + fan_out))
    return jax.random.uniform(key, shape, jnp.float32, -bound, bound)


def init_params(key, embedding_dim, bias_scale=0.1):
    D = embedding_dim
    k1, k2, k3, k4, k5 = jax.random.split(key, 5)

    # PyTorch-convention weights of the original module.
    w1_t = _xavier_uniform(k1, (D, 2 * D))            # scalar_feat_proj[0].weight
    w2_t = _xavier_uniform(k2, (3 * D, D))            # scalar_feat_proj[2].weight
    wv_t = _xavier_uniform(k3, (2 * D, D))            # vectorial_feat_proj.weight
    # reset_parameters() zeroes the biases; use small random values here so the
    # bias-add paths are actually exercised by the correctness check.
    b1_t = bias_scale * jax.random.normal(k4, (D,), jnp.float32)
    b2_t = bias_scale * jax.random.normal(k5, (3 * D,), jnp.float32)

    params = {
        # [WvU | WvV]  (U = rows 0::2, V = rows 1::2 of the PyTorch weight)
        "wvuv": jnp.concatenate([wv_t[0::2, :].T, wv_t[1::2, :].T], axis=1),  # [D, 2D]
        "w1": w1_t.T,                                                          # [2D, D]
        "b1": b1_t[None, :],                                                   # [1, D]
        # [W2vv | W2sv | W2ss]  (interleaved rows 0::3 / 1::3 / 2::3)
        "w2": jnp.concatenate([w2_t[0::3, :].T, w2_t[1::3, :].T, w2_t[2::3, :].T],
                              axis=1),                                         # [D, 3D]
        "b2": jnp.concatenate([b2_t[0::3], b2_t[1::3], b2_t[2::3]])[None, :],  # [1, 3D]
    }
    torch_weights = (w1_t, b1_t, w2_t, b2_t, wv_t)
    return params, torch_weights


# ----------------------------------------------------------------------------
# Pure-JAX reference (literal translation of the PyTorch forward)
# ----------------------------------------------------------------------------
def reference_forward(vec_nd3, scal_nd, torch_weights):
    w1, b1, w2, b2, wv = torch_weights
    N, D, _ = vec_nd3.shape
    hp = jax.lax.Precision.HIGHEST
    # vectorial_feat_proj(vec.permute(0,2,1)).permute(0,2,1) -> [N, 2D, 3]
    proj = jnp.einsum("ndx,ed->nex", vec_nd3, wv, precision=hp)
    U = proj[:, 0::2, :]                               # [N, D, 3]
    V = proj[:, 1::2, :]                               # [N, D, 3]
    cat = jnp.concatenate([scal_nd, jnp.sum(V, axis=-1)], axis=-1)   # [N, 2D]
    h = jnp.dot(cat, w1.T, precision=hp) + b1
    h = (h * jax.nn.sigmoid(h)) * (1.0 / 0.6)
    a = (jnp.dot(h, w2.T, precision=hp) + b2).reshape(N, D, 3)
    a_vv, a_sv, a_ss = a[..., 0], a[..., 1], a[..., 2]
    sp = jnp.sum(U * V, axis=-1)
    return U * a_vv[..., None], a_ss + a_sv * sp


# ----------------------------------------------------------------------------
# Demo / correctness check
# ----------------------------------------------------------------------------
if __name__ == "__main__":
    # N deliberately not a multiple of the tile so the ragged tail path is hit.
    N, D = 200, 128
    key = jax.random.PRNGKey(0)
    k_vec, k_scal, k_par = jax.random.split(key, 3)

    vec_nd3 = jax.random.normal(k_vec, (N, D, 3), jnp.float32)     # PyTorch layout
    scal = jax.random.normal(k_scal, (N, D), jnp.float32)
    params, torch_weights = init_params(k_par, D)

    # One-time conversion to the canonical xyz-major kernel layout [3, N, D].
    # (In a full model this layout is used end-to-end, no per-layer transposes.)
    vec_3nd = jnp.transpose(vec_nd3, (2, 0, 1))

    vec_ref_nd3, scal_ref = reference_forward(vec_nd3, scal, torch_weights)
    vec_ref_3nd = jnp.transpose(vec_ref_nd3, (2, 0, 1))

    # f32 end-to-end path (semantics check; explicit small tile -> 4 grid steps
    # with a masked ragged tail block).
    v32, s32 = update_block_pallas(vec_3nd, scal, params,
                                   compute_dtype=jnp.float32, tile_n=64)
    jax.block_until_ready((v32, s32))
    assert v32.shape == (3, N, D) and v32.dtype == jnp.float32
    assert s32.shape == (N, D) and s32.dtype == jnp.float32
    assert jnp.allclose(v32, vec_ref_3nd, atol=1e-2, rtol=1e-2)
    assert jnp.allclose(s32, scal_ref, atol=1e-2, rtol=1e-2)

    # bf16 end-to-end fast path (inputs/outputs bf16, f32 accumulation,
    # auto-picked tile; looser tolerance).
    v16, s16 = update_block_pallas(vec_3nd.astype(jnp.bfloat16),
                                   scal.astype(jnp.bfloat16), params,
                                   compute_dtype=jnp.bfloat16)
    jax.block_until_ready((v16, s16))
    assert v16.shape == (3, N, D) and v16.dtype == jnp.bfloat16
    assert s16.shape == (N, D) and s16.dtype == jnp.bfloat16
    assert jnp.allclose(v16.astype(jnp.float32), vec_ref_3nd, atol=1e-1, rtol=1e-1)
    assert jnp.allclose(s16.astype(jnp.float32), scal_ref, atol=1e-1, rtol=1e-1)

    print("KERNEL_OK")
</pallas_src>

<mosaic_0001>
module attributes {stable_mosaic.version = 11 : i64} {
  func.func @_update_block_kernel(%arg0: i32, %arg1: memref<3x64x128xf32, #tpu.memory_space<vmem>>, %arg2: memref<64x128xf32, #tpu.memory_space<vmem>>, %arg3: memref<128x256xf32, #tpu.memory_space<vmem>>, %arg4: memref<256x128xf32, #tpu.memory_space<vmem>>, %arg5: memref<1x128xf32, #tpu.memory_space<vmem>>, %arg6: memref<128x384xf32, #tpu.memory_space<vmem>>, %arg7: memref<1x384xf32, #tpu.memory_space<vmem>>, %arg8: memref<3x64x128xf32, #tpu.memory_space<vmem>>, %arg9: memref<64x128xf32, #tpu.memory_space<vmem>>) attributes {dimension_semantics = [#tpu.dimension_semantics<parallel>], iteration_bounds = array<i64: 4>, scalar_prefetch = 0 : i64, scratch_operands = 0 : i64, tpu.core_type = #tpu.core_type<tc>, window_params = [{transform_indices = @transform_0, window_bounds = array<i64: 3, 64, 128>}, {transform_indices = @transform_1, window_bounds = array<i64: 64, 128>}, {pipeline_mode = #tpu.pipeline_mode<synchronous>, transform_indices = @transform_2, window_bounds = array<i64: 128, 256>}, {pipeline_mode = #tpu.pipeline_mode<synchronous>, transform_indices = @transform_3, window_bounds = array<i64: 256, 128>}, {pipeline_mode = #tpu.pipeline_mode<synchronous>, transform_indices = @transform_4, window_bounds = array<i64: 1, 128>}, {pipeline_mode = #tpu.pipeline_mode<synchronous>, transform_indices = @transform_5, window_bounds = array<i64: 128, 384>}, {pipeline_mode = #tpu.pipeline_mode<synchronous>, transform_indices = @transform_6, window_bounds = array<i64: 1, 384>}, {transform_indices = @transform_7, window_bounds = array<i64: 3, 64, 128>}, {transform_indices = @transform_8, window_bounds = array<i64: 64, 128>}]} {
    %c0 = arith.constant 0 : index
    %c0_0 = arith.constant 0 : index
    %c0_1 = arith.constant 0 : index
    %0 = vector.load %arg1[%c0, %c0_0, %c0_1] : memref<3x64x128xf32, #tpu.memory_space<vmem>>, vector<3x64x128xf32>
    %1 = vector.shape_cast %0 : vector<3x64x128xf32> to vector<192x128xf32>
    %c0_2 = arith.constant 0 : index
    %c0_3 = arith.constant 0 : index
    %2 = vector.load %arg3[%c0_2, %c0_3] : memref<128x256xf32, #tpu.memory_space<vmem>>, vector<128x256xf32>
    %cst = arith.constant dense<0.000000e+00> : vector<192x256xf32>
    %3 = tpu.matmul %1, %2, %cst {dimension_numbers = #tpu.dot_dimension_numbers<[1], [0], [0], [1], [0, 0, 1, 1], [], []>} : vector<192x128xf32>, vector<128x256xf32>, vector<192x256xf32> -> vector<192x256xf32>
    %4 = vector.extract_strided_slice %3 {offsets = [0, 0], sizes = [192, 128], strides = [1, 1]} : vector<192x256xf32> to vector<192x128xf32>
    %5 = vector.extract_strided_slice %3 {offsets = [0, 128], sizes = [192, 128], strides = [1, 1]} : vector<192x256xf32> to vector<192x128xf32>
    %6 = vector.extract_strided_slice %5 {offsets = [0, 0], sizes = [64, 128], strides = [1, 1]} : vector<192x128xf32> to vector<64x128xf32>
    %7 = vector.extract_strided_slice %5 {offsets = [64, 0], sizes = [64, 128], strides = [1, 1]} : vector<192x128xf32> to vector<64x128xf32>
    %8 = arith.addf %6, %7 : vector<64x128xf32>
    %9 = vector.extract_strided_slice %5 {offsets = [128, 0], sizes = [64, 128], strides = [1, 1]} : vector<192x128xf32> to vector<64x128xf32>
    %10 = arith.addf %8, %9 : vector<64x128xf32>
    %11 = arith.mulf %4, %5 : vector<192x128xf32>
    %12 = vector.extract_strided_slice %11 {offsets = [0, 0], sizes = [64, 128], strides = [1, 1]} : vector<192x128xf32> to vector<64x128xf32>
    %13 = vector.extract_strided_slice %11 {offsets = [64, 0], sizes = [64, 128], strides = [1, 1]} : vector<192x128xf32> to vector<64x128xf32>
    %14 = arith.addf %12, %13 : vector<64x128xf32>
    %15 = vector.extract_strided_slice %11 {offsets = [128, 0], sizes = [64, 128], strides = [1, 1]} : vector<192x128xf32> to vector<64x128xf32>
    %16 = arith.addf %14, %15 : vector<64x128xf32>
    %c0_4 = arith.constant 0 : index
    %c0_5 = arith.constant 0 : index
    %17 = vector.load %arg2[%c0_4, %c0_5] : memref<64x128xf32, #tpu.memory_space<vmem>>, vector<64x128xf32>
    %18 = tpu.concatenate %17, %10 in 1 : vector<64x128xf32>, vector<64x128xf32> -> vector<64x256xf32>
    %c0_6 = arith.constant 0 : index
    %c0_7 = arith.constant 0 : index
    %19 = vector.load %arg4[%c0_6, %c0_7] : memref<256x128xf32, #tpu.memory_space<vmem>>, vector<256x128xf32>
    %cst_8 = arith.constant dense<0.000000e+00> : vector<64x128xf32>
    %20 = tpu.matmul %18, %19, %cst_8 {dimension_numbers = #tpu.dot_dimension_numbers<[1], [0], [0], [1], [0, 0, 1, 1], [], []>} : vector<64x256xf32>, vector<256x128xf32>, vector<64x128xf32> -> vector<64x128xf32>
    %c0_9 = arith.constant 0 : index
    %c0_10 = arith.constant 0 : index
    %21 = vector.load %arg5[%c0_9, %c0_10] : memref<1x128xf32, #tpu.memory_space<vmem>>, vector<1x128xf32>
    %22 = vector.broadcast %21 : vector<1x128xf32> to vector<64x128xf32>
    %23 = arith.addf %20, %22 : vector<64x128xf32>
    %24 = arith.negf %23 : vector<64x128xf32>
    %25 = math.exp %24 : vector<64x128xf32>
    %cst_11 = arith.constant 1.000000e+00 : f32
    %26 = vector.broadcast %cst_11 : f32 to vector<64x128xf32>
    %27 = arith.addf %26, %25 : vector<64x128xf32>
    %28 = arith.divf %26, %27 : vector<64x128xf32>
    %29 = arith.mulf %23, %28 : vector<64x128xf32>
    %cst_12 = arith.constant 1.66666663 : f32
    %30 = vector.broadcast %cst_12 : f32 to vector<64x128xf32>
    %31 = arith.mulf %29, %30 : vector<64x128xf32>
    %c0_13 = arith.constant 0 : index
    %c0_14 = arith.constant 0 : index
    %32 = vector.load %arg6[%c0_13, %c0_14] : memref<128x384xf32, #tpu.memory_space<vmem>>, vector<128x384xf32>
    %cst_15 = arith.constant dense<0.000000e+00> : vector<64x384xf32>
    %33 = tpu.matmul %31, %32, %cst_15 {dimension_numbers = #tpu.dot_dimension_numbers<[1], [0], [0], [1], [0, 0, 1, 1], [], []>} : vector<64x128xf32>, vector<128x384xf32>, vector<64x384xf32> -> vector<64x384xf32>
    %c0_16 = arith.constant 0 : index
    %c0_17 = arith.constant 0 : index
    %34 = vector.load %arg7[%c0_16, %c0_17] : memref<1x384xf32, #tpu.memory_space<vmem>>, vector<1x384xf32>
    %35 = vector.broadcast %34 : vector<1x384xf32> to vector<64x384xf32>
    %36 = arith.addf %33, %35 : vector<64x384xf32>
    %37 = vector.extract_strided_slice %36 {offsets = [0, 0], sizes = [64, 128], strides = [1, 1]} : vector<64x384xf32> to vector<64x128xf32>
    %38 = vector.extract_strided_slice %36 {offsets = [0, 128], sizes = [64, 128], strides = [1, 1]} : vector<64x384xf32> to vector<64x128xf32>
    %39 = vector.extract_strided_slice %36 {offsets = [0, 256], sizes = [64, 128], strides = [1, 1]} : vector<64x384xf32> to vector<64x128xf32>
    %40 = arith.mulf %38, %16 : vector<64x128xf32>
    %41 = arith.addf %39, %40 : vector<64x128xf32>
    %c0_18 = arith.constant 0 : index
    %c0_19 = arith.constant 0 : index
    %42 = vector.load %arg9[%c0_18, %c0_19] : memref<64x128xf32, #tpu.memory_space<vmem>>, vector<64x128xf32>
    tpu.vector_store %arg9[%c0_18, %c0_19], %41 {strides = array<i32>} : memref<64x128xf32, #tpu.memory_space<vmem>>, vector<64x128xf32>,
    %43 = vector.extract_strided_slice %4 {offsets = [0, 0], sizes = [64, 128], strides = [1, 1]} : vector<192x128xf32> to vector<64x128xf32>
    %44 = arith.mulf %43, %37 : vector<64x128xf32>
    %c0_20 = arith.constant 0 : index
    %c0_21 = arith.constant 0 : index
    %c0_22 = arith.constant 0 : index
    %45 = vector.load %arg8[%c0_20, %c0_21, %c0_22] : memref<3x64x128xf32, #tpu.memory_space<vmem>>, vector<1x64x128xf32>
    %46 = vector.shape_cast %45 : vector<1x64x128xf32> to vector<64x128xf32>
    %47 = vector.shape_cast %44 : vector<64x128xf32> to vector<1x64x128xf32>
    tpu.vector_store %arg8[%c0_20, %c0_21, %c0_22], %47 {strides = array<i32>} : memref<3x64x128xf32, #tpu.memory_space<vmem>>, vector<1x64x128xf32>,
    %48 = vector.extract_strided_slice %4 {offsets = [64, 0], sizes = [64, 128], strides = [1, 1]} : vector<192x128xf32> to vector<64x128xf32>
    %49 = arith.mulf %48, %37 : vector<64x128xf32>
    %c1 = arith.constant 1 : index
    %c0_23 = arith.constant 0 : index
    %c0_24 = arith.constant 0 : index
    %50 = vector.load %arg8[%c1, %c0_23, %c0_24] : memref<3x64x128xf32, #tpu.memory_space<vmem>>, vector<1x64x128xf32>
    %51 = vector.shape_cast %50 : vector<1x64x128xf32> to vector<64x128xf32>
    %52 = vector.shape_cast %49 : vector<64x128xf32> to vector<1x64x128xf32>
    tpu.vector_store %arg8[%c1, %c0_23, %c0_24], %52 {strides = array<i32>} : memref<3x64x128xf32, #tpu.memory_space<vmem>>, vector<1x64x128xf32>,
    %53 = vector.extract_strided_slice %4 {offsets = [128, 0], sizes = [64, 128], strides = [1, 1]} : vector<192x128xf32> to vector<64x128xf32>
    %54 = arith.mulf %53, %37 : vector<64x128xf32>
    %c2 = arith.constant 2 : index
    %c0_25 = arith.constant 0 : index
    %c0_26 = arith.constant 0 : index
    %55 = vector.load %arg8[%c2, %c0_25, %c0_26] : memref<3x64x128xf32, #tpu.memory_space<vmem>>, vector<1x64x128xf32>
    %56 = vector.shape_cast %55 : vector<1x64x128xf32> to vector<64x128xf32>
    %57 = vector.shape_cast %54 : vector<64x128xf32> to vector<1x64x128xf32>
    tpu.vector_store %arg8[%c2, %c0_25, %c0_26], %57 {strides = array<i32>} : memref<3x64x128xf32, #tpu.memory_space<vmem>>, vector<1x64x128xf32>,
    return
  }
  func.func @transform_0(%arg0: i32) -> (i32, i32, i32) {
    %c0_i32 = arith.constant 0 : i32
    %c0_i32_0 = arith.constant 0 : i32
    %c0_i32_1 = arith.constant 0 : i32
    return %c0_i32, %arg0, %c0_i32_0 : i32, i32, i32
  }
  func.func @transform_1(%arg0: i32) -> (i32, i32) {
    %c0_i32 = arith.constant 0 : i32
    %c0_i32_0 = arith.constant 0 : i32
    return %arg0, %c0_i32 : i32, i32
  }
  func.func @transform_2(%arg0: i32) -> (i32, i32) {
    %c0_i32 = arith.constant 0 : i32
    %c0_i32_0 = arith.constant 0 : i32
    %c0_i32_1 = arith.constant 0 : i32
    return %c0_i32, %c0_i32_0 : i32, i32
  }
  func.func @transform_3(%arg0: i32) -> (i32, i32) {
    %c0_i32 = arith.constant 0 : i32
    %c0_i32_0 = arith.constant 0 : i32
    %c0_i32_1 = arith.constant 0 : i32
    return %c0_i32, %c0_i32_0 : i32, i32
  }
  func.func @transform_4(%arg0: i32) -> (i32, i32) {
    %c0_i32 = arith.constant 0 : i32
    %c0_i32_0 = arith.constant 0 : i32
    %c0_i32_1 = arith.constant 0 : i32
    return %c0_i32, %c0_i32_0 : i32, i32
  }
  func.func @transform_5(%arg0: i32) -> (i32, i32) {
    %c0_i32 = arith.constant 0 : i32
    %c0_i32_0 = arith.constant 0 : i32
    %c0_i32_1 = arith.constant 0 : i32
    return %c0_i32, %c0_i32_0 : i32, i32
  }
  func.func @transform_6(%arg0: i32) -> (i32, i32) {
    %c0_i32 = arith.constant 0 : i32
    %c0_i32_0 = arith.constant 0 : i32
    %c0_i32_1 = arith.constant 0 : i32
    return %c0_i32, %c0_i32_0 : i32, i32
  }
  func.func @transform_7(%arg0: i32) -> (i32, i32, i32) {
    %c0_i32 = arith.constant 0 : i32
    %c0_i32_0 = arith.constant 0 : i32
    %c0_i32_1 = arith.constant 0 : i32
    return %c0_i32, %arg0, %c0_i32_0 : i32, i32, i32
  }
  func.func @transform_8(%arg0: i32) -> (i32, i32) {
    %c0_i32 = arith.constant 0 : i32
    %c0_i32_0 = arith.constant 0 : i32
    return %arg0, %c0_i32 : i32, i32
  }
}

module attributes {stable_mosaic.version = 11 : i64} {
  func.func @_update_block_kernel(%arg0: i32, %arg1: memref<3x64x128xf32, #tpu.memory_space<vmem>>, %arg2: memref<64x128xf32, #tpu.memory_space<vmem>>, %arg3: memref<128x256xf32, #tpu.memory_space<vmem>>, %arg4: memref<256x128xf32, #tpu.memory_space<vmem>>, %arg5: memref<1x128xf32, #tpu.memory_space<vmem>>, %arg6: memref<128x384xf32, #tpu.memory_space<vmem>>, %arg7: memref<1x384xf32, #tpu.memory_space<vmem>>, %arg8: memref<3x64x128xf32, #tpu.memory_space<vmem>>, %arg9: memref<64x128xf32, #tpu.memory_space<vmem>>) attributes {dimension_semantics = [#tpu.dimension_semantics<parallel>], iteration_bounds = array<i64: 4>, scalar_prefetch = 0 : i64, scratch_operands = 0 : i64, tpu.core_type = #tpu.core_type<tc>, window_params = [{transform_indices = @transform_0, window_bounds = array<i64: 3, 64, 128>}, {transform_indices = @transform_1, window_bounds = array<i64: 64, 128>}, {pipeline_mode = #tpu.pipeline_mode<synchronous>, transform_indices = @transform_2, window_bounds = array<i64: 128, 256>}, {pipeline_mode = #tpu.pipeline_mode<synchronous>, transform_indices = @transform_3, window_bounds = array<i64: 256, 128>}, {pipeline_mode = #tpu.pipeline_mode<synchronous>, transform_indices = @transform_4, window_bounds = array<i64: 1, 128>}, {pipeline_mode = #tpu.pipeline_mode<synchronous>, transform_indices = @transform_5, window_bounds = array<i64: 128, 384>}, {pipeline_mode = #tpu.pipeline_mode<synchronous>, transform_indices = @transform_6, window_bounds = array<i64: 1, 384>}, {transform_indices = @transform_7, window_bounds = array<i64: 3, 64, 128>}, {transform_indices = @transform_8, window_bounds = array<i64: 64, 128>}]} {
    %c0 = arith.constant 0 : index
    %c0_0 = arith.constant 0 : index
    %c0_1 = arith.constant 0 : index
    %0 = vector.load %arg1[%c0, %c0_0, %c0_1] : memref<3x64x128xf32, #tpu.memory_space<vmem>>, vector<3x64x128xf32>
    %1 = vector.shape_cast %0 : vector<3x64x128xf32> to vector<192x128xf32>
    %c0_2 = arith.constant 0 : index
    %c0_3 = arith.constant 0 : index
    %2 = vector.load %arg3[%c0_2, %c0_3] : memref<128x256xf32, #tpu.memory_space<vmem>>, vector<128x256xf32>
    %cst = arith.constant dense<0.000000e+00> : vector<192x256xf32>
    %3 = tpu.matmul %1, %2, %cst {dimension_numbers = #tpu.dot_dimension_numbers<[1], [0], [0], [1], [0, 0, 1, 1], [], []>} : vector<192x128xf32>, vector<128x256xf32>, vector<192x256xf32> -> vector<192x256xf32>
    %4 = vector.extract_strided_slice %3 {offsets = [0, 0], sizes = [192, 128], strides = [1, 1]} : vector<192x256xf32> to vector<192x128xf32>
    %5 = vector.extract_strided_slice %3 {offsets = [0, 128], sizes = [192, 128], strides = [1, 1]} : vector<192x256xf32> to vector<192x128xf32>
    %6 = vector.extract_strided_slice %5 {offsets = [0, 0], sizes = [64, 128], strides = [1, 1]} : vector<192x128xf32> to vector<64x128xf32>
    %7 = vector.extract_strided_slice %5 {offsets = [64, 0], sizes = [64, 128], strides = [1, 1]} : vector<192x128xf32> to vector<64x128xf32>
    %8 = arith.addf %6, %7 : vector<64x128xf32>
    %9 = vector.extract_strided_slice %5 {offsets = [128, 0], sizes = [64, 128], strides = [1, 1]} : vector<192x128xf32> to vector<64x128xf32>
    %10 = arith.addf %8, %9 : vector<64x128xf32>
    %11 = arith.mulf %4, %5 : vector<192x128xf32>
    %12 = vector.extract_strided_slice %11 {offsets = [0, 0], sizes = [64, 128], strides = [1, 1]} : vector<192x128xf32> to vector<64x128xf32>
    %13 = vector.extract_strided_slice %11 {offsets = [64, 0], sizes = [64, 128], strides = [1, 1]} : vector<192x128xf32> to vector<64x128xf32>
    %14 = arith.addf %12, %13 : vector<64x128xf32>
    %15 = vector.extract_strided_slice %11 {offsets = [128, 0], sizes = [64, 128], strides = [1, 1]} : vector<192x128xf32> to vector<64x128xf32>
    %16 = arith.addf %14, %15 : vector<64x128xf32>
    %c0_4 = arith.constant 0 : index
    %c0_5 = arith.constant 0 : index
    %17 = vector.load %arg2[%c0_4, %c0_5] : memref<64x128xf32, #tpu.memory_space<vmem>>, vector<64x128xf32>
    %18 = tpu.concatenate %17, %10 in 1 : vector<64x128xf32>, vector<64x128xf32> -> vector<64x256xf32>
    %c0_6 = arith.constant 0 : index
    %c0_7 = arith.constant 0 : index
    %19 = vector.load %arg4[%c0_6, %c0_7] : memref<256x128xf32, #tpu.memory_space<vmem>>, vector<256x128xf32>
    %cst_8 = arith.constant dense<0.000000e+00> : vector<64x128xf32>
    %20 = tpu.matmul %18, %19, %cst_8 {dimension_numbers = #tpu.dot_dimension_numbers<[1], [0], [0], [1], [0, 0, 1, 1], [], []>} : vector<64x256xf32>, vector<256x128xf32>, vector<64x128xf32> -> vector<64x128xf32>
    %c0_9 = arith.constant 0 : index
    %c0_10 = arith.constant 0 : index
    %21 = vector.load %arg5[%c0_9, %c0_10] : memref<1x128xf32, #tpu.memory_space<vmem>>, vector<1x128xf32>
    %22 = vector.broadcast %21 : vector<1x128xf32> to vector<64x128xf32>
    %23 = arith.addf %20, %22 : vector<64x128xf32>
    %24 = arith.negf %23 : vector<64x128xf32>
    %25 = math.exp %24 : vector<64x128xf32>
    %cst_11 = arith.constant 1.000000e+00 : f32
    %26 = vector.broadcast %cst_11 : f32 to vector<64x128xf32>
    %27 = arith.addf %26, %25 : vector<64x128xf32>
    %28 = arith.divf %26, %27 : vector<64x128xf32>
    %29 = arith.mulf %23, %28 : vector<64x128xf32>
    %cst_12 = arith.constant 1.66666663 : f32
    %30 = vector.broadcast %cst_12 : f32 to vector<64x128xf32>
    %31 = arith.mulf %29, %30 : vector<64x128xf32>
    %c0_13 = arith.constant 0 : index
    %c0_14 = arith.constant 0 : index
    %32 = vector.load %arg6[%c0_13, %c0_14] : memref<128x384xf32, #tpu.memory_space<vmem>>, vector<128x384xf32>
    %cst_15 = arith.constant dense<0.000000e+00> : vector<64x384xf32>
    %33 = tpu.matmul %31, %32, %cst_15 {dimension_numbers = #tpu.dot_dimension_numbers<[1], [0], [0], [1], [0, 0, 1, 1], [], []>} : vector<64x128xf32>, vector<128x384xf32>, vector<64x384xf32> -> vector<64x384xf32>
    %c0_16 = arith.constant 0 : index
    %c0_17 = arith.constant 0 : index
    %34 = vector.load %arg7[%c0_16, %c0_17] : memref<1x384xf32, #tpu.memory_space<vmem>>, vector<1x384xf32>
    %35 = vector.broadcast %34 : vector<1x384xf32> to vector<64x384xf32>
    %36 = arith.addf %33, %35 : vector<64x384xf32>
    %37 = vector.extract_strided_slice %36 {offsets = [0, 0], sizes = [64, 128], strides = [1, 1]} : vector<64x384xf32> to vector<64x128xf32>
    %38 = vector.extract_strided_slice %36 {offsets = [0, 128], sizes = [64, 128], strides = [1, 1]} : vector<64x384xf32> to vector<64x128xf32>
    %39 = vector.extract_strided_slice %36 {offsets = [0, 256], sizes = [64, 128], strides = [1, 1]} : vector<64x384xf32> to vector<64x128xf32>
    %40 = arith.mulf %38, %16 : vector<64x128xf32>
    %41 = arith.addf %39, %40 : vector<64x128xf32>
    %c0_18 = arith.constant 0 : index
    %c0_19 = arith.constant 0 : index
    %42 = vector.load %arg9[%c0_18, %c0_19] : memref<64x128xf32, #tpu.memory_space<vmem>>, vector<64x128xf32>
    tpu.vector_store %arg9[%c0_18, %c0_19], %41 {strides = array<i32>} : memref<64x128xf32, #tpu.memory_space<vmem>>, vector<64x128xf32>,
    %43 = vector.extract_strided_slice %4 {offsets = [0, 0], sizes = [64, 128], strides = [1, 1]} : vector<192x128xf32> to vector<64x128xf32>
    %44 = arith.mulf %43, %37 : vector<64x128xf32>
    %c0_20 = arith.constant 0 : index
    %c0_21 = arith.constant 0 : index
    %c0_22 = arith.constant 0 : index
    %45 = vector.load %arg8[%c0_20, %c0_21, %c0_22] : memref<3x64x128xf32, #tpu.memory_space<vmem>>, vector<1x64x128xf32>
    %46 = vector.shape_cast %45 : vector<1x64x128xf32> to vector<64x128xf32>
    %47 = vector.shape_cast %44 : vector<64x128xf32> to vector<1x64x128xf32>
    tpu.vector_store %arg8[%c0_20, %c0_21, %c0_22], %47 {strides = array<i32>} : memref<3x64x128xf32, #tpu.memory_space<vmem>>, vector<1x64x128xf32>,
    %48 = vector.extract_strided_slice %4 {offsets = [64, 0], sizes = [64, 128], strides = [1, 1]} : vector<192x128xf32> to vector<64x128xf32>
    %49 = arith.mulf %48, %37 : vector<64x128xf32>
    %c1 = arith.constant 1 : index
    %c0_23 = arith.constant 0 : index
    %c0_24 = arith.constant 0 : index
    %50 = vector.load %arg8[%c1, %c0_23, %c0_24] : memref<3x64x128xf32, #tpu.memory_space<vmem>>, vector<1x64x128xf32>
    %51 = vector.shape_cast %50 : vector<1x64x128xf32> to vector<64x128xf32>
    %52 = vector.shape_cast %49 : vector<64x128xf32> to vector<1x64x128xf32>
    tpu.vector_store %arg8[%c1, %c0_23, %c0_24], %52 {strides = array<i32>} : memref<3x64x128xf32, #tpu.memory_space<vmem>>, vector<1x64x128xf32>,
    %53 = vector.extract_strided_slice %4 {offsets = [128, 0], sizes = [64, 128], strides = [1, 1]} : vector<192x128xf32> to vector<64x128xf32>
    %54 = arith.mulf %53, %37 : vector<64x128xf32>
    %c2 = arith.constant 2 : index
    %c0_25 = arith.constant 0 : index
    %c0_26 = arith.constant 0 : index
    %55 = vector.load %arg8[%c2, %c0_25, %c0_26] : memref<3x64x128xf32, #tpu.memory_space<vmem>>, vector<1x64x128xf32>
    %56 = vector.shape_cast %55 : vector<1x64x128xf32> to vector<64x128xf32>
    %57 = vector.shape_cast %54 : vector<64x128xf32> to vector<1x64x128xf32>
    tpu.vector_store %arg8[%c2, %c0_25, %c0_26], %57 {strides = array<i32>} : memref<3x64x128xf32, #tpu.memory_space<vmem>>, vector<1x64x128xf32>,
    return
  }
  func.func @transform_0(%arg0: i32) -> (i32, i32, i32) {
    %c0_i32 = arith.constant 0 : i32
    %c0_i32_0 = arith.constant 0 : i32
    %c0_i32_1 = arith.constant 0 : i32
    return %c0_i32, %arg0, %c0_i32_0 : i32, i32, i32
  }
  func.func @transform_1(%arg0: i32) -> (i32, i32) {
    %c0_i32 = arith.constant 0 : i32
    %c0_i32_0 = arith.constant 0 : i32
    return %arg0, %c0_i32 : i32, i32
  }
  func.func @transform_2(%arg0: i32) -> (i32, i32) {
    %c0_i32 = arith.constant 0 : i32
    %c0_i32_0 = arith.constant 0 : i32
    %c0_i32_1 = arith.constant 0 : i32
    return %c0_i32, %c0_i32_0 : i32, i32
  }
  func.func @transform_3(%arg0: i32) -> (i32, i32) {
    %c0_i32 = arith.constant 0 : i32
    %c0_i32_0 = arith.constant 0 : i32
    %c0_i32_1 = arith.constant 0 : i32
    return %c0_i32, %c0_i32_0 : i32, i32
  }
  func.func @transform_4(%arg0: i32) -> (i32, i32) {
    %c0_i32 = arith.constant 0 : i32
    %c0_i32_0 = arith.constant 0 : i32
    %c0_i32_1 = arith.constant 0 : i32
    return %c0_i32, %c0_i32_0 : i32, i32
  }
  func.func @transform_5(%arg0: i32) -> (i32, i32) {
    %c0_i32 = arith.constant 0 : i32
    %c0_i32_0 = arith.constant 0 : i32
    %c0_i32_1 = arith.constant 0 : i32
    return %c0_i32, %c0_i32_0 : i32, i32
  }
  func.func @transform_6(%arg0: i32) -> (i32, i32) {
    %c0_i32 = arith.constant 0 : i32
    %c0_i32_0 = arith.constant 0 : i32
    %c0_i32_1 = arith.constant 0 : i32
    return %c0_i32, %c0_i32_0 : i32, i32
  }
  func.func @transform_7(%arg0: i32) -> (i32, i32, i32) {
    %c0_i32 = arith.constant 0 : i32
    %c0_i32_0 = arith.constant 0 : i32
    %c0_i32_1 = arith.constant 0 : i32
    return %c0_i32, %arg0, %c0_i32_0 : i32, i32, i32
  }
  func.func @transform_8(%arg0: i32) -> (i32, i32) {
    %c0_i32 = arith.constant 0 : i32
    %c0_i32_0 = arith.constant 0 : i32
    return %arg0, %c0_i32 : i32, i32
  }
}

</mosaic_0001>

<llo_original>
// kernel: tpu_custom_call.1
$region0: #{tpu_custom_call.1}
  #allocation0 [shape = 'u32[]', space=smem, size = 0x4, offset = 0x4, fixed_abs, tag = 'smem constant byte address 0x4 - core index']
  #allocation1 [shape = 'u32[144,128]{1,0:T(1,128)}', space=vmem, size = 0x12000, scoped, tag = 'internal scratch']
  #allocation14 [shape = 's32[]', space=sflag, size = 0x4, offset = 0, fixed_abs, tag = 'sflag constant byte address 0x0 - dummy sync flag']
  #allocation16 [shape = 's32[]', space=sflag, size = 0x4, offset = 0, fixed_abs, tag = 'sflag constant byte address 0x0 - dummy sync flag']
  %s0 = inlined_call_operand.hbm [shape: f32[3,200,128], index: 0, kind: input, shape index: {}]
  %s1 = inlined_call_operand.hbm [shape: f32[200,128], index: 1, kind: input, shape index: {}]
  %s2 = inlined_call_operand.hbm [shape: f32[128,256], index: 2, kind: input, shape index: {}]
  %s3 = inlined_call_operand.hbm [shape: f32[256,128], index: 3, kind: input, shape index: {}]
  %s4 = inlined_call_operand.vmem [shape: f32[1,128], index: 4, kind: input, shape index: {}]
  %s5 = inlined_call_operand.hbm [shape: f32[128,384], index: 5, kind: input, shape index: {}]
  %s6 = inlined_call_operand.vmem [shape: f32[1,384], index: 6, kind: input, shape index: {}]
  %s7 = inlined_call_operand.hbm [shape: f32[3,200,128], index: 7, kind: output, shape index: {0}]
  %s8 = inlined_call_operand.hbm [shape: f32[200,128], index: 8, kind: output, shape index: {1}]
  %9 = xla_tuple %s7, %s8
  %s10 = sld [smem:[#allocation0]]
  $region89: #{tpu_custom_call.1} parent=0
    _
  %s12 = ssub.s32 1, %s10
  %s13 = scalar_select 0, %s12, %s10
  $region1: #{tpu_custom_call.1} parent=0
    #allocation2 [shape = 'u8[196608]{0}', space=vmem, size = 0x30000, scoped, tag = 'input window, operand 0']
    #allocation3 [shape = 's32[2]{0}', space=sflag, size = 0x8, scoped, tag = 'scoped memory for tpu_custom_call.1']
    #allocation4 [shape = 's32[2]{0}', space=sflag, size = 0x8, scoped, tag = 'scoped memory for tpu_custom_call.1']
    #allocation5 [shape = 'u8[65536]{0}', space=vmem, size = 0x10000, scoped, tag = 'input window, operand 1']
    #allocation6 [shape = 's32[2]{0}', space=sflag, size = 0x8, scoped, tag = 'scoped memory for tpu_custom_call.1']
    #allocation7 [shape = 'u8[131072]{0}', space=vmem, size = 0x20000, scoped, tag = 'input window, operand 2, single buffered']
    #allocation8 [shape = 'u8[131072]{0}', space=vmem, size = 0x20000, scoped, tag = 'input window, operand 3, single buffered']
    #allocation9 [shape = 's32[1]{0}', space=sflag, size = 0x4, scoped, tag = 'scoped memory for tpu_custom_call.1']
    #allocation10 [shape = 'u8[196608]{0}', space=vmem, size = 0x30000, scoped, tag = 'input window, operand 5, single buffered']
    #allocation11 [shape = 'u8[196608]{0}', space=vmem, size = 0x30000, scoped, tag = 'output window, operand 0']
    #allocation12 [shape = 'u8[65536]{0}', space=vmem, size = 0x10000, scoped, tag = 'output window, operand 1']
    #allocation13 [shape = 's32[2]{0}', space=sflag, size = 0x8, scoped, tag = 'scoped memory for tpu_custom_call.1']
    %14 = vsyncpa [#allocation3], 0
    %s15 = scalar_lea.sflag [#allocation3], 1
    %16 = vsyncpa %s15, 0
    %17 = vsyncpa [#allocation6], 0
    %s18 = scalar_lea.sflag [#allocation6], 1
    %19 = vsyncpa %s18, 0
    %20 = vsyncpa [#allocation9], 0
    %21 = vsyncpa [#allocation4], 0
    %s22 = scalar_lea.sflag [#allocation4], 1
    %23 = vsyncpa %s22, 0
    %24 = vsyncpa [#allocation13], 0
    %s25 = scalar_lea.sflag [#allocation13], 1
    %26 = vsyncpa %s25, 0
    loop: start=0, step=1, limit=6
    $region2: #{tpu_custom_call.1} parent=1 // loop_pre_header
      _
    $region3: #{tpu_custom_call.1} parent=1 // loop_header
      %s28 = sphi 0, %s32
      %p29 = scmp.ge.s32.totalorder %s28, 6
      %s38 = sphi 0, %s40
      %s41 = sphi 0, %s38
      %s42 = sphi 0, %s41
      %s58 = sphi 0, %s42
      %s64 = sphi 0, %s66
      %s67 = sphi 0, %s64
      %s68 = sphi 0, %s67
      %s84 = sphi 0, %s68
      %s88 = sphi 0, %s88
      %s90 = sphi 0, %s88
      %s91 = sphi 0, %s90
      %s105 = sphi 0, %s91
      %s109 = sphi 0, %s109
      %s111 = sphi 0, %s109
      %s112 = sphi 0, %s111
      %s126 = sphi 0, %s112
      %s130 = sphi 0, %s130
      %s132 = sphi 0, %s130
      %s133 = sphi 0, %s132
      %s147 = sphi 0, %s133
      %s151 = sphi 0, %s151
      %s153 = sphi 0, %s151
      %s154 = sphi 0, %s153
      %s168 = sphi 0, %s154
      %s172 = sphi 0, %s172
      %s174 = sphi 0, %s172
      %s175 = sphi 0, %s174
      %s189 = sphi 0, %s175
      %s195 = sphi 0, %s197
      %s198 = sphi 0, %s195
      %s199 = sphi 0, %s198
      %s215 = sphi 0, %s199
      %s221 = sphi 0, %s223
      %s224 = sphi 0, %s221
      %s225 = sphi 0, %s224
      %s241 = sphi 0, %s225
    $region4: #{tpu_custom_call.1} parent=1 // loop_header_branch
      %31 = sbr.rel (%p29) target = $region8
    $region5: #{tpu_custom_call.1} parent=1 // loop_body
      %s33 = ssub.s32 %s28, 1
      %s34 = ssub.s32 %s28, 2
      %s35 = sadd.s32 %s28, 1
      %s36 = ssub.s32 %s28, %s35
      %p37 = scmp.eq.s32.totalorder %s36, 0
      %s39 = sadd.s32 %s38, 1
      %s40 = scalar_select %p37, %s38, %s39
      %p43 = pneg %p37
      %p44 = scmp.eq.s32.totalorder %s28, 3
      %p45 = por %p43, %p44
      %p46 = scmp.ne.s32.totalorder %s38, %s41
      %p47 = scmp.eq.s32.totalorder %s28, 0
      %p48 = por %p46, %p47
      %p49 = scmp.ne.s32.totalorder %s38, %s41
      %p50 = scmp.eq.s32.totalorder %s33, 3
      %p51 = por %p49, %p50
      %p52 = scmp.ne.s32.totalorder %s41, %s42
      %p53 = scmp.eq.s32.totalorder %s33, 0
      %p54 = por %p52, %p53
      %p55 = scmp.ne.s32.totalorder %s41, %s42
      %p56 = scmp.eq.s32.totalorder %s34, 3
      %p57 = por %p55, %p56
      %p59 = scmp.ne.s32.totalorder %s42, %s58
      %p60 = scmp.eq.s32.totalorder %s34, 0
      %p61 = por %p59, %p60
      %s62 = ssub.s32 %s28, %s35
      %p63 = scmp.eq.s32.totalorder %s62, 0
      %s65 = sadd.s32 %s64, 1
      %s66 = scalar_select %p63, %s64, %s65
      %p69 = pneg %p63
      %p70 = scmp.eq.s32.totalorder %s28, 3
      %p71 = por %p69, %p70
      %p72 = scmp.ne.s32.totalorder %s64, %s67
      %p73 = scmp.eq.s32.totalorder %s28, 0
      %p74 = por %p72, %p73
      %p75 = scmp.ne.s32.totalorder %s64, %s67
      %p76 = scmp.eq.s32.totalorder %s33, 3
      %p77 = por %p75, %p76
      %p78 = scmp.ne.s32.totalorder %s67, %s68
      %p79 = scmp.eq.s32.totalorder %s33, 0
      %p80 = por %p78, %p79
      %p81 = scmp.ne.s32.totalorder %s67, %s68
      %p82 = scmp.eq.s32.totalorder %s34, 3
      %p83 = por %p81, %p82
      %p85 = scmp.ne.s32.totalorder %s68, %s84
      %p86 = scmp.eq.s32.totalorder %s34, 0
      %p87 = por %p85, %p86
      %s89 = sadd.s32 %s88, 1
      %p92 = scmp.eq.s32.totalorder %s28, 3
      %p93 = scmp.ne.s32.totalorder %s88, %s90
      %p94 = scmp.eq.s32.totalorder %s28, 0
      %p95 = por %p93, %p94
      %p96 = scmp.ne.s32.totalorder %s88, %s90
      %p97 = scmp.eq.s32.totalorder %s33, 3
      %p98 = por %p96, %p97
      %p99 = scmp.ne.s32.totalorder %s90, %s91
      %p100 = scmp.eq.s32.totalorder %s33, 0
      %p101 = por %p99, %p100
      %p102 = scmp.ne.s32.totalorder %s90, %s91
      %p103 = scmp.eq.s32.totalorder %s34, 3
      %p104 = por %p102, %p103
      %p106 = scmp.ne.s32.totalorder %s91, %s105
      %p107 = scmp.eq.s32.totalorder %s34, 0
      %p108 = por %p106, %p107
      %s110 = sadd.s32 %s109, 1
      %p113 = scmp.eq.s32.totalorder %s28, 3
      %p114 = scmp.ne.s32.totalorder %s109, %s111
      %p115 = scmp.eq.s32.totalorder %s28, 0
      %p116 = por %p114, %p115
      %p117 = scmp.ne.s32.totalorder %s109, %s111
      %p118 = scmp.eq.s32.totalorder %s33, 3
      %p119 = por %p117, %p118
      %p120 = scmp.ne.s32.totalorder %s111, %s112
      %p121 = scmp.eq.s32.totalorder %s33, 0
      %p122 = por %p120, %p121
      %p123 = scmp.ne.s32.totalorder %s111, %s112
      %p124 = scmp.eq.s32.totalorder %s34, 3
      %p125 = por %p123, %p124
      %p127 = scmp.ne.s32.totalorder %s112, %s126
      %p128 = scmp.eq.s32.totalorder %s34, 0
      %p129 = por %p127, %p128
      %s131 = sadd.s32 %s130, 1
      %p134 = scmp.eq.s32.totalorder %s28, 3
      %p135 = scmp.ne.s32.totalorder %s130, %s132
      %p136 = scmp.eq.s32.totalorder %s28, 0
      %p137 = por %p135, %p136
      %p138 = scmp.ne.s32.totalorder %s130, %s132
      %p139 = scmp.eq.s32.totalorder %s33, 3
      %p140 = por %p138, %p139
      %p141 = scmp.ne.s32.totalorder %s132, %s133
      %p142 = scmp.eq.s32.totalorder %s33, 0
      %p143 = por %p141, %p142
      %p144 = scmp.ne.s32.totalorder %s132, %s133
      %p145 = scmp.eq.s32.totalorder %s34, 3
      %p146 = por %p144, %p145
      %p148 = scmp.ne.s32.totalorder %s133, %s147
      %p149 = scmp.eq.s32.totalorder %s34, 0
      %p150 = por %p148, %p149
      %s152 = sadd.s32 %s151, 1
      %p155 = scmp.eq.s32.totalorder %s28, 3
      %p156 = scmp.ne.s32.totalorder %s151, %s153
      %p157 = scmp.eq.s32.totalorder %s28, 0
      %p158 = por %p156, %p157
      %p159 = scmp.ne.s32.totalorder %s151, %s153
      %p160 = scmp.eq.s32.totalorder %s33, 3
      %p161 = por %p159, %p160
      %p162 = scmp.ne.s32.totalorder %s153, %s154
      %p163 = scmp.eq.s32.totalorder %s33, 0
      %p164 = por %p162, %p163
      %p165 = scmp.ne.s32.totalorder %s153, %s154
      %p166 = scmp.eq.s32.totalorder %s34, 3
      %p167 = por %p165, %p166
      %p169 = scmp.ne.s32.totalorder %s154, %s168
      %p170 = scmp.eq.s32.totalorder %s34, 0
      %p171 = por %p169, %p170
      %s173 = sadd.s32 %s172, 1
      %p176 = scmp.eq.s32.totalorder %s28, 3
      %p177 = scmp.ne.s32.totalorder %s172, %s174
      %p178 = scmp.eq.s32.totalorder %s28, 0
      %p179 = por %p177, %p178
      %p180 = scmp.ne.s32.totalorder %s172, %s174
      %p181 = scmp.eq.s32.totalorder %s33, 3
      %p182 = por %p180, %p181
      %p183 = scmp.ne.s32.totalorder %s174, %s175
      %p184 = scmp.eq.s32.totalorder %s33, 0
      %p185 = por %p183, %p184
      %p186 = scmp.ne.s32.totalorder %s174, %s175
      %p187 = scmp.eq.s32.totalorder %s34, 3
      %p188 = por %p186, %p187
      %p190 = scmp.ne.s32.totalorder %s175, %s189
      %p191 = scmp.eq.s32.totalorder %s34, 0
      %p192 = por %p190, %p191
      %s193 = ssub.s32 %s28, %s35
      %p194 = scmp.eq.s32.totalorder %s193, 0
      %s196 = sadd.s32 %s195, 1
      %s197 = scalar_select %p194, %s195, %s196
      %p200 = pneg %p194
      %p201 = scmp.eq.s32.totalorder %s28, 3
      %p202 = por %p200, %p201
      %p203 = scmp.ne.s32.totalorder %s195, %s198
      %p204 = scmp.eq.s32.totalorder %s28, 0
      %p205 = por %p203, %p204
      %p206 = scmp.ne.s32.totalorder %s195, %s198
      %p207 = scmp.eq.s32.totalorder %s33, 3
      %p208 = por %p206, %p207
      %p209 = scmp.ne.s32.totalorder %s198, %s199
      %p210 = scmp.eq.s32.totalorder %s33, 0
      %p211 = por %p209, %p210
      %p212 = scmp.ne.s32.totalorder %s198, %s199
      %p213 = scmp.eq.s32.totalorder %s34, 3
      %p214 = por %p212, %p213
      %p216 = scmp.ne.s32.totalorder %s199, %s215
      %p217 = scmp.eq.s32.totalorder %s34, 0
      %p218 = por %p216, %p217
      %s219 = ssub.s32 %s28, %s35
      %p220 = scmp.eq.s32.totalorder %s219, 0
      %s222 = sadd.s32 %s221, 1
      %s223 = scalar_select %p220, %s221, %s222
      %p226 = pneg %p220
      %p227 = scmp.eq.s32.totalorder %s28, 3
      %p228 = por %p226, %p227
      %p229 = scmp.ne.s32.totalorder %s221, %s224
      %p230 = scmp.eq.s32.totalorder %s28, 0
      %p231 = por %p229, %p230
      %p232 = scmp.ne.s32.totalorder %s221, %s224
      %p233 = scmp.eq.s32.totalorder %s33, 3
      %p234 = por %p232, %p233
      %p235 = scmp.ne.s32.totalorder %s224, %s225
      %p236 = scmp.eq.s32.totalorder %s33, 0
      %p237 = por %p235, %p236
      %p238 = scmp.ne.s32.totalorder %s224, %s225
      %p239 = scmp.eq.s32.totalorder %s34, 3
      %p240 = por %p238, %p239
      %p242 = scmp.ne.s32.totalorder %s225, %s241
      %p243 = scmp.eq.s32.totalorder %s34, 0
      %p244 = por %p242, %p243
      %p245 = scmp.le.s32.totalorder 1, %s28
      %p246 = scmp.lt.s32.totalorder %s28, 5
      %p247 = pnand %p245, %p246
      %p248 = pneg %p247
      // Predicated region
      $region9: #{tpu_custom_call.1} parent=5 // pred_check
        _
      $region10: #{tpu_custom_call.1} parent=5 // pred_check_branch
        %250 = sbr.rel (%p247) target = $region12
      $region11: #{tpu_custom_call.1} parent=5 // pred_region
        %s251 = ssub.s32 %s28, 1
        // Predicated region
        $region13: #{tpu_custom_call.1} parent=11 // pred_check
          %p252 = pneg %p101
        $region14: #{tpu_custom_call.1} parent=11 // pred_check_branch
          %254 = sbr.rel (%p252) target = $region16
        $region15: #{tpu_custom_call.1} parent=11 // pred_region
          %s256 = ssub.s32 4096, 4096
          %257 = vsyncadd [#allocation6], %s256
          %s258 = sshll.u32 [#allocation7], 4
          %s259 = int_to_ptr.vmem [resolvable:$true] %s258
          %264 = dma.hbm_to_vmem [thread:$0]  %s2, 4096, %s259, [#allocation6], 256, 256, 16
        $region16: #{tpu_custom_call.1} parent=11 // pred_fallthru
          _
        // Predicated region
        $region17: #{tpu_custom_call.1} parent=11 // pred_check
          %p265 = pneg %p122
        $region18: #{tpu_custom_call.1} parent=11 // pred_check_branch
          %267 = sbr.rel (%p265) target = $region20
        $region19: #{tpu_custom_call.1} parent=11 // pred_region
          %s269 = ssub.s32 4096, 4096
          %270 = vsyncadd [#allocation9], %s269
          %s271 = sshll.u32 [#allocation8], 4
          %s272 = int_to_ptr.vmem [resolvable:$true] %s271
          %277 = dma.hbm_to_vmem [thread:$0]  %s3, 4096, %s272, [#allocation9], 128, 128, 8
        $region20: #{tpu_custom_call.1} parent=11 // pred_fallthru
          _
        // Predicated region
        $region21: #{tpu_custom_call.1} parent=11 // pred_check
          %p278 = pneg %p143
        $region22: #{tpu_custom_call.1} parent=11 // pred_check_branch
          %280 = sbr.rel (%p278) target = $region24
        $region23: #{tpu_custom_call.1} parent=11 // pred_region
          _
        $region24: #{tpu_custom_call.1} parent=11 // pred_fallthru
          _
        // Predicated region
        $region25: #{tpu_custom_call.1} parent=11 // pred_check
          %p281 = pneg %p164
        $region26: #{tpu_custom_call.1} parent=11 // pred_check_branch
          %283 = sbr.rel (%p281) target = $region28
        $region27: #{tpu_custom_call.1} parent=11 // pred_region
          %s285 = ssub.s32 6144, 6144
          %286 = vsyncadd [#allocation9], %s285
          %s287 = sshll.u32 [#allocation10], 4
          %s288 = int_to_ptr.vmem [resolvable:$true] %s287
          %293 = dma.hbm_to_vmem [thread:$0]  %s5, 6144, %s288, [#allocation9], 384, 384, 24
        $region28: #{tpu_custom_call.1} parent=11 // pred_fallthru
          _
        // Predicated region
        $region29: #{tpu_custom_call.1} parent=11 // pred_check
          %p294 = pneg %p185
        $region30: #{tpu_custom_call.1} parent=11 // pred_check_branch
          %296 = sbr.rel (%p294) target = $region32
        $region31: #{tpu_custom_call.1} parent=11 // pred_region
          _
        $region32: #{tpu_custom_call.1} parent=11 // pred_fallthru
          _
      $region12: #{tpu_custom_call.1} parent=5 // pred_fallthru
        _
      %p297 = scmp.lt.s32.totalorder %s28, 4
      // Predicated region
      $region33: #{tpu_custom_call.1} parent=5 // pred_check
        %p298 = pneg %p297
      $region34: #{tpu_custom_call.1} parent=5 // pred_check_branch
        %300 = sbr.rel (%p298) target = $region36
      $region35: #{tpu_custom_call.1} parent=5 // pred_region
        // Predicated region
        $region37: #{tpu_custom_call.1} parent=35 // pred_check
          %p301 = pneg %p48
        $region38: #{tpu_custom_call.1} parent=35 // pred_check_branch
          %303 = sbr.rel (%p301) target = $region40
        $region39: #{tpu_custom_call.1} parent=35 // pred_region
          #allocation15 [shape = 'u32[6]{0}', space=smem, size = 0x18, scoped, tag = 'DMA stride descriptor']
          %s304 = sand.u32 %s38, 1
          %s305 = scalar_lea.sflag [#allocation3], %s304
          %s306 = sand.u32 %s38, 1
          %s307 = smul.addr %s306, 192
          %s308 = scalar_lea.vmem [#allocation2], %s307
          %s309 = smul.u32 8, %s28
          %s310 = ssub.s32 25, %s309
          %p311 = scmp.lt.s32.totalorder %s310, 8
          %s312 = scalar_select %p311, %s310, 8
          %s313 = smul.u32 384, %s312
          %s315 = ssub.s32 3072, %s313
          %316 = vsyncadd %s305, %s315
          %p317 = scmp.ne.s32.totalorder 0, %s313
          %s318 = smul.addr %s309, 128
          %s319 = scalar_lea.hbm %s0, %s318
          %s320 = smul.u32 8, %s312
          %s321 = smul.u32 %s320, 3
          %s323 = sshll.u32 1, 14
          %s324 = sxor.u32 4294967295, %s323
          %s326 = sld [smem:[#allocation0]]
          %s327 = sadd.s32 2, %s326
          %s329 = sshll.u32 7, 26
          %s330 = sxor.u32 4294967295, %s329
          %s331 = sand.u32 0, %s330
          %s332 = sshll.u32 %s327, 26
          %s333 = sor.u32 %s331, %s332
          %s334 = sshll.u32 %s308, 4
          %s335 = int_to_ptr.vmem [resolvable:$true] %s334
          %s336 = sshll.u32 %s321, 4
          %341 = sst [smem:[#allocation15]] 3200
          %s342 = scalar_lea.smem [#allocation15], 1
          %343 = sst [smem:[%s342]] 1024
          %s344 = scalar_lea.smem [#allocation15], 2
          %345 = sst [smem:[%s344]] %s312
          %s346 = scalar_lea.smem [#allocation15], 3
          %347 = sst [smem:[%s346]] 128
          %s348 = scalar_lea.smem [#allocation15], 4
          %349 = sst [smem:[%s348]] 128
          %s350 = scalar_lea.smem [#allocation15], 5
          %351 = sst [smem:[%s350]] 8
          %353 = dma.general (%p317), %s319, %s336, %s335, %s305, 131072, [#allocation15], %s333, 0
        $region40: #{tpu_custom_call.1} parent=35 // pred_fallthru
          _
        // Predicated region
        $region41: #{tpu_custom_call.1} parent=35 // pred_check
          %p354 = pneg %p74
        $region42: #{tpu_custom_call.1} parent=35 // pred_check_branch
          %356 = sbr.rel (%p354) target = $region44
        $region43: #{tpu_custom_call.1} parent=35 // pred_region
          %s357 = sand.u32 %s28, 1
          %s358 = scalar_lea.sflag [#allocation6], %s357
          %s359 = sand.u32 %s64, 1
          %s360 = smul.addr %s359, 64
          %s361 = scalar_lea.vmem [#allocation5], %s360
          %s362 = smul.u32 8, %s28
          %s363 = ssub.s32 25, %s362
          %p364 = scmp.lt.s32.totalorder %s363, 8
          %s365 = scalar_select %p364, %s363, 8
          %s366 = smul.u32 128, %s365
          %s368 = ssub.s32 1024, %s366
          %369 = vsyncadd %s358, %s368
          %p370 = scmp.ne.s32.totalorder 0, %s366
          %s371 = smul.addr %s362, 128
          %s372 = scalar_lea.hbm %s1, %s371
          %s373 = smul.u32 8, %s365
          %s374 = sshll.u32 %s361, 4
          %s375 = int_to_ptr.vmem [resolvable:$true] %s374
          %s376 = sshll.u32 %s373, 4
          %380 = dma.hbm_to_vmem [thread:$0]  (%p370), %s372, %s376, %s375, %s358, 128, 128, 8
        $region44: #{tpu_custom_call.1} parent=35 // pred_fallthru
          _
      $region36: #{tpu_custom_call.1} parent=5 // pred_fallthru
        _
      %p381 = scmp.le.s32.totalorder 1, %s28
      %p382 = scmp.lt.s32.totalorder %s28, 5
      %p383 = pnand %p381, %p382
      %p384 = pneg %p383
      // Predicated region
      $region45: #{tpu_custom_call.1} parent=5 // pred_check
        _
      $region46: #{tpu_custom_call.1} parent=5 // pred_check_branch
        %386 = sbr.rel (%p383) target = $region48
      $region47: #{tpu_custom_call.1} parent=5 // pred_region
        %s387 = ssub.s32 %s28, 1
        %s388 = sand.u32 %s41, 1
        %s389 = scalar_lea.sflag [#allocation3], %s388
        %s390 = sand.u32 %s41, 1
        %s391 = smul.addr %s390, 192
        %s392 = scalar_lea.vmem [#allocation2], %s391
        // Predicated region
        $region49: #{tpu_custom_call.1} parent=47 // pred_check
          %p393 = pneg %p54
        $region50: #{tpu_custom_call.1} parent=47 // pred_check_branch
          %395 = sbr.rel (%p393) target = $region52
        $region51: #{tpu_custom_call.1} parent=47 // pred_region
          %396 = dma.done %s389, 3072
        $region52: #{tpu_custom_call.1} parent=47 // pred_fallthru
          _
        %s397 = sand.u32 %s33, 1
        %s398 = scalar_lea.sflag [#allocation6], %s397
        %s399 = sand.u32 %s67, 1
        %s400 = smul.addr %s399, 64
        %s401 = scalar_lea.vmem [#allocation5], %s400
        // Predicated region
        $region53: #{tpu_custom_call.1} parent=47 // pred_check
          %p402 = pneg %p80
        $region54: #{tpu_custom_call.1} parent=47 // pred_check_branch
          %404 = sbr.rel (%p402) target = $region56
        $region55: #{tpu_custom_call.1} parent=47 // pred_region
          %405 = dma.done %s398, 1024
        $region56: #{tpu_custom_call.1} parent=47 // pred_fallthru
          _
        // Predicated region
        $region57: #{tpu_custom_call.1} parent=47 // pred_check
          %p406 = pneg %p101
        $region58: #{tpu_custom_call.1} parent=47 // pred_check_branch
          %408 = sbr.rel (%p406) target = $region60
        $region59: #{tpu_custom_call.1} parent=47 // pred_region
          %409 = dma.done [#allocation6], 4096
        $region60: #{tpu_custom_call.1} parent=47 // pred_fallthru
          _
        // Predicated region
        $region61: #{tpu_custom_call.1} parent=47 // pred_check
          %p410 = pneg %p122
        $region62: #{tpu_custom_call.1} parent=47 // pred_check_branch
          %412 = sbr.rel (%p410) target = $region64
        $region63: #{tpu_custom_call.1} parent=47 // pred_region
          %413 = dma.done [#allocation9], 4096
        $region64: #{tpu_custom_call.1} parent=47 // pred_fallthru
          _
        // Predicated region
        $region65: #{tpu_custom_call.1} parent=47 // pred_check
          %p414 = pneg %p164
        $region66: #{tpu_custom_call.1} parent=47 // pred_check_branch
          %416 = sbr.rel (%p414) target = $region68
        $region67: #{tpu_custom_call.1} parent=47 // pred_region
          %417 = dma.done [#allocation9], 6144
        $region68: #{tpu_custom_call.1} parent=47 // pred_fallthru
          _
        %s418 = sand.u32 %s41, 1
        %s419 = scalar_lea.sflag [#allocation3], %s418
        %s420 = sand.u32 %s41, 1
        %s421 = smul.addr %s420, 192
        %s422 = scalar_lea.vmem [#allocation2], %s421
        %p423 = pneg %p54
        %p424 = pneg %p51
        %s425 = sand.u32 %s33, 1
        %s426 = scalar_lea.sflag [#allocation6], %s425
        %s427 = sand.u32 %s67, 1
        %s428 = smul.addr %s427, 64
        %s429 = scalar_lea.vmem [#allocation5], %s428
        %p430 = pneg %p80
        %p431 = pneg %p77
        %p432 = pneg %p101
        %p433 = pneg %p98
        %p434 = pneg %p122
        %p435 = pneg %p119
        %p436 = pneg %p143
        %p437 = pneg %p140
        %p438 = pneg %p164
        %p439 = pneg %p161
        %p440 = pneg %p185
        %p441 = pneg %p182
        %p442 = pneg %p211
        %p443 = pneg %p208
        %s444 = sand.u32 %s198, 1
        %s445 = scalar_lea.sflag [#allocation4], %s444
        %s446 = sand.u32 %s198, 1
        %s447 = smul.addr %s446, 192
        %s448 = scalar_lea.vmem [#allocation11], %s447
        %p449 = pneg %p237
        %p450 = pneg %p234
        %s451 = sand.u32 %s224, 1
        %s452 = scalar_lea.sflag [#allocation13], %s451
        %s453 = sand.u32 %s224, 1
        %s454 = smul.addr %s453, 64
        %s455 = scalar_lea.vmem [#allocation12], %s454
        %s456 = smul.u32 8, %s33
        %s457 = ssub.s32 25, %s456
        %p458 = scmp.lt.s32.totalorder %s457, 8
        %s459 = scalar_select %p458, %s457, 8
        %s460 = smul.u32 384, %s459
        %s461 = smul.u32 8, %s33
        %s462 = ssub.s32 25, %s461
        %p463 = scmp.lt.s32.totalorder %s462, 8
        %s464 = scalar_select %p463, %s462, 8
        %s465 = smul.u32 128, %s464
        %s466 = smul.u32 8, %s33
        %s467 = ssub.s32 25, %s466
        %p468 = scmp.lt.s32.totalorder %s467, 8
        %s469 = scalar_select %p468, %s467, 8
        %s470 = smul.u32 384, %s469
        %s471 = smul.u32 8, %s33
        %s472 = ssub.s32 25, %s471
        %p473 = scmp.lt.s32.totalorder %s472, 8
        %s474 = scalar_select %p473, %s472, 8
        %s475 = smul.u32 128, %s474
        %v476 = vld [vmem:[%s392] sm:$0xff]
        %v477 = vld [vmem:[%s392 + $0x8] sm:$0xff]
        %v478 = vld [vmem:[%s392 + $0x10] sm:$0xff]
        %v479 = vld [vmem:[%s392 + $0x18] sm:$0xff]
        %v480 = vld [vmem:[%s392 + $0x20] sm:$0xff]
        %v481 = vld [vmem:[%s392 + $0x28] sm:$0xff]
        %v482 = vld [vmem:[%s392 + $0x30] sm:$0xff]
        %v483 = vld [vmem:[%s392 + $0x38] sm:$0xff]
        %v484 = vld [vmem:[%s392 + $0x40] sm:$0xff]
        %v485 = vld [vmem:[%s392 + $0x48] sm:$0xff]
        %v486 = vld [vmem:[%s392 + $0x50] sm:$0xff]
        %v487 = vld [vmem:[%s392 + $0x58] sm:$0xff]
        %v488 = vld [vmem:[%s392 + $0x60] sm:$0xff]
        %v489 = vld [vmem:[%s392 + $0x68] sm:$0xff]
        %v490 = vld [vmem:[%s392 + $0x70] sm:$0xff]
        %v491 = vld [vmem:[%s392 + $0x78] sm:$0xff]
        %v492 = vld [vmem:[%s392 + $0x80] sm:$0xff]
        %v493 = vld [vmem:[%s392 + $0x88] sm:$0xff]
        %v494 = vld [vmem:[%s392 + $0x90] sm:$0xff]
        %v495 = vld [vmem:[%s392 + $0x98] sm:$0xff]
        %v496 = vld [vmem:[%s392 + $0xa0] sm:$0xff]
        %v497 = vld [vmem:[%s392 + $0xa8] sm:$0xff]
        %v498 = vld [vmem:[%s392 + $0xb0] sm:$0xff]
        %v499 = vld [vmem:[%s392 + $0xb8] sm:$0xff]
        %v500 = vld [vmem:[#allocation7] sm:$0xff]
        %v501 = vld [vmem:[#allocation7 + $0x8] sm:$0xff]
        %v502 = vld [vmem:[#allocation7 + $0x10] sm:$0xff]
        %v503 = vld [vmem:[#allocation7 + $0x18] sm:$0xff]
        %v504 = vld [vmem:[#allocation7 + $0x20] sm:$0xff]
        %v505 = vld [vmem:[#allocation7 + $0x28] sm:$0xff]
        %v506 = vld [vmem:[#allocation7 + $0x30] sm:$0xff]
        %v507 = vld [vmem:[#allocation7 + $0x38] sm:$0xff]
        %v508 = vld [vmem:[#allocation7 + $0x40] sm:$0xff]
        %v509 = vld [vmem:[#allocation7 + $0x48] sm:$0xff]
        %v510 = vld [vmem:[#allocation7 + $0x50] sm:$0xff]
        %v511 = vld [vmem:[#allocation7 + $0x58] sm:$0xff]
        %v512 = vld [vmem:[#allocation7 + $0x60] sm:$0xff]
        %v513 = vld [vmem:[#allocation7 + $0x68] sm:$0xff]
        %v514 = vld [vmem:[#allocation7 + $0x70] sm:$0xff]
        %v515 = vld [vmem:[#allocation7 + $0x78] sm:$0xff]
        %v516 = vld [vmem:[#allocation7 + $0x80] sm:$0xff]
        %v517 = vld [vmem:[#allocation7 + $0x88] sm:$0xff]
        %v518 = vld [vmem:[#allocation7 + $0x90] sm:$0xff]
        %v519 = vld [vmem:[#allocation7 + $0x98] sm:$0xff]
        %v520 = vld [vmem:[#allocation7 + $0xa0] sm:$0xff]
        %v521 = vld [vmem:[#allocation7 + $0xa8] sm:$0xff]
        %v522 = vld [vmem:[#allocation7 + $0xb0] sm:$0xff]
        %v523 = vld [vmem:[#allocation7 + $0xb8] sm:$0xff]
        %v524 = vld [vmem:[#allocation7 + $0xc0] sm:$0xff]
        %v525 = vld [vmem:[#allocation7 + $0xc8] sm:$0xff]
        %v526 = vld [vmem:[#allocation7 + $0xd0] sm:$0xff]
        %v527 = vld [vmem:[#allocation7 + $0xd8] sm:$0xff]
        %v528 = vld [vmem:[#allocation7 + $0xe0] sm:$0xff]
        %v529 = vld [vmem:[#allocation7 + $0xe8] sm:$0xff]
        %v530 = vld [vmem:[#allocation7 + $0xf0] sm:$0xff]
        %v531 = vld [vmem:[#allocation7 + $0xf8] sm:$0xff]
        %532 = vmatprep.subr.mxu0 %v531
        %533 = vmatpush1.msra.mxu0 %v530
        %534 = vmatprep.subr.mxu0 %v529
        %535 = vmatpush1.msra.mxu0 %v528
        %536 = vmatprep.subr.mxu0 %v527
        %537 = vmatpush1.msra.mxu0 %v526
        %538 = vmatprep.subr.mxu0 %v525
        %539 = vmatpush1.msra.mxu0 %v524
        %540 = vmatprep.subr.mxu0 %v523
        %541 = vmatpush1.msra.mxu0 %v522
        %542 = vmatprep.subr.mxu0 %v521
        %543 = vmatpush1.msra.mxu0 %v520
        %544 = vmatprep.subr.mxu0 %v519
        %545 = vmatpush1.msra.mxu0 %v518
        %546 = vmatprep.subr.mxu0 %v517
        %547 = vmatpush1.msra.mxu0 %v516
        %548 = vmatprep.subr.mxu0 %v515
        %549 = vmatpush1.msra.mxu0 %v514
        %550 = vmatprep.subr.mxu0 %v513
        %551 = vmatpush1.msra.mxu0 %v512
        %552 = vmatprep.subr.mxu0 %v511
        %553 = vmatpush1.msra.mxu0 %v510
        %554 = vmatprep.subr.mxu0 %v509
        %555 = vmatpush1.msra.mxu0 %v508
        %556 = vmatprep.subr.mxu0 %v507
        %557 = vmatpush1.msra.mxu0 %v506
        %558 = vmatprep.subr.mxu0 %v505
        %559 = vmatpush1.msra.mxu0 %v504
        %560 = vmatprep.subr.mxu0 %v503
        %561 = vmatpush1.msra.mxu0 %v502
        %562 = vmatprep.subr.mxu0 %v501
        %563 = vmatpush1.msra.mxu0 %v500
        %564 = vmatprep.subr.mxu0 0.0
        %565 = vmatpush2.msra.mxu0 0.0
        %566 = vmatprep.subr.mxu0 0.0
        %567 = vmatpush2.msra.mxu0 0.0
        %568 = vmatprep.subr.mxu0 0.0
        %569 = vmatpush2.msra.mxu0 0.0
        %570 = vmatprep.subr.mxu0 0.0
        %571 = vmatpush2.msra.mxu0 0.0
        %572 = vmatprep.subr.mxu0 0.0
        %573 = vmatpush2.msra.mxu0 0.0
        %574 = vmatprep.subr.mxu0 0.0
        %575 = vmatpush2.msra.mxu0 0.0
        %576 = vmatprep.subr.mxu0 0.0
        %577 = vmatpush2.msra.mxu0 0.0
        %578 = vmatprep.subr.mxu0 0.0
        %579 = vmatpush2.msra.mxu0 0.0
        %580 = vmatprep.subr.mxu0 0.0
        %581 = vmatpush2.msra.mxu0 0.0
        %582 = vmatprep.subr.mxu0 0.0
        %583 = vmatpush2.msra.mxu0 0.0
        %584 = vmatprep.subr.mxu0 0.0
        %585 = vmatpush2.msra.mxu0 0.0
        %586 = vmatprep.subr.mxu0 0.0
        %587 = vmatpush2.msra.mxu0 0.0
        %588 = vmatprep.subr.mxu0 0.0
        %589 = vmatpush2.msra.mxu0 0.0
        %590 = vmatprep.subr.mxu0 0.0
        %591 = vmatpush2.msra.mxu0 0.0
        %592 = vmatprep.subr.mxu0 0.0
        %593 = vmatpush2.msra.mxu0 0.0
        %594 = vmatprep.subr.mxu0 0.0
        %595 = vmatpush2.msra.mxu0 0.0
        %596 = vmatprep.mubr.f32.mxu0 0.0
        %597 = vmatmul.mubr.f32.gmra.mxu0 %v476
        %v598 = vpop.f32.mrf.mxu0
        %v599 = vadd.f32 0.0, %v598
        %v600 = vpop.f32.mrf.mxu0
        %v601 = vadd.f32 0.0, %v600
        %602 = vmatprep.mubr.f32.mxu0 0.0
        %603 = vmatmul.mubr.f32.gmra.mxu0 %v477
        %v604 = vpop.f32.mrf.mxu0
        %v605 = vadd.f32 0.0, %v604
        %v606 = vpop.f32.mrf.mxu0
        %v607 = vadd.f32 0.0, %v606
        %608 = vmatprep.mubr.f32.mxu0 0.0
        %609 = vmatmul.mubr.f32.gmra.mxu0 %v478
        %v610 = vpop.f32.mrf.mxu0
        %v611 = vadd.f32 0.0, %v610
        %v612 = vpop.f32.mrf.mxu0
        %v613 = vadd.f32 0.0, %v612
        %614 = vmatprep.mubr.f32.mxu0 0.0
        %615 = vmatmul.mubr.f32.gmra.mxu0 %v479
        %v616 = vpop.f32.mrf.mxu0
        %v617 = vadd.f32 0.0, %v616
        %v618 = vpop.f32.mrf.mxu0
        %v619 = vadd.f32 0.0, %v618
        %620 = vmatprep.mubr.f32.mxu0 0.0
        %621 = vmatmul.mubr.f32.gmra.mxu0 %v480
        %v622 = vpop.f32.mrf.mxu0
        %v623 = vadd.f32 0.0, %v622
        %v624 = vpop.f32.mrf.mxu0
        %v625 = vadd.f32 0.0, %v624
        %626 = vmatprep.mubr.f32.mxu0 0.0
        %627 = vmatmul.mubr.f32.gmra.mxu0 %v481
        %v628 = vpop.f32.mrf.mxu0
        %v629 = vadd.f32 0.0, %v628
        %v630 = vpop.f32.mrf.mxu0
        %v631 = vadd.f32 0.0, %v630
        %632 = vmatprep.mubr.f32.mxu0 0.0
        %633 = vmatmul.mubr.f32.gmra.mxu0 %v482
        %v634 = vpop.f32.mrf.mxu0
        %v635 = vadd.f32 0.0, %v634
        %v636 = vpop.f32.mrf.mxu0
        %v637 = vadd.f32 0.0, %v636
        %638 = vmatprep.mubr.f32.mxu0 0.0
        %639 = vmatmul.mubr.f32.gmra.mxu0 %v483
        %v640 = vpop.f32.mrf.mxu0
        %v641 = vadd.f32 0.0, %v640
        %v642 = vpop.f32.mrf.mxu0
        %v643 = vadd.f32 0.0, %v642
        %644 = vmatprep.mubr.f32.mxu0 0.0
        %645 = vmatmul.mubr.f32.gmra.mxu0 %v484
        %v646 = vpop.f32.mrf.mxu0
        %v647 = vadd.f32 0.0, %v646
        %v648 = vpop.f32.mrf.mxu0
        %v649 = vadd.f32 0.0, %v648
        %650 = vmatprep.mubr.f32.mxu0 0.0
        %651 = vmatmul.mubr.f32.gmra.mxu0 %v485
        %v652 = vpop.f32.mrf.mxu0
        %v653 = vadd.f32 0.0, %v652
        %v654 = vpop.f32.mrf.mxu0
        %v655 = vadd.f32 0.0, %v654
        %656 = vmatprep.mubr.f32.mxu0 0.0
        %657 = vmatmul.mubr.f32.gmra.mxu0 %v486
        %v658 = vpop.f32.mrf.mxu0
        %v659 = vadd.f32 0.0, %v658
        %v660 = vpop.f32.mrf.mxu0
        %v661 = vadd.f32 0.0, %v660
        %662 = vmatprep.mubr.f32.mxu0 0.0
        %663 = vmatmul.mubr.f32.gmra.mxu0 %v487
        %v664 = vpop.f32.mrf.mxu0
        %v665 = vadd.f32 0.0, %v664
        %v666 = vpop.f32.mrf.mxu0
        %v667 = vadd.f32 0.0, %v666
        %668 = vmatprep.mubr.f32.mxu0 0.0
        %669 = vmatmul.mubr.f32.gmra.mxu0 %v488
        %v670 = vpop.f32.mrf.mxu0
        %v671 = vadd.f32 0.0, %v670
        %v672 = vpop.f32.mrf.mxu0
        %v673 = vadd.f32 0.0, %v672
        %674 = vmatprep.mubr.f32.mxu0 0.0
        %675 = vmatmul.mubr.f32.gmra.mxu0 %v489
        %v676 = vpop.f32.mrf.mxu0
        %v677 = vadd.f32 0.0, %v676
        %v678 = vpop.f32.mrf.mxu0
        %v679 = vadd.f32 0.0, %v678
        %680 = vmatprep.mubr.f32.mxu0 0.0
        %681 = vmatmul.mubr.f32.gmra.mxu0 %v490
        %v682 = vpop.f32.mrf.mxu0
        %v683 = vadd.f32 0.0, %v682
        %v684 = vpop.f32.mrf.mxu0
        %v685 = vadd.f32 0.0, %v684
        %686 = vmatprep.mubr.f32.mxu0 0.0
        %687 = vmatmul.mubr.f32.gmra.mxu0 %v491
        %v688 = vpop.f32.mrf.mxu0
        %v689 = vadd.f32 0.0, %v688
        %v690 = vpop.f32.mrf.mxu0
        %v691 = vadd.f32 0.0, %v690
        %692 = vmatprep.mubr.f32.mxu0 0.0
        %693 = vmatmul.mubr.f32.gmra.mxu0 %v492
        %v694 = vpop.f32.mrf.mxu0
        %v695 = vadd.f32 0.0, %v694
        %v696 = vpop.f32.mrf.mxu0
        %v697 = vadd.f32 0.0, %v696
        %698 = vmatprep.mubr.f32.mxu0 0.0
        %699 = vmatmul.mubr.f32.gmra.mxu0 %v493
        %v700 = vpop.f32.mrf.mxu0
        %v701 = vadd.f32 0.0, %v700
        %v702 = vpop.f32.mrf.mxu0
        %v703 = vadd.f32 0.0, %v702
        %704 = vmatprep.mubr.f32.mxu0 0.0
        %705 = vmatmul.mubr.f32.gmra.mxu0 %v494
        %v706 = vpop.f32.mrf.mxu0
        %v707 = vadd.f32 0.0, %v706
        %v708 = vpop.f32.mrf.mxu0
        %v709 = vadd.f32 0.0, %v708
        %710 = vmatprep.mubr.f32.mxu0 0.0
        %711 = vmatmul.mubr.f32.gmra.mxu0 %v495
        %v712 = vpop.f32.mrf.mxu0
        %v713 = vadd.f32 0.0, %v712
        %v714 = vpop.f32.mrf.mxu0
        %v715 = vadd.f32 0.0, %v714
        %716 = vmatprep.mubr.f32.mxu0 0.0
        %717 = vmatmul.mubr.f32.gmra.mxu0 %v496
        %v718 = vpop.f32.mrf.mxu0
        %v719 = vadd.f32 0.0, %v718
        %v720 = vpop.f32.mrf.mxu0
        %v721 = vadd.f32 0.0, %v720
        %722 = vmatprep.mubr.f32.mxu0 0.0
        %723 = vmatmul.mubr.f32.gmra.mxu0 %v497
        %v724 = vpop.f32.mrf.mxu0
        %v725 = vadd.f32 0.0, %v724
        %v726 = vpop.f32.mrf.mxu0
        %v727 = vadd.f32 0.0, %v726
        %728 = vmatprep.mubr.f32.mxu0 0.0
        %729 = vmatmul.mubr.f32.gmra.mxu0 %v498
        %v730 = vpop.f32.mrf.mxu0
        %v731 = vadd.f32 0.0, %v730
        %v732 = vpop.f32.mrf.mxu0
        %v733 = vadd.f32 0.0, %v732
        %734 = vmatprep.mubr.f32.mxu0 0.0
        %735 = vmatmul.mubr.f32.gmra.mxu0 %v499
        %v736 = vpop.f32.mrf.mxu0
        %v737 = vadd.f32 0.0, %v736
        %v738 = vpop.f32.mrf.mxu0
        %v739 = vadd.f32 0.0, %v738
        %740 = vdwg.mxu0
        %v741 = vadd.f32 %v601, %v649
        %v742 = vadd.f32 %v607, %v655
        %v743 = vadd.f32 %v613, %v661
        %v744 = vadd.f32 %v619, %v667
        %v745 = vadd.f32 %v625, %v673
        %v746 = vadd.f32 %v631, %v679
        %v747 = vadd.f32 %v637, %v685
        %v748 = vadd.f32 %v643, %v691
        %v749 = vadd.f32 %v741, %v697
        %v750 = vadd.f32 %v742, %v703
        %v751 = vadd.f32 %v743, %v709
        %v752 = vadd.f32 %v744, %v715
        %v753 = vadd.f32 %v745, %v721
        %v754 = vadd.f32 %v746, %v727
        %v755 = vadd.f32 %v747, %v733
        %v756 = vadd.f32 %v748, %v739
        %v757 = vmul.f32 %v599, %v601
        %v758 = vmul.f32 %v605, %v607
        %v759 = vmul.f32 %v611, %v613
        %v760 = vmul.f32 %v617, %v619
        %v761 = vmul.f32 %v623, %v625
        %v762 = vmul.f32 %v629, %v631
        %v763 = vmul.f32 %v635, %v637
        %v764 = vmul.f32 %v641, %v643
        %v765 = vmul.f32 %v647, %v649
        %v766 = vmul.f32 %v653, %v655
        %v767 = vmul.f32 %v659, %v661
        %v768 = vmul.f32 %v665, %v667
        %v769 = vmul.f32 %v671, %v673
        %v770 = vmul.f32 %v677, %v679
        %v771 = vmul.f32 %v683, %v685
        %v772 = vmul.f32 %v689, %v691
        %v773 = vmul.f32 %v695, %v697
        %v774 = vmul.f32 %v701, %v703
        %v775 = vmul.f32 %v707, %v709
        %v776 = vmul.f32 %v713, %v715
        %v777 = vmul.f32 %v719, %v721
        %v778 = vmul.f32 %v725, %v727
        %v779 = vmul.f32 %v731, %v733
        %v780 = vmul.f32 %v737, %v739
        %v781 = vadd.f32 %v757, %v765
        %v782 = vadd.f32 %v758, %v766
        %v783 = vadd.f32 %v759, %v767
        %v784 = vadd.f32 %v760, %v768
        %v785 = vadd.f32 %v761, %v769
        %v786 = vadd.f32 %v762, %v770
        %v787 = vadd.f32 %v763, %v771
        %v788 = vadd.f32 %v764, %v772
        %v789 = vadd.f32 %v781, %v773
        %v790 = vadd.f32 %v782, %v774
        %v791 = vadd.f32 %v783, %v775
        %v792 = vadd.f32 %v784, %v776
        %v793 = vadd.f32 %v785, %v777
        %v794 = vadd.f32 %v786, %v778
        %v795 = vadd.f32 %v787, %v779
        %v796 = vadd.f32 %v788, %v780
        %v797 = vld [vmem:[%s401] sm:$0xff]
        %v798 = vld [vmem:[%s401 + $0x8] sm:$0xff]
        %v799 = vld [vmem:[%s401 + $0x10] sm:$0xff]
        %v800 = vld [vmem:[%s401 + $0x18] sm:$0xff]
        %v801 = vld [vmem:[%s401 + $0x20] sm:$0xff]
        %v802 = vld [vmem:[%s401 + $0x28] sm:$0xff]
        %v803 = vld [vmem:[%s401 + $0x30] sm:$0xff]
        %v804 = vld [vmem:[%s401 + $0x38] sm:$0xff]
        %v805 = vld [vmem:[#allocation8] sm:$0xff]
        %v806 = vld [vmem:[#allocation8 + $0x8] sm:$0xff]
        %v807 = vld [vmem:[#allocation8 + $0x10] sm:$0xff]
        %v808 = vld [vmem:[#allocation8 + $0x18] sm:$0xff]
        %v809 = vld [vmem:[#allocation8 + $0x20] sm:$0xff]
        %v810 = vld [vmem:[#allocation8 + $0x28] sm:$0xff]
        %v811 = vld [vmem:[#allocation8 + $0x30] sm:$0xff]
        %v812 = vld [vmem:[#allocation8 + $0x38] sm:$0xff]
        %v813 = vld [vmem:[#allocation8 + $0x40] sm:$0xff]
        %v814 = vld [vmem:[#allocation8 + $0x48] sm:$0xff]
        %v815 = vld [vmem:[#allocation8 + $0x50] sm:$0xff]
        %v816 = vld [vmem:[#allocation8 + $0x58] sm:$0xff]
        %v817 = vld [vmem:[#allocation8 + $0x60] sm:$0xff]
        %v818 = vld [vmem:[#allocation8 + $0x68] sm:$0xff]
        %v819 = vld [vmem:[#allocation8 + $0x70] sm:$0xff]
        %v820 = vld [vmem:[#allocation8 + $0x78] sm:$0xff]
        %v821 = vld [vmem:[#allocation8 + $0x80] sm:$0xff]
        %v822 = vld [vmem:[#allocation8 + $0x88] sm:$0xff]
        %v823 = vld [vmem:[#allocation8 + $0x90] sm:$0xff]
        %v824 = vld [vmem:[#allocation8 + $0x98] sm:$0xff]
        %v825 = vld [vmem:[#allocation8 + $0xa0] sm:$0xff]
        %v826 = vld [vmem:[#allocation8 + $0xa8] sm:$0xff]
        %v827 = vld [vmem:[#allocation8 + $0xb0] sm:$0xff]
        %v828 = vld [vmem:[#allocation8 + $0xb8] sm:$0xff]
        %v829 = vld [vmem:[#allocation8 + $0xc0] sm:$0xff]
        %v830 = vld [vmem:[#allocation8 + $0xc8] sm:$0xff]
        %v831 = vld [vmem:[#allocation8 + $0xd0] sm:$0xff]
        %v832 = vld [vmem:[#allocation8 + $0xd8] sm:$0xff]
        %v833 = vld [vmem:[#allocation8 + $0xe0] sm:$0xff]
        %v834 = vld [vmem:[#allocation8 + $0xe8] sm:$0xff]
        %v835 = vld [vmem:[#allocation8 + $0xf0] sm:$0xff]
        %v836 = vld [vmem:[#allocation8 + $0xf8] sm:$0xff]
        %v837 = vld [vmem:[%s4] sm:$0x1]
        %v839 = vlaneseq
        %v840 = vshrl.u32 %v839, 7
        %v841 = vsub.s32 0, %v840
        %v842 = vrot.slane %v837, %v841
        %844 = vmatprep.subr.mxu0 0.0
        %845 = vmatpush1.msra.mxu0 %v820
        %846 = vmatprep.subr.mxu0 0.0
        %847 = vmatpush1.msra.mxu0 %v819
        %848 = vmatprep.subr.mxu0 0.0
        %849 = vmatpush1.msra.mxu0 %v818
        %850 = vmatprep.subr.mxu0 0.0
        %851 = vmatpush1.msra.mxu0 %v817
        %852 = vmatprep.subr.mxu0 0.0
        %853 = vmatpush1.msra.mxu0 %v816
        %854 = vmatprep.subr.mxu0 0.0
        %855 = vmatpush1.msra.mxu0 %v815
        %856 = vmatprep.subr.mxu0 0.0
        %857 = vmatpush1.msra.mxu0 %v814
        %858 = vmatprep.subr.mxu0 0.0
        %859 = vmatpush1.msra.mxu0 %v813
        %860 = vmatprep.subr.mxu0 0.0
        %861 = vmatpush1.msra.mxu0 %v812
        %862 = vmatprep.subr.mxu0 0.0
        %863 = vmatpush1.msra.mxu0 %v811
        %864 = vmatprep.subr.mxu0 0.0
        %865 = vmatpush1.msra.mxu0 %v810
        %866 = vmatprep.subr.mxu0 0.0
        %867 = vmatpush1.msra.mxu0 %v809
        %868 = vmatprep.subr.mxu0 0.0
        %869 = vmatpush1.msra.mxu0 %v808
        %870 = vmatprep.subr.mxu0 0.0
        %871 = vmatpush1.msra.mxu0 %v807
        %872 = vmatprep.subr.mxu0 0.0
        %873 = vmatpush1.msra.mxu0 %v806
        %874 = vmatprep.subr.mxu0 0.0
        %875 = vmatpush1.msra.mxu0 %v805
        %876 = vmatprep.subr.mxu0 0.0
        %877 = vmatpush2.msra.mxu0 %v836
        %878 = vmatprep.subr.mxu0 0.0
        %879 = vmatpush2.msra.mxu0 %v835
        %880 = vmatprep.subr.mxu0 0.0
        %881 = vmatpush2.msra.mxu0 %v834
        %882 = vmatprep.subr.mxu0 0.0
        %883 = vmatpush2.msra.mxu0 %v833
        %884 = vmatprep.subr.mxu0 0.0
        %885 = vmatpush2.msra.mxu0 %v832
        %886 = vmatprep.subr.mxu0 0.0
        %887 = vmatpush2.msra.mxu0 %v831
        %888 = vmatprep.subr.mxu0 0.0
        %889 = vmatpush2.msra.mxu0 %v830
        %890 = vmatprep.subr.mxu0 0.0
        %891 = vmatpush2.msra.mxu0 %v829
        %892 = vmatprep.subr.mxu0 0.0
        %893 = vmatpush2.msra.mxu0 %v828
        %894 = vmatprep.subr.mxu0 0.0
        %895 = vmatpush2.msra.mxu0 %v827
        %896 = vmatprep.subr.mxu0 0.0
        %897 = vmatpush2.msra.mxu0 %v826
        %898 = vmatprep.subr.mxu0 0.0
        %899 = vmatpush2.msra.mxu0 %v825
        %900 = vmatprep.subr.mxu0 0.0
        %901 = vmatpush2.msra.mxu0 %v824
        %902 = vmatprep.subr.mxu0 0.0
        %903 = vmatpush2.msra.mxu0 %v823
        %904 = vmatprep.subr.mxu0 0.0
        %905 = vmatpush2.msra.mxu0 %v822
        %906 = vmatprep.subr.mxu0 0.0
        %907 = vmatpush2.msra.mxu0 %v821
        %908 = vmatprep.mubr.f32.mxu0 %v749
        %909 = vmatmul.mubr.f32.gmra.mxu0 %v797
        %v910 = vpop.f32.mrf.mxu0
        %v911 = vadd.f32 %v842, %v910
        %v912 = vpop.f32.mrf.mxu0
        %913 = vmatprep.mubr.f32.mxu0 %v750
        %914 = vmatmul.mubr.f32.gmra.mxu0 %v798
        %v915 = vpop.f32.mrf.mxu0
        %v916 = vadd.f32 %v842, %v915
        %v917 = vpop.f32.mrf.mxu0
        %918 = vmatprep.mubr.f32.mxu0 %v751
        %919 = vmatmul.mubr.f32.gmra.mxu0 %v799
        %v920 = vpop.f32.mrf.mxu0
        %v921 = vadd.f32 %v842, %v920
        %v922 = vpop.f32.mrf.mxu0
        %923 = vmatprep.mubr.f32.mxu0 %v752
        %924 = vmatmul.mubr.f32.gmra.mxu0 %v800
        %v925 = vpop.f32.mrf.mxu0
        %v926 = vadd.f32 %v842, %v925
        %v927 = vpop.f32.mrf.mxu0
        %928 = vmatprep.mubr.f32.mxu0 %v753
        %929 = vmatmul.mubr.f32.gmra.mxu0 %v801
        %v930 = vpop.f32.mrf.mxu0
        %v931 = vadd.f32 %v842, %v930
        %v932 = vpop.f32.mrf.mxu0
        %933 = vmatprep.mubr.f32.mxu0 %v754
        %934 = vmatmul.mubr.f32.gmra.mxu0 %v802
        %v935 = vpop.f32.mrf.mxu0
        %v936 = vadd.f32 %v842, %v935
        %v937 = vpop.f32.mrf.mxu0
        %938 = vmatprep.mubr.f32.mxu0 %v755
        %939 = vmatmul.mubr.f32.gmra.mxu0 %v803
        %v940 = vpop.f32.mrf.mxu0
        %v941 = vadd.f32 %v842, %v940
        %v942 = vpop.f32.mrf.mxu0
        %943 = vmatprep.mubr.f32.mxu0 %v756
        %944 = vmatmul.mubr.f32.gmra.mxu0 %v804
        %v945 = vpop.f32.mrf.mxu0
        %v946 = vadd.f32 %v842, %v945
        %v947 = vpop.f32.mrf.mxu0
        %948 = vdwg.mxu0
        %v949 = vxor.u32 %v911, 2147483648
        %v950 = vxor.u32 %v916, 2147483648
        %v951 = vxor.u32 %v921, 2147483648
        %v952 = vxor.u32 %v926, 2147483648
        %v953 = vxor.u32 %v931, 2147483648
        %v954 = vxor.u32 %v936, 2147483648
        %v955 = vxor.u32 %v941, 2147483648
        %v956 = vxor.u32 %v946, 2147483648
        %v957 = vmul.f32 %v949, 1.442695
        %v958 = vpow.pop %v957
        %v959 = vmul.f32 %v950, 1.442695
        %v960 = vpow.pop %v959
        %v961 = vmul.f32 %v951, 1.442695
        %v962 = vpow.pop %v961
        %v963 = vmul.f32 %v952, 1.442695
        %v964 = vpow.pop %v963
        %v965 = vmul.f32 %v953, 1.442695
        %v966 = vpow.pop %v965
        %v967 = vmul.f32 %v954, 1.442695
        %v968 = vpow.pop %v967
        %v969 = vmul.f32 %v955, 1.442695
        %v970 = vpow.pop %v969
        %v971 = vmul.f32 %v956, 1.442695
        %v972 = vpow.pop %v971
        %v973 = vadd.f32 %v958, 1.0
        %v974 = vadd.f32 %v960, 1.0
        %v975 = vadd.f32 %v962, 1.0
        %v976 = vadd.f32 %v964, 1.0
        %v977 = vadd.f32 %v966, 1.0
        %v978 = vadd.f32 %v968, 1.0
        %v979 = vadd.f32 %v970, 1.0
        %v980 = vadd.f32 %v972, 1.0
        %v981 = vrcp.pop %v973
        %v982 = vmul.f32 1.0, %v981
        %v983 = vrcp.pop %v974
        %v984 = vmul.f32 1.0, %v983
        %v985 = vrcp.pop %v975
        %v986 = vmul.f32 1.0, %v985
        %v987 = vrcp.pop %v976
        %v988 = vmul.f32 1.0, %v987
        %v989 = vrcp.pop %v977
        %v990 = vmul.f32 1.0, %v989
        %v991 = vrcp.pop %v978
        %v992 = vmul.f32 1.0, %v991
        %v993 = vrcp.pop %v979
        %v994 = vmul.f32 1.0, %v993
        %v995 = vrcp.pop %v980
        %v996 = vmul.f32 1.0, %v995
        %v997 = vmul.f32 %v911, %v982
        %v998 = vmul.f32 %v916, %v984
        %v999 = vmul.f32 %v921, %v986
        %v1000 = vmul.f32 %v926, %v988
        %v1001 = vmul.f32 %v931, %v990
        %v1002 = vmul.f32 %v936, %v992
        %v1003 = vmul.f32 %v941, %v994
        %v1004 = vmul.f32 %v946, %v996
        %v1005 = vmul.f32 %v997, 1.6666666
        %v1006 = vmul.f32 %v998, 1.6666666
        %v1007 = vmul.f32 %v999, 1.6666666
        %v1008 = vmul.f32 %v1000, 1.6666666
        %v1009 = vmul.f32 %v1001, 1.6666666
        %v1010 = vmul.f32 %v1002, 1.6666666
        %v1011 = vmul.f32 %v1003, 1.6666666
        %v1012 = vmul.f32 %v1004, 1.6666666
        %v1013 = vld [vmem:[#allocation10] sm:$0xff]
        %v1014 = vld [vmem:[#allocation10 + $0x8] sm:$0xff]
        %v1015 = vld [vmem:[#allocation10 + $0x10] sm:$0xff]
        %v1016 = vld [vmem:[#allocation10 + $0x18] sm:$0xff]
        %v1017 = vld [vmem:[#allocation10 + $0x20] sm:$0xff]
        %v1018 = vld [vmem:[#allocation10 + $0x28] sm:$0xff]
        %v1019 = vld [vmem:[#allocation10 + $0x30] sm:$0xff]
        %v1020 = vld [vmem:[#allocation10 + $0x38] sm:$0xff]
        %v1021 = vld [vmem:[#allocation10 + $0x40] sm:$0xff]
        %v1022 = vld [vmem:[#allocation10 + $0x48] sm:$0xff]
        %v1023 = vld [vmem:[#allocation10 + $0x50] sm:$0xff]
        %v1024 = vld [vmem:[#allocation10 + $0x58] sm:$0xff]
        %v1025 = vld [vmem:[#allocation10 + $0x60] sm:$0xff]
        %v1026 = vld [vmem:[#allocation10 + $0x68] sm:$0xff]
        %v1027 = vld [vmem:[#allocation10 + $0x70] sm:$0xff]
        %v1028 = vld [vmem:[#allocation10 + $0x78] sm:$0xff]
        %v1029 = vld [vmem:[#allocation10 + $0x80] sm:$0xff]
        %v1030 = vld [vmem:[#allocation10 + $0x88] sm:$0xff]
        %v1031 = vld [vmem:[#allocation10 + $0x90] sm:$0xff]
        %v1032 = vld [vmem:[#allocation10 + $0x98] sm:$0xff]
        %v1033 = vld [vmem:[#allocation10 + $0xa0] sm:$0xff]
        %v1034 = vld [vmem:[#allocation10 + $0xa8] sm:$0xff]
        %v1035 = vld [vmem:[#allocation10 + $0xb0] sm:$0xff]
        %v1036 = vld [vmem:[#allocation10 + $0xb8] sm:$0xff]
        %v1037 = vld [vmem:[#allocation10 + $0xc0] sm:$0xff]
        %v1038 = vld [vmem:[#allocation10 + $0xc8] sm:$0xff]
        %v1039 = vld [vmem:[#allocation10 + $0xd0] sm:$0xff]
        %v1040 = vld [vmem:[#allocation10 + $0xd8] sm:$0xff]
        %v1041 = vld [vmem:[#allocation10 + $0xe0] sm:$0xff]
        %v1042 = vld [vmem:[#allocation10 + $0xe8] sm:$0xff]
        %v1043 = vld [vmem:[#allocation10 + $0xf0] sm:$0xff]
        %v1044 = vld [vmem:[#allocation10 + $0xf8] sm:$0xff]
        %v1045 = vld [vmem:[#allocation10 + $0x100] sm:$0xff]
        %v1046 = vld [vmem:[#allocation10 + $0x108] sm:$0xff]
        %v1047 = vld [vmem:[#allocation10 + $0x110] sm:$0xff]
        %v1048 = vld [vmem:[#allocation10 + $0x118] sm:$0xff]
        %v1049 = vld [vmem:[#allocation10 + $0x120] sm:$0xff]
        %v1050 = vld [vmem:[#allocation10 + $0x128] sm:$0xff]
        %v1051 = vld [vmem:[#allocation10 + $0x130] sm:$0xff]
        %v1052 = vld [vmem:[#allocation10 + $0x138] sm:$0xff]
        %v1053 = vld [vmem:[#allocation10 + $0x140] sm:$0xff]
        %v1054 = vld [vmem:[#allocation10 + $0x148] sm:$0xff]
        %v1055 = vld [vmem:[#allocation10 + $0x150] sm:$0xff]
        %v1056 = vld [vmem:[#allocation10 + $0x158] sm:$0xff]
        %v1057 = vld [vmem:[#allocation10 + $0x160] sm:$0xff]
        %v1058 = vld [vmem:[#allocation10 + $0x168] sm:$0xff]
        %v1059 = vld [vmem:[#allocation10 + $0x170] sm:$0xff]
        %v1060 = vld [vmem:[#allocation10 + $0x178] sm:$0xff]
        %v1061 = vld [vmem:[%s6] sm:$0x7]
        %v1063 = vlaneseq
        %v1064 = vshrl.u32 %v1063, 7
        %v1065 = vsub.s32 0, %v1064
        %v1066 = vrot.slane %v1061, %v1065
        %v1067 = vlaneseq
        %v1068 = vshrl.u32 %v1067, 7
        %v1069 = vsub.s32 1, %v1068
        %v1070 = vrot.slane %v1061, %v1069
        %v1071 = vlaneseq
        %v1072 = vshrl.u32 %v1071, 7
        %v1073 = vsub.s32 2, %v1072
        %v1074 = vrot.slane %v1061, %v1073
        %1078 = vmatprep.subr.mxu0 %v1059
        %1079 = vmatpush1.msra.mxu0 %v1058
        %1080 = vmatprep.subr.mxu0 %v1056
        %1081 = vmatpush1.msra.mxu0 %v1055
        %1082 = vmatprep.subr.mxu0 %v1053
        %1083 = vmatpush1.msra.mxu0 %v1052
        %1084 = vmatprep.subr.mxu0 %v1050
        %1085 = vmatpush1.msra.mxu0 %v1049
        %1086 = vmatprep.subr.mxu0 %v1047
        %1087 = vmatpush1.msra.mxu0 %v1046
        %1088 = vmatprep.subr.mxu0 %v1044
        %1089 = vmatpush1.msra.mxu0 %v1043
        %1090 = vmatprep.subr.mxu0 %v1041
        %1091 = vmatpush1.msra.mxu0 %v1040
        %1092 = vmatprep.subr.mxu0 %v1038
        %1093 = vmatpush1.msra.mxu0 %v1037
        %1094 = vmatprep.subr.mxu0 %v1035
        %1095 = vmatpush1.msra.mxu0 %v1034
        %1096 = vmatprep.subr.mxu0 %v1032
        %1097 = vmatpush1.msra.mxu0 %v1031
        %1098 = vmatprep.subr.mxu0 %v1029
        %1099 = vmatpush1.msra.mxu0 %v1028
        %1100 = vmatprep.subr.mxu0 %v1026
        %1101 = vmatpush1.msra.mxu0 %v1025
        %1102 = vmatprep.subr.mxu0 %v1023
        %1103 = vmatpush1.msra.mxu0 %v1022
        %1104 = vmatprep.subr.mxu0 %v1020
        %1105 = vmatpush1.msra.mxu0 %v1019
        %1106 = vmatprep.subr.mxu0 %v1017
        %1107 = vmatpush1.msra.mxu0 %v1016
        %1108 = vmatprep.subr.mxu0 %v1014
        %1109 = vmatpush1.msra.mxu0 %v1013
        %1110 = vmatprep.subr.mxu0 0.0
        %1111 = vmatpush2.msra.mxu0 0.0
        %1112 = vmatprep.subr.mxu0 0.0
        %1113 = vmatpush2.msra.mxu0 0.0
        %1114 = vmatprep.subr.mxu0 0.0
        %1115 = vmatpush2.msra.mxu0 0.0
        %1116 = vmatprep.subr.mxu0 0.0
        %1117 = vmatpush2.msra.mxu0 0.0
        %1118 = vmatprep.subr.mxu0 0.0
        %1119 = vmatpush2.msra.mxu0 0.0
        %1120 = vmatprep.subr.mxu0 0.0
        %1121 = vmatpush2.msra.mxu0 0.0
        %1122 = vmatprep.subr.mxu0 0.0
        %1123 = vmatpush2.msra.mxu0 0.0
        %1124 = vmatprep.subr.mxu0 0.0
        %1125 = vmatpush2.msra.mxu0 0.0
        %1126 = vmatprep.subr.mxu0 0.0
        %1127 = vmatpush2.msra.mxu0 0.0
        %1128 = vmatprep.subr.mxu0 0.0
        %1129 = vmatpush2.msra.mxu0 0.0
        %1130 = vmatprep.subr.mxu0 0.0
        %1131 = vmatpush2.msra.mxu0 0.0
        %1132 = vmatprep.subr.mxu0 0.0
        %1133 = vmatpush2.msra.mxu0 0.0
        %1134 = vmatprep.subr.mxu0 0.0
        %1135 = vmatpush2.msra.mxu0 0.0
        %1136 = vmatprep.subr.mxu0 0.0
        %1137 = vmatpush2.msra.mxu0 0.0
        %1138 = vmatprep.subr.mxu0 0.0
        %1139 = vmatpush2.msra.mxu0 0.0
        %1140 = vmatprep.subr.mxu0 0.0
        %1141 = vmatpush2.msra.mxu0 0.0
        %1142 = vmatprep.mubr.f32.mxu0 0.0
        %1143 = vmatmul.mubr.f32.gmra.mxu0 %v1005
        %v1144 = vpop.f32.mrf.mxu0
        %v1145 = vadd.f32 %v1066, %v1144
        %v1146 = vpop.f32.mrf.mxu0
        %v1147 = vadd.f32 %v1070, %v1146
        %1148 = vmatprep.mubr.f32.mxu0 0.0
        %1149 = vmatmul.mubr.f32.gmra.mxu0 %v1006
        %v1150 = vpop.f32.mrf.mxu0
        %v1151 = vadd.f32 %v1066, %v1150
        %v1152 = vpop.f32.mrf.mxu0
        %v1153 = vadd.f32 %v1070, %v1152
        %1154 = vmatprep.mubr.f32.mxu0 0.0
        %1155 = vmatmul.mubr.f32.gmra.mxu0 %v1007
        %v1156 = vpop.f32.mrf.mxu0
        %v1157 = vadd.f32 %v1066, %v1156
        %v1158 = vpop.f32.mrf.mxu0
        %v1159 = vadd.f32 %v1070, %v1158
        %1160 = vmatprep.mubr.f32.mxu0 0.0
        %1161 = vmatmul.mubr.f32.gmra.mxu0 %v1008
        %v1162 = vpop.f32.mrf.mxu0
        %v1163 = vadd.f32 %v1066, %v1162
        %v1164 = vpop.f32.mrf.mxu0
        %v1165 = vadd.f32 %v1070, %v1164
        %1166 = vmatprep.mubr.f32.mxu0 0.0
        %1167 = vmatmul.mubr.f32.gmra.mxu0 %v1009
        %v1168 = vpop.f32.mrf.mxu0
        %v1169 = vadd.f32 %v1066, %v1168
        %v1170 = vpop.f32.mrf.mxu0
        %v1171 = vadd.f32 %v1070, %v1170
        %1172 = vmatprep.mubr.f32.mxu0 0.0
        %1173 = vmatmul.mubr.f32.gmra.mxu0 %v1010
        %v1174 = vpop.f32.mrf.mxu0
        %v1175 = vadd.f32 %v1066, %v1174
        %v1176 = vpop.f32.mrf.mxu0
        %v1177 = vadd.f32 %v1070, %v1176
        %1178 = vmatprep.mubr.f32.mxu0 0.0
        %1179 = vmatmul.mubr.f32.gmra.mxu0 %v1011
        %v1180 = vpop.f32.mrf.mxu0
        %v1181 = vadd.f32 %v1066, %v1180
        %v1182 = vpop.f32.mrf.mxu0
        %v1183 = vadd.f32 %v1070, %v1182
        %1184 = vmatprep.mubr.f32.mxu0 0.0
        %1185 = vmatmul.mubr.f32.gmra.mxu0 %v1012
        %v1186 = vpop.f32.mrf.mxu0
        %v1187 = vadd.f32 %v1066, %v1186
        %v1188 = vpop.f32.mrf.mxu0
        %v1189 = vadd.f32 %v1070, %v1188
        %1190 = vdwg.mxu0
        %1191 = vmatprep.subr.mxu0 0.0
        %1192 = vmatpush1.msra.mxu0 %v1060
        %1193 = vmatprep.subr.mxu0 0.0
        %1194 = vmatpush1.msra.mxu0 %v1057
        %1195 = vmatprep.subr.mxu0 0.0
        %1196 = vmatpush1.msra.mxu0 %v1054
        %1197 = vmatprep.subr.mxu0 0.0
        %1198 = vmatpush1.msra.mxu0 %v1051
        %1199 = vmatprep.subr.mxu0 0.0
        %1200 = vmatpush1.msra.mxu0 %v1048
        %1201 = vmatprep.subr.mxu0 0.0
        %1202 = vmatpush1.msra.mxu0 %v1045
        %1203 = vmatprep.subr.mxu0 0.0
        %1204 = vmatpush1.msra.mxu0 %v1042
        %1205 = vmatprep.subr.mxu0 0.0
        %1206 = vmatpush1.msra.mxu0 %v1039
        %1207 = vmatprep.subr.mxu0 0.0
        %1208 = vmatpush1.msra.mxu0 %v1036
        %1209 = vmatprep.subr.mxu0 0.0
        %1210 = vmatpush1.msra.mxu0 %v1033
        %1211 = vmatprep.subr.mxu0 0.0
        %1212 = vmatpush1.msra.mxu0 %v1030
        %1213 = vmatprep.subr.mxu0 0.0
        %1214 = vmatpush1.msra.mxu0 %v1027
        %1215 = vmatprep.subr.mxu0 0.0
        %1216 = vmatpush1.msra.mxu0 %v1024
        %1217 = vmatprep.subr.mxu0 0.0
        %1218 = vmatpush1.msra.mxu0 %v1021
        %1219 = vmatprep.subr.mxu0 0.0
        %1220 = vmatpush1.msra.mxu0 %v1018
        %1221 = vmatprep.subr.mxu0 0.0
        %1222 = vmatpush1.msra.mxu0 %v1015
        %1223 = vmatprep.subr.mxu0 0.0
        %1224 = vmatpush2.msra.mxu0 0.0
        %1225 = vmatprep.subr.mxu0 0.0
        %1226 = vmatpush2.msra.mxu0 0.0
        %1227 = vmatprep.subr.mxu0 0.0
        %1228 = vmatpush2.msra.mxu0 0.0
        %1229 = vmatprep.subr.mxu0 0.0
        %1230 = vmatpush2.msra.mxu0 0.0
        %1231 = vmatprep.subr.mxu0 0.0
        %1232 = vmatpush2.msra.mxu0 0.0
        %1233 = vmatprep.subr.mxu0 0.0
        %1234 = vmatpush2.msra.mxu0 0.0
        %1235 = vmatprep.subr.mxu0 0.0
        %1236 = vmatpush2.msra.mxu0 0.0
        %1237 = vmatprep.subr.mxu0 0.0
        %1238 = vmatpush2.msra.mxu0 0.0
        %1239 = vmatprep.subr.mxu0 0.0
        %1240 = vmatpush2.msra.mxu0 0.0
        %1241 = vmatprep.subr.mxu0 0.0
        %1242 = vmatpush2.msra.mxu0 0.0
        %1243 = vmatprep.subr.mxu0 0.0
        %1244 = vmatpush2.msra.mxu0 0.0
        %1245 = vmatprep.subr.mxu0 0.0
        %1246 = vmatpush2.msra.mxu0 0.0
        %1247 = vmatprep.subr.mxu0 0.0
        %1248 = vmatpush2.msra.mxu0 0.0
        %1249 = vmatprep.subr.mxu0 0.0
        %1250 = vmatpush2.msra.mxu0 0.0
        %1251 = vmatprep.subr.mxu0 0.0
        %1252 = vmatpush2.msra.mxu0 0.0
        %1253 = vmatprep.subr.mxu0 0.0
        %1254 = vmatpush2.msra.mxu0 0.0
        %1255 = vmatprep.mubr.f32.mxu0 0.0
        %1256 = vmatmul.mubr.f32.gmra.mxu0 %v1005
        %v1257 = vpop.f32.mrf.mxu0
        %v1258 = vadd.f32 %v1074, %v1257
        %v1259 = vpop.f32.mrf.mxu0
        %1260 = vmatprep.mubr.f32.mxu0 0.0
        %1261 = vmatmul.mubr.f32.gmra.mxu0 %v1006
        %v1262 = vpop.f32.mrf.mxu0
        %v1263 = vadd.f32 %v1074, %v1262
        %v1264 = vpop.f32.mrf.mxu0
        %1265 = vmatprep.mubr.f32.mxu0 0.0
        %1266 = vmatmul.mubr.f32.gmra.mxu0 %v1007
        %v1267 = vpop.f32.mrf.mxu0
        %v1268 = vadd.f32 %v1074, %v1267
        %v1269 = vpop.f32.mrf.mxu0
        %1270 = vmatprep.mubr.f32.mxu0 0.0
        %1271 = vmatmul.mubr.f32.gmra.mxu0 %v1008
        %v1272 = vpop.f32.mrf.mxu0
        %v1273 = vadd.f32 %v1074, %v1272
        %v1274 = vpop.f32.mrf.mxu0
        %1275 = vmatprep.mubr.f32.mxu0 0.0
        %1276 = vmatmul.mubr.f32.gmra.mxu0 %v1009
        %v1277 = vpop.f32.mrf.mxu0
        %v1278 = vadd.f32 %v1074, %v1277
        %v1279 = vpop.f32.mrf.mxu0
        %1280 = vmatprep.mubr.f32.mxu0 0.0
        %1281 = vmatmul.mubr.f32.gmra.mxu0 %v1010
        %v1282 = vpop.f32.mrf.mxu0
        %v1283 = vadd.f32 %v1074, %v1282
        %v1284 = vpop.f32.mrf.mxu0
        %1285 = vmatprep.mubr.f32.mxu0 0.0
        %1286 = vmatmul.mubr.f32.gmra.mxu0 %v1011
        %v1287 = vpop.f32.mrf.mxu0
        %v1288 = vadd.f32 %v1074, %v1287
        %v1289 = vpop.f32.mrf.mxu0
        %1290 = vmatprep.mubr.f32.mxu0 0.0
        %1291 = vmatmul.mubr.f32.gmra.mxu0 %v1012
        %v1292 = vpop.f32.mrf.mxu0
        %v1293 = vadd.f32 %v1074, %v1292
        %v1294 = vpop.f32.mrf.mxu0
        %1295 = vdwg.mxu0
        %v1296 = vmul.f32 %v1147, %v789
        %v1297 = vmul.f32 %v1153, %v790
        %v1298 = vmul.f32 %v1159, %v791
        %v1299 = vmul.f32 %v1165, %v792
        %v1300 = vmul.f32 %v1171, %v793
        %v1301 = vmul.f32 %v1177, %v794
        %v1302 = vmul.f32 %v1183, %v795
        %v1303 = vmul.f32 %v1189, %v796
        %v1304 = vadd.f32 %v1258, %v1296
        %v1305 = vadd.f32 %v1263, %v1297
        %v1306 = vadd.f32 %v1268, %v1298
        %v1307 = vadd.f32 %v1273, %v1299
        %v1308 = vadd.f32 %v1278, %v1300
        %v1309 = vadd.f32 %v1283, %v1301
        %v1310 = vadd.f32 %v1288, %v1302
        %v1311 = vadd.f32 %v1293, %v1303
        %1312 = vst [vmem:[%s455] sm:$0xff] %v1304
        %1313 = vst [vmem:[%s455 + $0x8] sm:$0xff] %v1305
        %1314 = vst [vmem:[%s455 + $0x10] sm:$0xff] %v1306
        %1315 = vst [vmem:[%s455 + $0x18] sm:$0xff] %v1307
        %1316 = vst [vmem:[%s455 + $0x20] sm:$0xff] %v1308
        %1317 = vst [vmem:[%s455 + $0x28] sm:$0xff] %v1309
        %1318 = vst [vmem:[%s455 + $0x30] sm:$0xff] %v1310
        %1319 = vst [vmem:[%s455 + $0x38] sm:$0xff] %v1311
        %v1320 = vmul.f32 %v599, %v1145
        %v1321 = vmul.f32 %v605, %v1151
        %v1322 = vmul.f32 %v611, %v1157
        %v1323 = vmul.f32 %v617, %v1163
        %v1324 = vmul.f32 %v623, %v1169
        %v1325 = vmul.f32 %v629, %v1175
        %v1326 = vmul.f32 %v635, %v1181
        %v1327 = vmul.f32 %v641, %v1187
        %1328 = vst [vmem:[%s448] sm:$0xff] %v1320
        %1329 = vst [vmem:[%s448 + $0x8] sm:$0xff] %v1321
        %1330 = vst [vmem:[%s448 + $0x10] sm:$0xff] %v1322
        %1331 = vst [vmem:[%s448 + $0x18] sm:$0xff] %v1323
        %1332 = vst [vmem:[%s448 + $0x20] sm:$0xff] %v1324
        %1333 = vst [vmem:[%s448 + $0x28] sm:$0xff] %v1325
        %1334 = vst [vmem:[%s448 + $0x30] sm:$0xff] %v1326
        %1335 = vst [vmem:[%s448 + $0x38] sm:$0xff] %v1327
        %v1336 = vmul.f32 %v647, %v1145
        %v1337 = vmul.f32 %v653, %v1151
        %v1338 = vmul.f32 %v659, %v1157
        %v1339 = vmul.f32 %v665, %v1163
        %v1340 = vmul.f32 %v671, %v1169
        %v1341 = vmul.f32 %v677, %v1175
        %v1342 = vmul.f32 %v683, %v1181
        %v1343 = vmul.f32 %v689, %v1187
        %s1344 = scalar_lea.vmem %s448, 64 [#allocation11]
        %1345 = vst [vmem:[%s1344] sm:$0xff] %v1336
        %1346 = vst [vmem:[%s1344 + $0x8] sm:$0xff] %v1337
        %1347 = vst [vmem:[%s1344 + $0x10] sm:$0xff] %v1338
        %1348 = vst [vmem:[%s1344 + $0x18] sm:$0xff] %v1339
        %1349 = vst [vmem:[%s1344 + $0x20] sm:$0xff] %v1340
        %1350 = vst [vmem:[%s1344 + $0x28] sm:$0xff] %v1341
        %1351 = vst [vmem:[%s1344 + $0x30] sm:$0xff] %v1342
        %1352 = vst [vmem:[%s1344 + $0x38] sm:$0xff] %v1343
        %v1353 = vmul.f32 %v695, %v1145
        %v1354 = vmul.f32 %v701, %v1151
        %v1355 = vmul.f32 %v707, %v1157
        %v1356 = vmul.f32 %v713, %v1163
        %v1357 = vmul.f32 %v719, %v1169
        %v1358 = vmul.f32 %v725, %v1175
        %v1359 = vmul.f32 %v731, %v1181
        %v1360 = vmul.f32 %v737, %v1187
        %s1361 = scalar_lea.vmem %s448, 128 [#allocation11]
        %1362 = vst [vmem:[%s1361] sm:$0xff] %v1353
        %1363 = vst [vmem:[%s1361 + $0x8] sm:$0xff] %v1354
        %1364 = vst [vmem:[%s1361 + $0x10] sm:$0xff] %v1355
        %1365 = vst [vmem:[%s1361 + $0x18] sm:$0xff] %v1356
        %1366 = vst [vmem:[%s1361 + $0x20] sm:$0xff] %v1357
        %1367 = vst [vmem:[%s1361 + $0x28] sm:$0xff] %v1358
        %1368 = vst [vmem:[%s1361 + $0x30] sm:$0xff] %v1359
        %1369 = vst [vmem:[%s1361 + $0x38] sm:$0xff] %v1360
        %s1370 = sand.u32 %s198, 1
        %s1371 = scalar_lea.sflag [#allocation4], %s1370
        %s1372 = sand.u32 %s198, 1
        %s1373 = smul.addr %s1372, 192
        %s1374 = scalar_lea.vmem [#allocation11], %s1373
        %s1375 = sand.u32 %s224, 1
        %s1376 = scalar_lea.sflag [#allocation13], %s1375
        %s1377 = sand.u32 %s224, 1
        %s1378 = smul.addr %s1377, 64
        %s1379 = scalar_lea.vmem [#allocation12], %s1378
        // Predicated region
        $region69: #{tpu_custom_call.1} parent=47 // pred_check
          %p1380 = pneg %p208
        $region70: #{tpu_custom_call.1} parent=47 // pred_check_branch
          %1382 = sbr.rel (%p1380) target = $region72
        $region71: #{tpu_custom_call.1} parent=47 // pred_region
          #allocation17 [shape = 'u32[6]{0}', space=smem, size = 0x18, scoped, tag = 'DMA stride descriptor']
          %s1383 = smul.u32 8, %s33
          %s1384 = ssub.s32 25, %s1383
          %p1385 = scmp.lt.s32.totalorder %s1384, 8
          %s1386 = scalar_select %p1385, %s1384, 8
          %s1387 = smul.u32 384, %s1386
          %s1389 = ssub.s32 3072, %s1387
          %1390 = vsyncadd %s1371, %s1389
          %p1391 = scmp.ne.s32.totalorder 0, %s1387
          %s1392 = smul.addr %s1383, 128
          %s1393 = scalar_lea.hbm %s7, %s1392
          %s1394 = smul.u32 8, %s1386
          %s1395 = smul.u32 %s1394, 3
          %s1397 = sshll.u32 1, 14
          %s1398 = sxor.u32 4294967295, %s1397
          %s1401 = sshll.u32 7, 18
          %s1402 = sxor.u32 4294967295, %s1401
          %s1403 = sand.u32 0, %s1402
          %s1405 = sor.u32 %s1403, 0
          %s1406 = sshll.u32 %s1374, 4
          %s1407 = int_to_ptr.vmem [resolvable:$true] %s1406
          %s1408 = sshll.u32 %s1395, 4
          %1413 = sst [smem:[#allocation17]] 1024
          %s1414 = scalar_lea.smem [#allocation17], 1
          %1415 = sst [smem:[%s1414]] 3200
          %s1416 = scalar_lea.smem [#allocation17], 2
          %1417 = sst [smem:[%s1416]] %s1386
          %s1418 = scalar_lea.smem [#allocation17], 3
          %1419 = sst [smem:[%s1418]] 128
          %s1420 = scalar_lea.smem [#allocation17], 4
          %1421 = sst [smem:[%s1420]] 128
          %s1422 = scalar_lea.smem [#allocation17], 5
          %1423 = sst [smem:[%s1422]] 8
          %1425 = dma.general (%p1391), %s1407, %s1408, %s1393, %s1371, 131072, [#allocation17], %s1405, 0
        $region72: #{tpu_custom_call.1} parent=47 // pred_fallthru
          _
        // Predicated region
        $region73: #{tpu_custom_call.1} parent=47 // pred_check
          %p1426 = pneg %p234
        $region74: #{tpu_custom_call.1} parent=47 // pred_check_branch
          %1428 = sbr.rel (%p1426) target = $region76
        $region75: #{tpu_custom_call.1} parent=47 // pred_region
          %s1429 = smul.u32 8, %s33
          %s1430 = ssub.s32 25, %s1429
          %p1431 = scmp.lt.s32.totalorder %s1430, 8
          %s1432 = scalar_select %p1431, %s1430, 8
          %s1433 = smul.u32 128, %s1432
          %s1435 = ssub.s32 1024, %s1433
          %1436 = vsyncadd %s1376, %s1435
          %p1437 = scmp.ne.s32.totalorder 0, %s1433
          %s1438 = smul.addr %s1429, 128
          %s1439 = scalar_lea.hbm %s8, %s1438
          %s1440 = smul.u32 8, %s1432
          %s1441 = sshll.u32 %s1379, 4
          %s1442 = int_to_ptr.vmem [resolvable:$true] %s1441
          %s1443 = sshll.u32 %s1440, 4
          %1447 = dma.vmem_to_hbm [thread:$0]  (%p1437), %s1442, %s1443, %s1439, %s1376, 128, 128, 8
        $region76: #{tpu_custom_call.1} parent=47 // pred_fallthru
          _
      $region48: #{tpu_custom_call.1} parent=5 // pred_fallthru
        _
      %p1448 = scmp.le.s32.totalorder 2, %s28
      // Predicated region
      $region77: #{tpu_custom_call.1} parent=5 // pred_check
        %p1449 = pneg %p1448
      $region78: #{tpu_custom_call.1} parent=5 // pred_check_branch
        %1451 = sbr.rel (%p1449) target = $region80
      $region79: #{tpu_custom_call.1} parent=5 // pred_region
        %s1452 = ssub.s32 %s28, 2
        // Predicated region
        $region81: #{tpu_custom_call.1} parent=79 // pred_check
          %p1453 = pneg %p214
        $region82: #{tpu_custom_call.1} parent=79 // pred_check_branch
          %1455 = sbr.rel (%p1453) target = $region84
        $region83: #{tpu_custom_call.1} parent=79 // pred_region
          %s1456 = sand.u32 %s199, 1
          %s1457 = scalar_lea.sflag [#allocation4], %s1456
          %s1458 = sand.u32 %s199, 1
          %s1459 = smul.addr %s1458, 192
          %s1460 = scalar_lea.vmem [#allocation11], %s1459
          %1461 = dma.done %s1457, 3072
        $region84: #{tpu_custom_call.1} parent=79 // pred_fallthru
          _
        // Predicated region
        $region85: #{tpu_custom_call.1} parent=79 // pred_check
          %p1462 = pneg %p240
        $region86: #{tpu_custom_call.1} parent=79 // pred_check_branch
          %1464 = sbr.rel (%p1462) target = $region88
        $region87: #{tpu_custom_call.1} parent=79 // pred_region
          %s1465 = sand.u32 %s225, 1
          %s1466 = scalar_lea.sflag [#allocation13], %s1465
          %s1467 = sand.u32 %s225, 1
          %s1468 = smul.addr %s1467, 64
          %s1469 = scalar_lea.vmem [#allocation12], %s1468
          %1470 = dma.done %s1466, 1024
        $region88: #{tpu_custom_call.1} parent=79 // pred_fallthru
          _
      $region80: #{tpu_custom_call.1} parent=5 // pred_fallthru
        _
    $region6: #{tpu_custom_call.1} parent=1 // loop_footer
      %s32 = sadd.s32 1, %s28
    $region7: #{tpu_custom_call.1} parent=1 // loop_footer_branch
      %27 = sbr.rel target = $region3
    $region8: #{tpu_custom_call.1} parent=1 // loop_exit
      _
    %1471 = vsyncpa [#allocation3], 1
    %s1472 = scalar_lea.sflag [#allocation3], 1
    %1473 = vsyncpa %s1472, 1
    %1474 = vsyncpa [#allocation6], 1
    %s1475 = scalar_lea.sflag [#allocation6], 1
    %1476 = vsyncpa %s1475, 1
    %1477 = vsyncpa [#allocation9], 1
    %1478 = vsyncpa [#allocation4], 1
    %s1479 = scalar_lea.sflag [#allocation4], 1
    %1480 = vsyncpa %s1479, 1
    %1481 = vsyncpa [#allocation13], 1
    %s1482 = scalar_lea.sflag [#allocation13], 1
    %1483 = vsyncpa %s1482, 1

// kernel: tpu_custom_call.1
$region0: #{tpu_custom_call.1}
  #allocation0 [shape = 'u32[]', space=smem, size = 0x4, offset = 0x4, fixed_abs, tag = 'smem constant byte address 0x4 - core index']
  #allocation1 [shape = 'u32[144,128]{1,0:T(1,128)}', space=vmem, size = 0x12000, scoped, tag = 'internal scratch']
  #allocation14 [shape = 's32[]', space=sflag, size = 0x4, offset = 0, fixed_abs, tag = 'sflag constant byte address 0x0 - dummy sync flag']
  #allocation16 [shape = 's32[]', space=sflag, size = 0x4, offset = 0, fixed_abs, tag = 'sflag constant byte address 0x0 - dummy sync flag']
  %s0 = inlined_call_operand.hbm [shape: f32[3,200,128], index: 0, kind: input, shape index: {}]
  %s1 = inlined_call_operand.hbm [shape: f32[200,128], index: 1, kind: input, shape index: {}]
  %s2 = inlined_call_operand.hbm [shape: f32[128,256], index: 2, kind: input, shape index: {}]
  %s3 = inlined_call_operand.hbm [shape: f32[256,128], index: 3, kind: input, shape index: {}]
  %s4 = inlined_call_operand.vmem [shape: f32[1,128], index: 4, kind: input, shape index: {}]
  %s5 = inlined_call_operand.hbm [shape: f32[128,384], index: 5, kind: input, shape index: {}]
  %s6 = inlined_call_operand.vmem [shape: f32[1,384], index: 6, kind: input, shape index: {}]
  %s7 = inlined_call_operand.hbm [shape: f32[3,200,128], index: 7, kind: output, shape index: {0}]
  %s8 = inlined_call_operand.hbm [shape: f32[200,128], index: 8, kind: output, shape index: {1}]
  %9 = xla_tuple %s7, %s8
  %s10 = sld [smem:[#allocation0]]
  $region89: #{tpu_custom_call.1} parent=0
    _
  %s12 = ssub.s32 1, %s10
  %s13 = scalar_select 0, %s12, %s10
  $region1: #{tpu_custom_call.1} parent=0
    #allocation2 [shape = 'u8[196608]{0}', space=vmem, size = 0x30000, scoped, tag = 'input window, operand 0']
    #allocation3 [shape = 's32[2]{0}', space=sflag, size = 0x8, scoped, tag = 'scoped memory for tpu_custom_call.1']
    #allocation4 [shape = 's32[2]{0}', space=sflag, size = 0x8, scoped, tag = 'scoped memory for tpu_custom_call.1']
    #allocation5 [shape = 'u8[65536]{0}', space=vmem, size = 0x10000, scoped, tag = 'input window, operand 1']
    #allocation6 [shape = 's32[2]{0}', space=sflag, size = 0x8, scoped, tag = 'scoped memory for tpu_custom_call.1']
    #allocation7 [shape = 'u8[131072]{0}', space=vmem, size = 0x20000, scoped, tag = 'input window, operand 2, single buffered']
    #allocation8 [shape = 'u8[131072]{0}', space=vmem, size = 0x20000, scoped, tag = 'input window, operand 3, single buffered']
    #allocation9 [shape = 's32[1]{0}', space=sflag, size = 0x4, scoped, tag = 'scoped memory for tpu_custom_call.1']
    #allocation10 [shape = 'u8[196608]{0}', space=vmem, size = 0x30000, scoped, tag = 'input window, operand 5, single buffered']
    #allocation11 [shape = 'u8[196608]{0}', space=vmem, size = 0x30000, scoped, tag = 'output window, operand 0']
    #allocation12 [shape = 'u8[65536]{0}', space=vmem, size = 0x10000, scoped, tag = 'output window, operand 1']
    #allocation13 [shape = 's32[2]{0}', space=sflag, size = 0x8, scoped, tag = 'scoped memory for tpu_custom_call.1']
    %14 = vsyncpa [#allocation3], 0
    %s15 = scalar_lea.sflag [#allocation3], 1
    %16 = vsyncpa %s15, 0
    %17 = vsyncpa [#allocation6], 0
    %s18 = scalar_lea.sflag [#allocation6], 1
    %19 = vsyncpa %s18, 0
    %20 = vsyncpa [#allocation9], 0
    %21 = vsyncpa [#allocation4], 0
    %s22 = scalar_lea.sflag [#allocation4], 1
    %23 = vsyncpa %s22, 0
    %24 = vsyncpa [#allocation13], 0
    %s25 = scalar_lea.sflag [#allocation13], 1
    %26 = vsyncpa %s25, 0
    loop: start=0, step=1, limit=6
    $region2: #{tpu_custom_call.1} parent=1 // loop_pre_header
      _
    $region3: #{tpu_custom_call.1} parent=1 // loop_header
      %s28 = sphi 0, %s32
      %p29 = scmp.ge.s32.totalorder %s28, 6
      %s38 = sphi 0, %s40
      %s41 = sphi 0, %s38
      %s42 = sphi 0, %s41
      %s58 = sphi 0, %s42
      %s64 = sphi 0, %s66
      %s67 = sphi 0, %s64
      %s68 = sphi 0, %s67
      %s84 = sphi 0, %s68
      %s88 = sphi 0, %s88
      %s90 = sphi 0, %s88
      %s91 = sphi 0, %s90
      %s105 = sphi 0, %s91
      %s109 = sphi 0, %s109
      %s111 = sphi 0, %s109
      %s112 = sphi 0, %s111
      %s126 = sphi 0, %s112
      %s130 = sphi 0, %s130
      %s132 = sphi 0, %s130
      %s133 = sphi 0, %s132
      %s147 = sphi 0, %s133
      %s151 = sphi 0, %s151
      %s153 = sphi 0, %s151
      %s154 = sphi 0, %s153
      %s168 = sphi 0, %s154
      %s172 = sphi 0, %s172
      %s174 = sphi 0, %s172
      %s175 = sphi 0, %s174
      %s189 = sphi 0, %s175
      %s195 = sphi 0, %s197
      %s198 = sphi 0, %s195
      %s199 = sphi 0, %s198
      %s215 = sphi 0, %s199
      %s221 = sphi 0, %s223
      %s224 = sphi 0, %s221
      %s225 = sphi 0, %s224
      %s241 = sphi 0, %s225
    $region4: #{tpu_custom_call.1} parent=1 // loop_header_branch
      %31 = sbr.rel (%p29) target = $region8
    $region5: #{tpu_custom_call.1} parent=1 // loop_body
      %s33 = ssub.s32 %s28, 1
      %s34 = ssub.s32 %s28, 2
      %s35 = sadd.s32 %s28, 1
      %s36 = ssub.s32 %s28, %s35
      %p37 = scmp.eq.s32.totalorder %s36, 0
      %s39 = sadd.s32 %s38, 1
      %s40 = scalar_select %p37, %s38, %s39
      %p43 = pneg %p37
      %p44 = scmp.eq.s32.totalorder %s28, 3
      %p45 = por %p43, %p44
      %p46 = scmp.ne.s32.totalorder %s38, %s41
      %p47 = scmp.eq.s32.totalorder %s28, 0
      %p48 = por %p46, %p47
      %p49 = scmp.ne.s32.totalorder %s38, %s41
      %p50 = scmp.eq.s32.totalorder %s33, 3
      %p51 = por %p49, %p50
      %p52 = scmp.ne.s32.totalorder %s41, %s42
      %p53 = scmp.eq.s32.totalorder %s33, 0
      %p54 = por %p52, %p53
      %p55 = scmp.ne.s32.totalorder %s41, %s42
      %p56 = scmp.eq.s32.totalorder %s34, 3
      %p57 = por %p55, %p56
      %p59 = scmp.ne.s32.totalorder %s42, %s58
      %p60 = scmp.eq.s32.totalorder %s34, 0
      %p61 = por %p59, %p60
      %s62 = ssub.s32 %s28, %s35
      %p63 = scmp.eq.s32.totalorder %s62, 0
      %s65 = sadd.s32 %s64, 1
      %s66 = scalar_select %p63, %s64, %s65
      %p69 = pneg %p63
      %p70 = scmp.eq.s32.totalorder %s28, 3
      %p71 = por %p69, %p70
      %p72 = scmp.ne.s32.totalorder %s64, %s67
      %p73 = scmp.eq.s32.totalorder %s28, 0
      %p74 = por %p72, %p73
      %p75 = scmp.ne.s32.totalorder %s64, %s67
      %p76 = scmp.eq.s32.totalorder %s33, 3
      %p77 = por %p75, %p76
      %p78 = scmp.ne.s32.totalorder %s67, %s68
      %p79 = scmp.eq.s32.totalorder %s33, 0
      %p80 = por %p78, %p79
      %p81 = scmp.ne.s32.totalorder %s67, %s68
      %p82 = scmp.eq.s32.totalorder %s34, 3
      %p83 = por %p81, %p82
      %p85 = scmp.ne.s32.totalorder %s68, %s84
      %p86 = scmp.eq.s32.totalorder %s34, 0
      %p87 = por %p85, %p86
      %s89 = sadd.s32 %s88, 1
      %p92 = scmp.eq.s32.totalorder %s28, 3
      %p93 = scmp.ne.s32.totalorder %s88, %s90
      %p94 = scmp.eq.s32.totalorder %s28, 0
      %p95 = por %p93, %p94
      %p96 = scmp.ne.s32.totalorder %s88, %s90
      %p97 = scmp.eq.s32.totalorder %s33, 3
      %p98 = por %p96, %p97
      %p99 = scmp.ne.s32.totalorder %s90, %s91
      %p100 = scmp.eq.s32.totalorder %s33, 0
      %p101 = por %p99, %p100
      %p102 = scmp.ne.s32.totalorder %s90, %s91
      %p103 = scmp.eq.s32.totalorder %s34, 3
      %p104 = por %p102, %p103
      %p106 = scmp.ne.s32.totalorder %s91, %s105
      %p107 = scmp.eq.s32.totalorder %s34, 0
      %p108 = por %p106, %p107
      %s110 = sadd.s32 %s109, 1
      %p113 = scmp.eq.s32.totalorder %s28, 3
      %p114 = scmp.ne.s32.totalorder %s109, %s111
      %p115 = scmp.eq.s32.totalorder %s28, 0
      %p116 = por %p114, %p115
      %p117 = scmp.ne.s32.totalorder %s109, %s111
      %p118 = scmp.eq.s32.totalorder %s33, 3
      %p119 = por %p117, %p118
      %p120 = scmp.ne.s32.totalorder %s111, %s112
      %p121 = scmp.eq.s32.totalorder %s33, 0
      %p122 = por %p120, %p121
      %p123 = scmp.ne.s32.totalorder %s111, %s112
      %p124 = scmp.eq.s32.totalorder %s34, 3
      %p125 = por %p123, %p124
      %p127 = scmp.ne.s32.totalorder %s112, %s126
      %p128 = scmp.eq.s32.totalorder %s34, 0
      %p129 = por %p127, %p128
      %s131 = sadd.s32 %s130, 1
      %p134 = scmp.eq.s32.totalorder %s28, 3
      %p135 = scmp.ne.s32.totalorder %s130, %s132
      %p136 = scmp.eq.s32.totalorder %s28, 0
      %p137 = por %p135, %p136
      %p138 = scmp.ne.s32.totalorder %s130, %s132
      %p139 = scmp.eq.s32.totalorder %s33, 3
      %p140 = por %p138, %p139
      %p141 = scmp.ne.s32.totalorder %s132, %s133
      %p142 = scmp.eq.s32.totalorder %s33, 0
      %p143 = por %p141, %p142
      %p144 = scmp.ne.s32.totalorder %s132, %s133
      %p145 = scmp.eq.s32.totalorder %s34, 3
      %p146 = por %p144, %p145
      %p148 = scmp.ne.s32.totalorder %s133, %s147
      %p149 = scmp.eq.s32.totalorder %s34, 0
      %p150 = por %p148, %p149
      %s152 = sadd.s32 %s151, 1
      %p155 = scmp.eq.s32.totalorder %s28, 3
      %p156 = scmp.ne.s32.totalorder %s151, %s153
      %p157 = scmp.eq.s32.totalorder %s28, 0
      %p158 = por %p156, %p157
      %p159 = scmp.ne.s32.totalorder %s151, %s153
      %p160 = scmp.eq.s32.totalorder %s33, 3
      %p161 = por %p159, %p160
      %p162 = scmp.ne.s32.totalorder %s153, %s154
      %p163 = scmp.eq.s32.totalorder %s33, 0
      %p164 = por %p162, %p163
      %p165 = scmp.ne.s32.totalorder %s153, %s154
      %p166 = scmp.eq.s32.totalorder %s34, 3
      %p167 = por %p165, %p166
      %p169 = scmp.ne.s32.totalorder %s154, %s168
      %p170 = scmp.eq.s32.totalorder %s34, 0
      %p171 = por %p169, %p170
      %s173 = sadd.s32 %s172, 1
      %p176 = scmp.eq.s32.totalorder %s28, 3
      %p177 = scmp.ne.s32.totalorder %s172, %s174
      %p178 = scmp.eq.s32.totalorder %s28, 0
      %p179 = por %p177, %p178
      %p180 = scmp.ne.s32.totalorder %s172, %s174
      %p181 = scmp.eq.s32.totalorder %s33, 3
      %p182 = por %p180, %p181
      %p183 = scmp.ne.s32.totalorder %s174, %s175
      %p184 = scmp.eq.s32.totalorder %s33, 0
      %p185 = por %p183, %p184
      %p186 = scmp.ne.s32.totalorder %s174, %s175
      %p187 = scmp.eq.s32.totalorder %s34, 3
      %p188 = por %p186, %p187
      %p190 = scmp.ne.s32.totalorder %s175, %s189
      %p191 = scmp.eq.s32.totalorder %s34, 0
      %p192 = por %p190, %p191
      %s193 = ssub.s32 %s28, %s35
      %p194 = scmp.eq.s32.totalorder %s193, 0
      %s196 = sadd.s32 %s195, 1
      %s197 = scalar_select %p194, %s195, %s196
      %p200 = pneg %p194
      %p201 = scmp.eq.s32.totalorder %s28, 3
      %p202 = por %p200, %p201
      %p203 = scmp.ne.s32.totalorder %s195, %s198
      %p204 = scmp.eq.s32.totalorder %s28, 0
      %p205 = por %p203, %p204
      %p206 = scmp.ne.s32.totalorder %s195, %s198
      %p207 = scmp.eq.s32.totalorder %s33, 3
      %p208 = por %p206, %p207
      %p209 = scmp.ne.s32.totalorder %s198, %s199
      %p210 = scmp.eq.s32.totalorder %s33, 0
      %p211 = por %p209, %p210
      %p212 = scmp.ne.s32.totalorder %s198, %s199
      %p213 = scmp.eq.s32.totalorder %s34, 3
      %p214 = por %p212, %p213
      %p216 = scmp.ne.s32.totalorder %s199, %s215
      %p217 = scmp.eq.s32.totalorder %s34, 0
      %p218 = por %p216, %p217
      %s219 = ssub.s32 %s28, %s35
      %p220 = scmp.eq.s32.totalorder %s219, 0
      %s222 = sadd.s32 %s221, 1
      %s223 = scalar_select %p220, %s221, %s222
      %p226 = pneg %p220
      %p227 = scmp.eq.s32.totalorder %s28, 3
      %p228 = por %p226, %p227
      %p229 = scmp.ne.s32.totalorder %s221, %s224
      %p230 = scmp.eq.s32.totalorder %s28, 0
      %p231 = por %p229, %p230
      %p232 = scmp.ne.s32.totalorder %s221, %s224
      %p233 = scmp.eq.s32.totalorder %s33, 3
      %p234 = por %p232, %p233
      %p235 = scmp.ne.s32.totalorder %s224, %s225
      %p236 = scmp.eq.s32.totalorder %s33, 0
      %p237 = por %p235, %p236
      %p238 = scmp.ne.s32.totalorder %s224, %s225
      %p239 = scmp.eq.s32.totalorder %s34, 3
      %p240 = por %p238, %p239
      %p242 = scmp.ne.s32.totalorder %s225, %s241
      %p243 = scmp.eq.s32.totalorder %s34, 0
      %p244 = por %p242, %p243
      %p245 = scmp.le.s32.totalorder 1, %s28
      %p246 = scmp.lt.s32.totalorder %s28, 5
      %p247 = pnand %p245, %p246
      %p248 = pneg %p247
      // Predicated region
      $region9: #{tpu_custom_call.1} parent=5 // pred_check
        _
      $region10: #{tpu_custom_call.1} parent=5 // pred_check_branch
        %250 = sbr.rel (%p247) target = $region12
      $region11: #{tpu_custom_call.1} parent=5 // pred_region
        %s251 = ssub.s32 %s28, 1
        // Predicated region
        $region13: #{tpu_custom_call.1} parent=11 // pred_check
          %p252 = pneg %p101
        $region14: #{tpu_custom_call.1} parent=11 // pred_check_branch
          %254 = sbr.rel (%p252) target = $region16
        $region15: #{tpu_custom_call.1} parent=11 // pred_region
          %s256 = ssub.s32 4096, 4096
          %257 = vsyncadd [#allocation6], %s256
          %s258 = sshll.u32 [#allocation7], 4
          %s259 = int_to_ptr.vmem [resolvable:$true] %s258
          %264 = dma.hbm_to_vmem [thread:$0]  %s2, 4096, %s259, [#allocation6], 256, 256, 16
        $region16: #{tpu_custom_call.1} parent=11 // pred_fallthru
          _
        // Predicated region
        $region17: #{tpu_custom_call.1} parent=11 // pred_check
          %p265 = pneg %p122
        $region18: #{tpu_custom_call.1} parent=11 // pred_check_branch
          %267 = sbr.rel (%p265) target = $region20
        $region19: #{tpu_custom_call.1} parent=11 // pred_region
          %s269 = ssub.s32 4096, 4096
          %270 = vsyncadd [#allocation9], %s269
          %s271 = sshll.u32 [#allocation8], 4
          %s272 = int_to_ptr.vmem [resolvable:$true] %s271
          %277 = dma.hbm_to_vmem [thread:$0]  %s3, 4096, %s272, [#allocation9], 128, 128, 8
        $region20: #{tpu_custom_call.1} parent=11 // pred_fallthru
          _
        // Predicated region
        $region21: #{tpu_custom_call.1} parent=11 // pred_check
          %p278 = pneg %p143
        $region22: #{tpu_custom_call.1} parent=11 // pred_check_branch
          %280 = sbr.rel (%p278) target = $region24
        $region23: #{tpu_custom_call.1} parent=11 // pred_region
          _
        $region24: #{tpu_custom_call.1} parent=11 // pred_fallthru
          _
        // Predicated region
        $region25: #{tpu_custom_call.1} parent=11 // pred_check
          %p281 = pneg %p164
        $region26: #{tpu_custom_call.1} parent=11 // pred_check_branch
          %283 = sbr.rel (%p281) target = $region28
        $region27: #{tpu_custom_call.1} parent=11 // pred_region
          %s285 = ssub.s32 6144, 6144
          %286 = vsyncadd [#allocation9], %s285
          %s287 = sshll.u32 [#allocation10], 4
          %s288 = int_to_ptr.vmem [resolvable:$true] %s287
          %293 = dma.hbm_to_vmem [thread:$0]  %s5, 6144, %s288, [#allocation9], 384, 384, 24
        $region28: #{tpu_custom_call.1} parent=11 // pred_fallthru
          _
        // Predicated region
        $region29: #{tpu_custom_call.1} parent=11 // pred_check
          %p294 = pneg %p185
        $region30: #{tpu_custom_call.1} parent=11 // pred_check_branch
          %296 = sbr.rel (%p294) target = $region32
        $region31: #{tpu_custom_call.1} parent=11 // pred_region
          _
        $region32: #{tpu_custom_call.1} parent=11 // pred_fallthru
          _
      $region12: #{tpu_custom_call.1} parent=5 // pred_fallthru
        _
      %p297 = scmp.lt.s32.totalorder %s28, 4
      // Predicated region
      $region33: #{tpu_custom_call.1} parent=5 // pred_check
        %p298 = pneg %p297
      $region34: #{tpu_custom_call.1} parent=5 // pred_check_branch
        %300 = sbr.rel (%p298) target = $region36
      $region35: #{tpu_custom_call.1} parent=5 // pred_region
        // Predicated region
        $region37: #{tpu_custom_call.1} parent=35 // pred_check
          %p301 = pneg %p48
        $region38: #{tpu_custom_call.1} parent=35 // pred_check_branch
          %303 = sbr.rel (%p301) target = $region40
        $region39: #{tpu_custom_call.1} parent=35 // pred_region
          #allocation15 [shape = 'u32[6]{0}', space=smem, size = 0x18, scoped, tag = 'DMA stride descriptor']
          %s304 = sand.u32 %s38, 1
          %s305 = scalar_lea.sflag [#allocation3], %s304
          %s306 = sand.u32 %s38, 1
          %s307 = smul.addr %s306, 192
          %s308 = scalar_lea.vmem [#allocation2], %s307
          %s309 = smul.u32 8, %s28
          %s310 = ssub.s32 25, %s309
          %p311 = scmp.lt.s32.totalorder %s310, 8
          %s312 = scalar_select %p311, %s310, 8
          %s313 = smul.u32 384, %s312
          %s315 = ssub.s32 3072, %s313
          %316 = vsyncadd %s305, %s315
          %p317 = scmp.ne.s32.totalorder 0, %s313
          %s318 = smul.addr %s309, 128
          %s319 = scalar_lea.hbm %s0, %s318
          %s320 = smul.u32 8, %s312
          %s321 = smul.u32 %s320, 3
          %s323 = sshll.u32 1, 14
          %s324 = sxor.u32 4294967295, %s323
          %s326 = sld [smem:[#allocation0]]
          %s327 = sadd.s32 2, %s326
          %s329 = sshll.u32 7, 26
          %s330 = sxor.u32 4294967295, %s329
          %s331 = sand.u32 0, %s330
          %s332 = sshll.u32 %s327, 26
          %s333 = sor.u32 %s331, %s332
          %s334 = sshll.u32 %s308, 4
          %s335 = int_to_ptr.vmem [resolvable:$true] %s334
          %s336 = sshll.u32 %s321, 4
          %341 = sst [smem:[#allocation15]] 3200
          %s342 = scalar_lea.smem [#allocation15], 1
          %343 = sst [smem:[%s342]] 1024
          %s344 = scalar_lea.smem [#allocation15], 2
          %345 = sst [smem:[%s344]] %s312
          %s346 = scalar_lea.smem [#allocation15], 3
          %347 = sst [smem:[%s346]] 128
          %s348 = scalar_lea.smem [#allocation15], 4
          %349 = sst [smem:[%s348]] 128
          %s350 = scalar_lea.smem [#allocation15], 5
          %351 = sst [smem:[%s350]] 8
          %353 = dma.general (%p317), %s319, %s336, %s335, %s305, 131072, [#allocation15], %s333, 0
        $region40: #{tpu_custom_call.1} parent=35 // pred_fallthru
          _
        // Predicated region
        $region41: #{tpu_custom_call.1} parent=35 // pred_check
          %p354 = pneg %p74
        $region42: #{tpu_custom_call.1} parent=35 // pred_check_branch
          %356 = sbr.rel (%p354) target = $region44
        $region43: #{tpu_custom_call.1} parent=35 // pred_region
          %s357 = sand.u32 %s28, 1
          %s358 = scalar_lea.sflag [#allocation6], %s357
          %s359 = sand.u32 %s64, 1
          %s360 = smul.addr %s359, 64
          %s361 = scalar_lea.vmem [#allocation5], %s360
          %s362 = smul.u32 8, %s28
          %s363 = ssub.s32 25, %s362
          %p364 = scmp.lt.s32.totalorder %s363, 8
          %s365 = scalar_select %p364, %s363, 8
          %s366 = smul.u32 128, %s365
          %s368 = ssub.s32 1024, %s366
          %369 = vsyncadd %s358, %s368
          %p370 = scmp.ne.s32.totalorder 0, %s366
          %s371 = smul.addr %s362, 128
          %s372 = scalar_lea.hbm %s1, %s371
          %s373 = smul.u32 8, %s365
          %s374 = sshll.u32 %s361, 4
          %s375 = int_to_ptr.vmem [resolvable:$true] %s374
          %s376 = sshll.u32 %s373, 4
          %380 = dma.hbm_to_vmem [thread:$0]  (%p370), %s372, %s376, %s375, %s358, 128, 128, 8
        $region44: #{tpu_custom_call.1} parent=35 // pred_fallthru
          _
      $region36: #{tpu_custom_call.1} parent=5 // pred_fallthru
        _
      %p381 = scmp.le.s32.totalorder 1, %s28
      %p382 = scmp.lt.s32.totalorder %s28, 5
      %p383 = pnand %p381, %p382
      %p384 = pneg %p383
      // Predicated region
      $region45: #{tpu_custom_call.1} parent=5 // pred_check
        _
      $region46: #{tpu_custom_call.1} parent=5 // pred_check_branch
        %386 = sbr.rel (%p383) target = $region48
      $region47: #{tpu_custom_call.1} parent=5 // pred_region
        %s387 = ssub.s32 %s28, 1
        %s388 = sand.u32 %s41, 1
        %s389 = scalar_lea.sflag [#allocation3], %s388
        %s390 = sand.u32 %s41, 1
        %s391 = smul.addr %s390, 192
        %s392 = scalar_lea.vmem [#allocation2], %s391
        // Predicated region
        $region49: #{tpu_custom_call.1} parent=47 // pred_check
          %p393 = pneg %p54
        $region50: #{tpu_custom_call.1} parent=47 // pred_check_branch
          %395 = sbr.rel (%p393) target = $region52
        $region51: #{tpu_custom_call.1} parent=47 // pred_region
          %396 = dma.done %s389, 3072
        $region52: #{tpu_custom_call.1} parent=47 // pred_fallthru
          _
        %s397 = sand.u32 %s33, 1
        %s398 = scalar_lea.sflag [#allocation6], %s397
        %s399 = sand.u32 %s67, 1
        %s400 = smul.addr %s399, 64
        %s401 = scalar_lea.vmem [#allocation5], %s400
        // Predicated region
        $region53: #{tpu_custom_call.1} parent=47 // pred_check
          %p402 = pneg %p80
        $region54: #{tpu_custom_call.1} parent=47 // pred_check_branch
          %404 = sbr.rel (%p402) target = $region56
        $region55: #{tpu_custom_call.1} parent=47 // pred_region
          %405 = dma.done %s398, 1024
        $region56: #{tpu_custom_call.1} parent=47 // pred_fallthru
          _
        // Predicated region
        $region57: #{tpu_custom_call.1} parent=47 // pred_check
          %p406 = pneg %p101
        $region58: #{tpu_custom_call.1} parent=47 // pred_check_branch
          %408 = sbr.rel (%p406) target = $region60
        $region59: #{tpu_custom_call.1} parent=47 // pred_region
          %409 = dma.done [#allocation6], 4096
        $region60: #{tpu_custom_call.1} parent=47 // pred_fallthru
          _
        // Predicated region
        $region61: #{tpu_custom_call.1} parent=47 // pred_check
          %p410 = pneg %p122
        $region62: #{tpu_custom_call.1} parent=47 // pred_check_branch
          %412 = sbr.rel (%p410) target = $region64
        $region63: #{tpu_custom_call.1} parent=47 // pred_region
          %413 = dma.done [#allocation9], 4096
        $region64: #{tpu_custom_call.1} parent=47 // pred_fallthru
          _
        // Predicated region
        $region65: #{tpu_custom_call.1} parent=47 // pred_check
          %p414 = pneg %p164
        $region66: #{tpu_custom_call.1} parent=47 // pred_check_branch
          %416 = sbr.rel (%p414) target = $region68
        $region67: #{tpu_custom_call.1} parent=47 // pred_region
          %417 = dma.done [#allocation9], 6144
        $region68: #{tpu_custom_call.1} parent=47 // pred_fallthru
          _
        %s418 = sand.u32 %s41, 1
        %s419 = scalar_lea.sflag [#allocation3], %s418
        %s420 = sand.u32 %s41, 1
        %s421 = smul.addr %s420, 192
        %s422 = scalar_lea.vmem [#allocation2], %s421
        %p423 = pneg %p54
        %p424 = pneg %p51
        %s425 = sand.u32 %s33, 1
        %s426 = scalar_lea.sflag [#allocation6], %s425
        %s427 = sand.u32 %s67, 1
        %s428 = smul.addr %s427, 64
        %s429 = scalar_lea.vmem [#allocation5], %s428
        %p430 = pneg %p80
        %p431 = pneg %p77
        %p432 = pneg %p101
        %p433 = pneg %p98
        %p434 = pneg %p122
        %p435 = pneg %p119
        %p436 = pneg %p143
        %p437 = pneg %p140
        %p438 = pneg %p164
        %p439 = pneg %p161
        %p440 = pneg %p185
        %p441 = pneg %p182
        %p442 = pneg %p211
        %p443 = pneg %p208
        %s444 = sand.u32 %s198, 1
        %s445 = scalar_lea.sflag [#allocation4], %s444
        %s446 = sand.u32 %s198, 1
        %s447 = smul.addr %s446, 192
        %s448 = scalar_lea.vmem [#allocation11], %s447
        %p449 = pneg %p237
        %p450 = pneg %p234
        %s451 = sand.u32 %s224, 1
        %s452 = scalar_lea.sflag [#allocation13], %s451
        %s453 = sand.u32 %s224, 1
        %s454 = smul.addr %s453, 64
        %s455 = scalar_lea.vmem [#allocation12], %s454
        %s456 = smul.u32 8, %s33
        %s457 = ssub.s32 25, %s456
        %p458 = scmp.lt.s32.totalorder %s457, 8
        %s459 = scalar_select %p458, %s457, 8
        %s460 = smul.u32 384, %s459
        %s461 = smul.u32 8, %s33
        %s462 = ssub.s32 25, %s461
        %p463 = scmp.lt.s32.totalorder %s462, 8
        %s464 = scalar_select %p463, %s462, 8
        %s465 = smul.u32 128, %s464
        %s466 = smul.u32 8, %s33
        %s467 = ssub.s32 25, %s466
        %p468 = scmp.lt.s32.totalorder %s467, 8
        %s469 = scalar_select %p468, %s467, 8
        %s470 = smul.u32 384, %s469
        %s471 = smul.u32 8, %s33
        %s472 = ssub.s32 25, %s471
        %p473 = scmp.lt.s32.totalorder %s472, 8
        %s474 = scalar_select %p473, %s472, 8
        %s475 = smul.u32 128, %s474
        %v476 = vld [vmem:[%s392] sm:$0xff]
        %v477 = vld [vmem:[%s392 + $0x8] sm:$0xff]
        %v478 = vld [vmem:[%s392 + $0x10] sm:$0xff]
        %v479 = vld [vmem:[%s392 + $0x18] sm:$0xff]
        %v480 = vld [vmem:[%s392 + $0x20] sm:$0xff]
        %v481 = vld [vmem:[%s392 + $0x28] sm:$0xff]
        %v482 = vld [vmem:[%s392 + $0x30] sm:$0xff]
        %v483 = vld [vmem:[%s392 + $0x38] sm:$0xff]
        %v484 = vld [vmem:[%s392 + $0x40] sm:$0xff]
        %v485 = vld [vmem:[%s392 + $0x48] sm:$0xff]
        %v486 = vld [vmem:[%s392 + $0x50] sm:$0xff]
        %v487 = vld [vmem:[%s392 + $0x58] sm:$0xff]
        %v488 = vld [vmem:[%s392 + $0x60] sm:$0xff]
        %v489 = vld [vmem:[%s392 + $0x68] sm:$0xff]
        %v490 = vld [vmem:[%s392 + $0x70] sm:$0xff]
        %v491 = vld [vmem:[%s392 + $0x78] sm:$0xff]
        %v492 = vld [vmem:[%s392 + $0x80] sm:$0xff]
        %v493 = vld [vmem:[%s392 + $0x88] sm:$0xff]
        %v494 = vld [vmem:[%s392 + $0x90] sm:$0xff]
        %v495 = vld [vmem:[%s392 + $0x98] sm:$0xff]
        %v496 = vld [vmem:[%s392 + $0xa0] sm:$0xff]
        %v497 = vld [vmem:[%s392 + $0xa8] sm:$0xff]
        %v498 = vld [vmem:[%s392 + $0xb0] sm:$0xff]
        %v499 = vld [vmem:[%s392 + $0xb8] sm:$0xff]
        %v500 = vld [vmem:[#allocation7] sm:$0xff]
        %v501 = vld [vmem:[#allocation7 + $0x8] sm:$0xff]
        %v502 = vld [vmem:[#allocation7 + $0x10] sm:$0xff]
        %v503 = vld [vmem:[#allocation7 + $0x18] sm:$0xff]
        %v504 = vld [vmem:[#allocation7 + $0x20] sm:$0xff]
        %v505 = vld [vmem:[#allocation7 + $0x28] sm:$0xff]
        %v506 = vld [vmem:[#allocation7 + $0x30] sm:$0xff]
        %v507 = vld [vmem:[#allocation7 + $0x38] sm:$0xff]
        %v508 = vld [vmem:[#allocation7 + $0x40] sm:$0xff]
        %v509 = vld [vmem:[#allocation7 + $0x48] sm:$0xff]
        %v510 = vld [vmem:[#allocation7 + $0x50] sm:$0xff]
        %v511 = vld [vmem:[#allocation7 + $0x58] sm:$0xff]
        %v512 = vld [vmem:[#allocation7 + $0x60] sm:$0xff]
        %v513 = vld [vmem:[#allocation7 + $0x68] sm:$0xff]
        %v514 = vld [vmem:[#allocation7 + $0x70] sm:$0xff]
        %v515 = vld [vmem:[#allocation7 + $0x78] sm:$0xff]
        %v516 = vld [vmem:[#allocation7 + $0x80] sm:$0xff]
        %v517 = vld [vmem:[#allocation7 + $0x88] sm:$0xff]
        %v518 = vld [vmem:[#allocation7 + $0x90] sm:$0xff]
        %v519 = vld [vmem:[#allocation7 + $0x98] sm:$0xff]
        %v520 = vld [vmem:[#allocation7 + $0xa0] sm:$0xff]
        %v521 = vld [vmem:[#allocation7 + $0xa8] sm:$0xff]
        %v522 = vld [vmem:[#allocation7 + $0xb0] sm:$0xff]
        %v523 = vld [vmem:[#allocation7 + $0xb8] sm:$0xff]
        %v524 = vld [vmem:[#allocation7 + $0xc0] sm:$0xff]
        %v525 = vld [vmem:[#allocation7 + $0xc8] sm:$0xff]
        %v526 = vld [vmem:[#allocation7 + $0xd0] sm:$0xff]
        %v527 = vld [vmem:[#allocation7 + $0xd8] sm:$0xff]
        %v528 = vld [vmem:[#allocation7 + $0xe0] sm:$0xff]
        %v529 = vld [vmem:[#allocation7 + $0xe8] sm:$0xff]
        %v530 = vld [vmem:[#allocation7 + $0xf0] sm:$0xff]
        %v531 = vld [vmem:[#allocation7 + $0xf8] sm:$0xff]
        %532 = vmatprep.subr.mxu0 %v531
        %533 = vmatpush1.msra.mxu0 %v530
        %534 = vmatprep.subr.mxu0 %v529
        %535 = vmatpush1.msra.mxu0 %v528
        %536 = vmatprep.subr.mxu0 %v527
        %537 = vmatpush1.msra.mxu0 %v526
        %538 = vmatprep.subr.mxu0 %v525
        %539 = vmatpush1.msra.mxu0 %v524
        %540 = vmatprep.subr.mxu0 %v523
        %541 = vmatpush1.msra.mxu0 %v522
        %542 = vmatprep.subr.mxu0 %v521
        %543 = vmatpush1.msra.mxu0 %v520
        %544 = vmatprep.subr.mxu0 %v519
        %545 = vmatpush1.msra.mxu0 %v518
        %546 = vmatprep.subr.mxu0 %v517
        %547 = vmatpush1.msra.mxu0 %v516
        %548 = vmatprep.subr.mxu0 %v515
        %549 = vmatpush1.msra.mxu0 %v514
        %550 = vmatprep.subr.mxu0 %v513
        %551 = vmatpush1.msra.mxu0 %v512
        %552 = vmatprep.subr.mxu0 %v511
        %553 = vmatpush1.msra.mxu0 %v510
        %554 = vmatprep.subr.mxu0 %v509
        %555 = vmatpush1.msra.mxu0 %v508
        %556 = vmatprep.subr.mxu0 %v507
        %557 = vmatpush1.msra.mxu0 %v506
        %558 = vmatprep.subr.mxu0 %v505
        %559 = vmatpush1.msra.mxu0 %v504
        %560 = vmatprep.subr.mxu0 %v503
        %561 = vmatpush1.msra.mxu0 %v502
        %562 = vmatprep.subr.mxu0 %v501
        %563 = vmatpush1.msra.mxu0 %v500
        %564 = vmatprep.subr.mxu0 0.0
        %565 = vmatpush2.msra.mxu0 0.0
        %566 = vmatprep.subr.mxu0 0.0
        %567 = vmatpush2.msra.mxu0 0.0
        %568 = vmatprep.subr.mxu0 0.0
        %569 = vmatpush2.msra.mxu0 0.0
        %570 = vmatprep.subr.mxu0 0.0
        %571 = vmatpush2.msra.mxu0 0.0
        %572 = vmatprep.subr.mxu0 0.0
        %573 = vmatpush2.msra.mxu0 0.0
        %574 = vmatprep.subr.mxu0 0.0
        %575 = vmatpush2.msra.mxu0 0.0
        %576 = vmatprep.subr.mxu0 0.0
        %577 = vmatpush2.msra.mxu0 0.0
        %578 = vmatprep.subr.mxu0 0.0
        %579 = vmatpush2.msra.mxu0 0.0
        %580 = vmatprep.subr.mxu0 0.0
        %581 = vmatpush2.msra.mxu0 0.0
        %582 = vmatprep.subr.mxu0 0.0
        %583 = vmatpush2.msra.mxu0 0.0
        %584 = vmatprep.subr.mxu0 0.0
        %585 = vmatpush2.msra.mxu0 0.0
        %586 = vmatprep.subr.mxu0 0.0
        %587 = vmatpush2.msra.mxu0 0.0
        %588 = vmatprep.subr.mxu0 0.0
        %589 = vmatpush2.msra.mxu0 0.0
        %590 = vmatprep.subr.mxu0 0.0
        %591 = vmatpush2.msra.mxu0 0.0
        %592 = vmatprep.subr.mxu0 0.0
        %593 = vmatpush2.msra.mxu0 0.0
        %594 = vmatprep.subr.mxu0 0.0
        %595 = vmatpush2.msra.mxu0 0.0
        %596 = vmatprep.mubr.f32.mxu0 0.0
        %597 = vmatmul.mubr.f32.gmra.mxu0 %v476
        %v598 = vpop.f32.mrf.mxu0
        %v599 = vadd.f32 0.0, %v598
        %v600 = vpop.f32.mrf.mxu0
        %v601 = vadd.f32 0.0, %v600
        %602 = vmatprep.mubr.f32.mxu0 0.0
        %603 = vmatmul.mubr.f32.gmra.mxu0 %v477
        %v604 = vpop.f32.mrf.mxu0
        %v605 = vadd.f32 0.0, %v604
        %v606 = vpop.f32.mrf.mxu0
        %v607 = vadd.f32 0.0, %v606
        %608 = vmatprep.mubr.f32.mxu0 0.0
        %609 = vmatmul.mubr.f32.gmra.mxu0 %v478
        %v610 = vpop.f32.mrf.mxu0
        %v611 = vadd.f32 0.0, %v610
        %v612 = vpop.f32.mrf.mxu0
        %v613 = vadd.f32 0.0, %v612
        %614 = vmatprep.mubr.f32.mxu0 0.0
        %615 = vmatmul.mubr.f32.gmra.mxu0 %v479
        %v616 = vpop.f32.mrf.mxu0
        %v617 = vadd.f32 0.0, %v616
        %v618 = vpop.f32.mrf.mxu0
        %v619 = vadd.f32 0.0, %v618
        %620 = vmatprep.mubr.f32.mxu0 0.0
        %621 = vmatmul.mubr.f32.gmra.mxu0 %v480
        %v622 = vpop.f32.mrf.mxu0
        %v623 = vadd.f32 0.0, %v622
        %v624 = vpop.f32.mrf.mxu0
        %v625 = vadd.f32 0.0, %v624
        %626 = vmatprep.mubr.f32.mxu0 0.0
        %627 = vmatmul.mubr.f32.gmra.mxu0 %v481
        %v628 = vpop.f32.mrf.mxu0
        %v629 = vadd.f32 0.0, %v628
        %v630 = vpop.f32.mrf.mxu0
        %v631 = vadd.f32 0.0, %v630
        %632 = vmatprep.mubr.f32.mxu0 0.0
        %633 = vmatmul.mubr.f32.gmra.mxu0 %v482
        %v634 = vpop.f32.mrf.mxu0
        %v635 = vadd.f32 0.0, %v634
        %v636 = vpop.f32.mrf.mxu0
        %v637 = vadd.f32 0.0, %v636
        %638 = vmatprep.mubr.f32.mxu0 0.0
        %639 = vmatmul.mubr.f32.gmra.mxu0 %v483
        %v640 = vpop.f32.mrf.mxu0
        %v641 = vadd.f32 0.0, %v640
        %v642 = vpop.f32.mrf.mxu0
        %v643 = vadd.f32 0.0, %v642
        %644 = vmatprep.mubr.f32.mxu0 0.0
        %645 = vmatmul.mubr.f32.gmra.mxu0 %v484
        %v646 = vpop.f32.mrf.mxu0
        %v647 = vadd.f32 0.0, %v646
        %v648 = vpop.f32.mrf.mxu0
        %v649 = vadd.f32 0.0, %v648
        %650 = vmatprep.mubr.f32.mxu0 0.0
        %651 = vmatmul.mubr.f32.gmra.mxu0 %v485
        %v652 = vpop.f32.mrf.mxu0
        %v653 = vadd.f32 0.0, %v652
        %v654 = vpop.f32.mrf.mxu0
        %v655 = vadd.f32 0.0, %v654
        %656 = vmatprep.mubr.f32.mxu0 0.0
        %657 = vmatmul.mubr.f32.gmra.mxu0 %v486
        %v658 = vpop.f32.mrf.mxu0
        %v659 = vadd.f32 0.0, %v658
        %v660 = vpop.f32.mrf.mxu0
        %v661 = vadd.f32 0.0, %v660
        %662 = vmatprep.mubr.f32.mxu0 0.0
        %663 = vmatmul.mubr.f32.gmra.mxu0 %v487
        %v664 = vpop.f32.mrf.mxu0
        %v665 = vadd.f32 0.0, %v664
        %v666 = vpop.f32.mrf.mxu0
        %v667 = vadd.f32 0.0, %v666
        %668 = vmatprep.mubr.f32.mxu0 0.0
        %669 = vmatmul.mubr.f32.gmra.mxu0 %v488
        %v670 = vpop.f32.mrf.mxu0
        %v671 = vadd.f32 0.0, %v670
        %v672 = vpop.f32.mrf.mxu0
        %v673 = vadd.f32 0.0, %v672
        %674 = vmatprep.mubr.f32.mxu0 0.0
        %675 = vmatmul.mubr.f32.gmra.mxu0 %v489
        %v676 = vpop.f32.mrf.mxu0
        %v677 = vadd.f32 0.0, %v676
        %v678 = vpop.f32.mrf.mxu0
        %v679 = vadd.f32 0.0, %v678
        %680 = vmatprep.mubr.f32.mxu0 0.0
        %681 = vmatmul.mubr.f32.gmra.mxu0 %v490
        %v682 = vpop.f32.mrf.mxu0
        %v683 = vadd.f32 0.0, %v682
        %v684 = vpop.f32.mrf.mxu0
        %v685 = vadd.f32 0.0, %v684
        %686 = vmatprep.mubr.f32.mxu0 0.0
        %687 = vmatmul.mubr.f32.gmra.mxu0 %v491
        %v688 = vpop.f32.mrf.mxu0
        %v689 = vadd.f32 0.0, %v688
        %v690 = vpop.f32.mrf.mxu0
        %v691 = vadd.f32 0.0, %v690
        %692 = vmatprep.mubr.f32.mxu0 0.0
        %693 = vmatmul.mubr.f32.gmra.mxu0 %v492
        %v694 = vpop.f32.mrf.mxu0
        %v695 = vadd.f32 0.0, %v694
        %v696 = vpop.f32.mrf.mxu0
        %v697 = vadd.f32 0.0, %v696
        %698 = vmatprep.mubr.f32.mxu0 0.0
        %699 = vmatmul.mubr.f32.gmra.mxu0 %v493
        %v700 = vpop.f32.mrf.mxu0
        %v701 = vadd.f32 0.0, %v700
        %v702 = vpop.f32.mrf.mxu0
        %v703 = vadd.f32 0.0, %v702
        %704 = vmatprep.mubr.f32.mxu0 0.0
        %705 = vmatmul.mubr.f32.gmra.mxu0 %v494
        %v706 = vpop.f32.mrf.mxu0
        %v707 = vadd.f32 0.0, %v706
        %v708 = vpop.f32.mrf.mxu0
        %v709 = vadd.f32 0.0, %v708
        %710 = vmatprep.mubr.f32.mxu0 0.0
        %711 = vmatmul.mubr.f32.gmra.mxu0 %v495
        %v712 = vpop.f32.mrf.mxu0
        %v713 = vadd.f32 0.0, %v712
        %v714 = vpop.f32.mrf.mxu0
        %v715 = vadd.f32 0.0, %v714
        %716 = vmatprep.mubr.f32.mxu0 0.0
        %717 = vmatmul.mubr.f32.gmra.mxu0 %v496
        %v718 = vpop.f32.mrf.mxu0
        %v719 = vadd.f32 0.0, %v718
        %v720 = vpop.f32.mrf.mxu0
        %v721 = vadd.f32 0.0, %v720
        %722 = vmatprep.mubr.f32.mxu0 0.0
        %723 = vmatmul.mubr.f32.gmra.mxu0 %v497
        %v724 = vpop.f32.mrf.mxu0
        %v725 = vadd.f32 0.0, %v724
        %v726 = vpop.f32.mrf.mxu0
        %v727 = vadd.f32 0.0, %v726
        %728 = vmatprep.mubr.f32.mxu0 0.0
        %729 = vmatmul.mubr.f32.gmra.mxu0 %v498
        %v730 = vpop.f32.mrf.mxu0
        %v731 = vadd.f32 0.0, %v730
        %v732 = vpop.f32.mrf.mxu0
        %v733 = vadd.f32 0.0, %v732
        %734 = vmatprep.mubr.f32.mxu0 0.0
        %735 = vmatmul.mubr.f32.gmra.mxu0 %v499
        %v736 = vpop.f32.mrf.mxu0
        %v737 = vadd.f32 0.0, %v736
        %v738 = vpop.f32.mrf.mxu0
        %v739 = vadd.f32 0.0, %v738
        %740 = vdwg.mxu0
        %v741 = vadd.f32 %v601, %v649
        %v742 = vadd.f32 %v607, %v655
        %v743 = vadd.f32 %v613, %v661
        %v744 = vadd.f32 %v619, %v667
        %v745 = vadd.f32 %v625, %v673
        %v746 = vadd.f32 %v631, %v679
        %v747 = vadd.f32 %v637, %v685
        %v748 = vadd.f32 %v643, %v691
        %v749 = vadd.f32 %v741, %v697
        %v750 = vadd.f32 %v742, %v703
        %v751 = vadd.f32 %v743, %v709
        %v752 = vadd.f32 %v744, %v715
        %v753 = vadd.f32 %v745, %v721
        %v754 = vadd.f32 %v746, %v727
        %v755 = vadd.f32 %v747, %v733
        %v756 = vadd.f32 %v748, %v739
        %v757 = vmul.f32 %v599, %v601
        %v758 = vmul.f32 %v605, %v607
        %v759 = vmul.f32 %v611, %v613
        %v760 = vmul.f32 %v617, %v619
        %v761 = vmul.f32 %v623, %v625
        %v762 = vmul.f32 %v629, %v631
        %v763 = vmul.f32 %v635, %v637
        %v764 = vmul.f32 %v641, %v643
        %v765 = vmul.f32 %v647, %v649
        %v766 = vmul.f32 %v653, %v655
        %v767 = vmul.f32 %v659, %v661
        %v768 = vmul.f32 %v665, %v667
        %v769 = vmul.f32 %v671, %v673
        %v770 = vmul.f32 %v677, %v679
        %v771 = vmul.f32 %v683, %v685
        %v772 = vmul.f32 %v689, %v691
        %v773 = vmul.f32 %v695, %v697
        %v774 = vmul.f32 %v701, %v703
        %v775 = vmul.f32 %v707, %v709
        %v776 = vmul.f32 %v713, %v715
        %v777 = vmul.f32 %v719, %v721
        %v778 = vmul.f32 %v725, %v727
        %v779 = vmul.f32 %v731, %v733
        %v780 = vmul.f32 %v737, %v739
        %v781 = vadd.f32 %v757, %v765
        %v782 = vadd.f32 %v758, %v766
        %v783 = vadd.f32 %v759, %v767
        %v784 = vadd.f32 %v760, %v768
        %v785 = vadd.f32 %v761, %v769
        %v786 = vadd.f32 %v762, %v770
        %v787 = vadd.f32 %v763, %v771
        %v788 = vadd.f32 %v764, %v772
        %v789 = vadd.f32 %v781, %v773
        %v790 = vadd.f32 %v782, %v774
        %v791 = vadd.f32 %v783, %v775
        %v792 = vadd.f32 %v784, %v776
        %v793 = vadd.f32 %v785, %v777
        %v794 = vadd.f32 %v786, %v778
        %v795 = vadd.f32 %v787, %v779
        %v796 = vadd.f32 %v788, %v780
        %v797 = vld [vmem:[%s401] sm:$0xff]
        %v798 = vld [vmem:[%s401 + $0x8] sm:$0xff]
        %v799 = vld [vmem:[%s401 + $0x10] sm:$0xff]
        %v800 = vld [vmem:[%s401 + $0x18] sm:$0xff]
        %v801 = vld [vmem:[%s401 + $0x20] sm:$0xff]
        %v802 = vld [vmem:[%s401 + $0x28] sm:$0xff]
        %v803 = vld [vmem:[%s401 + $0x30] sm:$0xff]
        %v804 = vld [vmem:[%s401 + $0x38] sm:$0xff]
        %v805 = vld [vmem:[#allocation8] sm:$0xff]
        %v806 = vld [vmem:[#allocation8 + $0x8] sm:$0xff]
        %v807 = vld [vmem:[#allocation8 + $0x10] sm:$0xff]
        %v808 = vld [vmem:[#allocation8 + $0x18] sm:$0xff]
        %v809 = vld [vmem:[#allocation8 + $0x20] sm:$0xff]
        %v810 = vld [vmem:[#allocation8 + $0x28] sm:$0xff]
        %v811 = vld [vmem:[#allocation8 + $0x30] sm:$0xff]
        %v812 = vld [vmem:[#allocation8 + $0x38] sm:$0xff]
        %v813 = vld [vmem:[#allocation8 + $0x40] sm:$0xff]
        %v814 = vld [vmem:[#allocation8 + $0x48] sm:$0xff]
        %v815 = vld [vmem:[#allocation8 + $0x50] sm:$0xff]
        %v816 = vld [vmem:[#allocation8 + $0x58] sm:$0xff]
        %v817 = vld [vmem:[#allocation8 + $0x60] sm:$0xff]
        %v818 = vld [vmem:[#allocation8 + $0x68] sm:$0xff]
        %v819 = vld [vmem:[#allocation8 + $0x70] sm:$0xff]
        %v820 = vld [vmem:[#allocation8 + $0x78] sm:$0xff]
        %v821 = vld [vmem:[#allocation8 + $0x80] sm:$0xff]
        %v822 = vld [vmem:[#allocation8 + $0x88] sm:$0xff]
        %v823 = vld [vmem:[#allocation8 + $0x90] sm:$0xff]
        %v824 = vld [vmem:[#allocation8 + $0x98] sm:$0xff]
        %v825 = vld [vmem:[#allocation8 + $0xa0] sm:$0xff]
        %v826 = vld [vmem:[#allocation8 + $0xa8] sm:$0xff]
        %v827 = vld [vmem:[#allocation8 + $0xb0] sm:$0xff]
        %v828 = vld [vmem:[#allocation8 + $0xb8] sm:$0xff]
        %v829 = vld [vmem:[#allocation8 + $0xc0] sm:$0xff]
        %v830 = vld [vmem:[#allocation8 + $0xc8] sm:$0xff]
        %v831 = vld [vmem:[#allocation8 + $0xd0] sm:$0xff]
        %v832 = vld [vmem:[#allocation8 + $0xd8] sm:$0xff]
        %v833 = vld [vmem:[#allocation8 + $0xe0] sm:$0xff]
        %v834 = vld [vmem:[#allocation8 + $0xe8] sm:$0xff]
        %v835 = vld [vmem:[#allocation8 + $0xf0] sm:$0xff]
        %v836 = vld [vmem:[#allocation8 + $0xf8] sm:$0xff]
        %v837 = vld [vmem:[%s4] sm:$0x1]
        %v839 = vlaneseq
        %v840 = vshrl.u32 %v839, 7
        %v841 = vsub.s32 0, %v840
        %v842 = vrot.slane %v837, %v841
        %844 = vmatprep.subr.mxu0 0.0
        %845 = vmatpush1.msra.mxu0 %v820
        %846 = vmatprep.subr.mxu0 0.0
        %847 = vmatpush1.msra.mxu0 %v819
        %848 = vmatprep.subr.mxu0 0.0
        %849 = vmatpush1.msra.mxu0 %v818
        %850 = vmatprep.subr.mxu0 0.0
        %851 = vmatpush1.msra.mxu0 %v817
        %852 = vmatprep.subr.mxu0 0.0
        %853 = vmatpush1.msra.mxu0 %v816
        %854 = vmatprep.subr.mxu0 0.0
        %855 = vmatpush1.msra.mxu0 %v815
        %856 = vmatprep.subr.mxu0 0.0
        %857 = vmatpush1.msra.mxu0 %v814
        %858 = vmatprep.subr.mxu0 0.0
        %859 = vmatpush1.msra.mxu0 %v813
        %860 = vmatprep.subr.mxu0 0.0
        %861 = vmatpush1.msra.mxu0 %v812
        %862 = vmatprep.subr.mxu0 0.0
        %863 = vmatpush1.msra.mxu0 %v811
        %864 = vmatprep.subr.mxu0 0.0
        %865 = vmatpush1.msra.mxu0 %v810
        %866 = vmatprep.subr.mxu0 0.0
        %867 = vmatpush1.msra.mxu0 %v809
        %868 = vmatprep.subr.mxu0 0.0
        %869 = vmatpush1.msra.mxu0 %v808
        %870 = vmatprep.subr.mxu0 0.0
        %871 = vmatpush1.msra.mxu0 %v807
        %872 = vmatprep.subr.mxu0 0.0
        %873 = vmatpush1.msra.mxu0 %v806
        %874 = vmatprep.subr.mxu0 0.0
        %875 = vmatpush1.msra.mxu0 %v805
        %876 = vmatprep.subr.mxu0 0.0
        %877 = vmatpush2.msra.mxu0 %v836
        %878 = vmatprep.subr.mxu0 0.0
        %879 = vmatpush2.msra.mxu0 %v835
        %880 = vmatprep.subr.mxu0 0.0
        %881 = vmatpush2.msra.mxu0 %v834
        %882 = vmatprep.subr.mxu0 0.0
        %883 = vmatpush2.msra.mxu0 %v833
        %884 = vmatprep.subr.mxu0 0.0
        %885 = vmatpush2.msra.mxu0 %v832
        %886 = vmatprep.subr.mxu0 0.0
        %887 = vmatpush2.msra.mxu0 %v831
        %888 = vmatprep.subr.mxu0 0.0
        %889 = vmatpush2.msra.mxu0 %v830
        %890 = vmatprep.subr.mxu0 0.0
        %891 = vmatpush2.msra.mxu0 %v829
        %892 = vmatprep.subr.mxu0 0.0
        %893 = vmatpush2.msra.mxu0 %v828
        %894 = vmatprep.subr.mxu0 0.0
        %895 = vmatpush2.msra.mxu0 %v827
        %896 = vmatprep.subr.mxu0 0.0
        %897 = vmatpush2.msra.mxu0 %v826
        %898 = vmatprep.subr.mxu0 0.0
        %899 = vmatpush2.msra.mxu0 %v825
        %900 = vmatprep.subr.mxu0 0.0
        %901 = vmatpush2.msra.mxu0 %v824
        %902 = vmatprep.subr.mxu0 0.0
        %903 = vmatpush2.msra.mxu0 %v823
        %904 = vmatprep.subr.mxu0 0.0
        %905 = vmatpush2.msra.mxu0 %v822
        %906 = vmatprep.subr.mxu0 0.0
        %907 = vmatpush2.msra.mxu0 %v821
        %908 = vmatprep.mubr.f32.mxu0 %v749
        %909 = vmatmul.mubr.f32.gmra.mxu0 %v797
        %v910 = vpop.f32.mrf.mxu0
        %v911 = vadd.f32 %v842, %v910
        %v912 = vpop.f32.mrf.mxu0
        %913 = vmatprep.mubr.f32.mxu0 %v750
        %914 = vmatmul.mubr.f32.gmra.mxu0 %v798
        %v915 = vpop.f32.mrf.mxu0
        %v916 = vadd.f32 %v842, %v915
        %v917 = vpop.f32.mrf.mxu0
        %918 = vmatprep.mubr.f32.mxu0 %v751
        %919 = vmatmul.mubr.f32.gmra.mxu0 %v799
        %v920 = vpop.f32.mrf.mxu0
        %v921 = vadd.f32 %v842, %v920
        %v922 = vpop.f32.mrf.mxu0
        %923 = vmatprep.mubr.f32.mxu0 %v752
        %924 = vmatmul.mubr.f32.gmra.mxu0 %v800
        %v925 = vpop.f32.mrf.mxu0
        %v926 = vadd.f32 %v842, %v925
        %v927 = vpop.f32.mrf.mxu0
        %928 = vmatprep.mubr.f32.mxu0 %v753
        %929 = vmatmul.mubr.f32.gmra.mxu0 %v801
        %v930 = vpop.f32.mrf.mxu0
        %v931 = vadd.f32 %v842, %v930
        %v932 = vpop.f32.mrf.mxu0
        %933 = vmatprep.mubr.f32.mxu0 %v754
        %934 = vmatmul.mubr.f32.gmra.mxu0 %v802
        %v935 = vpop.f32.mrf.mxu0
        %v936 = vadd.f32 %v842, %v935
        %v937 = vpop.f32.mrf.mxu0
        %938 = vmatprep.mubr.f32.mxu0 %v755
        %939 = vmatmul.mubr.f32.gmra.mxu0 %v803
        %v940 = vpop.f32.mrf.mxu0
        %v941 = vadd.f32 %v842, %v940
        %v942 = vpop.f32.mrf.mxu0
        %943 = vmatprep.mubr.f32.mxu0 %v756
        %944 = vmatmul.mubr.f32.gmra.mxu0 %v804
        %v945 = vpop.f32.mrf.mxu0
        %v946 = vadd.f32 %v842, %v945
        %v947 = vpop.f32.mrf.mxu0
        %948 = vdwg.mxu0
        %v949 = vxor.u32 %v911, 2147483648
        %v950 = vxor.u32 %v916, 2147483648
        %v951 = vxor.u32 %v921, 2147483648
        %v952 = vxor.u32 %v926, 2147483648
        %v953 = vxor.u32 %v931, 2147483648
        %v954 = vxor.u32 %v936, 2147483648
        %v955 = vxor.u32 %v941, 2147483648
        %v956 = vxor.u32 %v946, 2147483648
        %v957 = vmul.f32 %v949, 1.442695
        %v958 = vpow.pop %v957
        %v959 = vmul.f32 %v950, 1.442695
        %v960 = vpow.pop %v959
        %v961 = vmul.f32 %v951, 1.442695
        %v962 = vpow.pop %v961
        %v963 = vmul.f32 %v952, 1.442695
        %v964 = vpow.pop %v963
        %v965 = vmul.f32 %v953, 1.442695
        %v966 = vpow.pop %v965
        %v967 = vmul.f32 %v954, 1.442695
        %v968 = vpow.pop %v967
        %v969 = vmul.f32 %v955, 1.442695
        %v970 = vpow.pop %v969
        %v971 = vmul.f32 %v956, 1.442695
        %v972 = vpow.pop %v971
        %v973 = vadd.f32 %v958, 1.0
        %v974 = vadd.f32 %v960, 1.0
        %v975 = vadd.f32 %v962, 1.0
        %v976 = vadd.f32 %v964, 1.0
        %v977 = vadd.f32 %v966, 1.0
        %v978 = vadd.f32 %v968, 1.0
        %v979 = vadd.f32 %v970, 1.0
        %v980 = vadd.f32 %v972, 1.0
        %v981 = vrcp.pop %v973
        %v982 = vmul.f32 1.0, %v981
        %v983 = vrcp.pop %v974
        %v984 = vmul.f32 1.0, %v983
        %v985 = vrcp.pop %v975
        %v986 = vmul.f32 1.0, %v985
        %v987 = vrcp.pop %v976
        %v988 = vmul.f32 1.0, %v987
        %v989 = vrcp.pop %v977
        %v990 = vmul.f32 1.0, %v989
        %v991 = vrcp.pop %v978
        %v992 = vmul.f32 1.0, %v991
        %v993 = vrcp.pop %v979
        %v994 = vmul.f32 1.0, %v993
        %v995 = vrcp.pop %v980
        %v996 = vmul.f32 1.0, %v995
        %v997 = vmul.f32 %v911, %v982
        %v998 = vmul.f32 %v916, %v984
        %v999 = vmul.f32 %v921, %v986
        %v1000 = vmul.f32 %v926, %v988
        %v1001 = vmul.f32 %v931, %v990
        %v1002 = vmul.f32 %v936, %v992
        %v1003 = vmul.f32 %v941, %v994
        %v1004 = vmul.f32 %v946, %v996
        %v1005 = vmul.f32 %v997, 1.6666666
        %v1006 = vmul.f32 %v998, 1.6666666
        %v1007 = vmul.f32 %v999, 1.6666666
        %v1008 = vmul.f32 %v1000, 1.6666666
        %v1009 = vmul.f32 %v1001, 1.6666666
        %v1010 = vmul.f32 %v1002, 1.6666666
        %v1011 = vmul.f32 %v1003, 1.6666666
        %v1012 = vmul.f32 %v1004, 1.6666666
        %v1013 = vld [vmem:[#allocation10] sm:$0xff]
        %v1014 = vld [vmem:[#allocation10 + $0x8] sm:$0xff]
        %v1015 = vld [vmem:[#allocation10 + $0x10] sm:$0xff]
        %v1016 = vld [vmem:[#allocation10 + $0x18] sm:$0xff]
        %v1017 = vld [vmem:[#allocation10 + $0x20] sm:$0xff]
        %v1018 = vld [vmem:[#allocation10 + $0x28] sm:$0xff]
        %v1019 = vld [vmem:[#allocation10 + $0x30] sm:$0xff]
        %v1020 = vld [vmem:[#allocation10 + $0x38] sm:$0xff]
        %v1021 = vld [vmem:[#allocation10 + $0x40] sm:$0xff]
        %v1022 = vld [vmem:[#allocation10 + $0x48] sm:$0xff]
        %v1023 = vld [vmem:[#allocation10 + $0x50] sm:$0xff]
        %v1024 = vld [vmem:[#allocation10 + $0x58] sm:$0xff]
        %v1025 = vld [vmem:[#allocation10 + $0x60] sm:$0xff]
        %v1026 = vld [vmem:[#allocation10 + $0x68] sm:$0xff]
        %v1027 = vld [vmem:[#allocation10 + $0x70] sm:$0xff]
        %v1028 = vld [vmem:[#allocation10 + $0x78] sm:$0xff]
        %v1029 = vld [vmem:[#allocation10 + $0x80] sm:$0xff]
        %v1030 = vld [vmem:[#allocation10 + $0x88] sm:$0xff]
        %v1031 = vld [vmem:[#allocation10 + $0x90] sm:$0xff]
        %v1032 = vld [vmem:[#allocation10 + $0x98] sm:$0xff]
        %v1033 = vld [vmem:[#allocation10 + $0xa0] sm:$0xff]
        %v1034 = vld [vmem:[#allocation10 + $0xa8] sm:$0xff]
        %v1035 = vld [vmem:[#allocation10 + $0xb0] sm:$0xff]
        %v1036 = vld [vmem:[#allocation10 + $0xb8] sm:$0xff]
        %v1037 = vld [vmem:[#allocation10 + $0xc0] sm:$0xff]
        %v1038 = vld [vmem:[#allocation10 + $0xc8] sm:$0xff]
        %v1039 = vld [vmem:[#allocation10 + $0xd0] sm:$0xff]
        %v1040 = vld [vmem:[#allocation10 + $0xd8] sm:$0xff]
        %v1041 = vld [vmem:[#allocation10 + $0xe0] sm:$0xff]
        %v1042 = vld [vmem:[#allocation10 + $0xe8] sm:$0xff]
        %v1043 = vld [vmem:[#allocation10 + $0xf0] sm:$0xff]
        %v1044 = vld [vmem:[#allocation10 + $0xf8] sm:$0xff]
        %v1045 = vld [vmem:[#allocation10 + $0x100] sm:$0xff]
        %v1046 = vld [vmem:[#allocation10 + $0x108] sm:$0xff]
        %v1047 = vld [vmem:[#allocation10 + $0x110] sm:$0xff]
        %v1048 = vld [vmem:[#allocation10 + $0x118] sm:$0xff]
        %v1049 = vld [vmem:[#allocation10 + $0x120] sm:$0xff]
        %v1050 = vld [vmem:[#allocation10 + $0x128] sm:$0xff]
        %v1051 = vld [vmem:[#allocation10 + $0x130] sm:$0xff]
        %v1052 = vld [vmem:[#allocation10 + $0x138] sm:$0xff]
        %v1053 = vld [vmem:[#allocation10 + $0x140] sm:$0xff]
        %v1054 = vld [vmem:[#allocation10 + $0x148] sm:$0xff]
        %v1055 = vld [vmem:[#allocation10 + $0x150] sm:$0xff]
        %v1056 = vld [vmem:[#allocation10 + $0x158] sm:$0xff]
        %v1057 = vld [vmem:[#allocation10 + $0x160] sm:$0xff]
        %v1058 = vld [vmem:[#allocation10 + $0x168] sm:$0xff]
        %v1059 = vld [vmem:[#allocation10 + $0x170] sm:$0xff]
        %v1060 = vld [vmem:[#allocation10 + $0x178] sm:$0xff]
        %v1061 = vld [vmem:[%s6] sm:$0x7]
        %v1063 = vlaneseq
        %v1064 = vshrl.u32 %v1063, 7
        %v1065 = vsub.s32 0, %v1064
        %v1066 = vrot.slane %v1061, %v1065
        %v1067 = vlaneseq
        %v1068 = vshrl.u32 %v1067, 7
        %v1069 = vsub.s32 1, %v1068
        %v1070 = vrot.slane %v1061, %v1069
        %v1071 = vlaneseq
        %v1072 = vshrl.u32 %v1071, 7
        %v1073 = vsub.s32 2, %v1072
        %v1074 = vrot.slane %v1061, %v1073
        %1078 = vmatprep.subr.mxu0 %v1059
        %1079 = vmatpush1.msra.mxu0 %v1058
        %1080 = vmatprep.subr.mxu0 %v1056
        %1081 = vmatpush1.msra.mxu0 %v1055
        %1082 = vmatprep.subr.mxu0 %v1053
        %1083 = vmatpush1.msra.mxu0 %v1052
        %1084 = vmatprep.subr.mxu0 %v1050
        %1085 = vmatpush1.msra.mxu0 %v1049
        %1086 = vmatprep.subr.mxu0 %v1047
        %1087 = vmatpush1.msra.mxu0 %v1046
        %1088 = vmatprep.subr.mxu0 %v1044
        %1089 = vmatpush1.msra.mxu0 %v1043
        %1090 = vmatprep.subr.mxu0 %v1041
        %1091 = vmatpush1.msra.mxu0 %v1040
        %1092 = vmatprep.subr.mxu0 %v1038
        %1093 = vmatpush1.msra.mxu0 %v1037
        %1094 = vmatprep.subr.mxu0 %v1035
        %1095 = vmatpush1.msra.mxu0 %v1034
        %1096 = vmatprep.subr.mxu0 %v1032
        %1097 = vmatpush1.msra.mxu0 %v1031
        %1098 = vmatprep.subr.mxu0 %v1029
        %1099 = vmatpush1.msra.mxu0 %v1028
        %1100 = vmatprep.subr.mxu0 %v1026
        %1101 = vmatpush1.msra.mxu0 %v1025
        %1102 = vmatprep.subr.mxu0 %v1023
        %1103 = vmatpush1.msra.mxu0 %v1022
        %1104 = vmatprep.subr.mxu0 %v1020
        %1105 = vmatpush1.msra.mxu0 %v1019
        %1106 = vmatprep.subr.mxu0 %v1017
        %1107 = vmatpush1.msra.mxu0 %v1016
        %1108 = vmatprep.subr.mxu0 %v1014
        %1109 = vmatpush1.msra.mxu0 %v1013
        %1110 = vmatprep.subr.mxu0 0.0
        %1111 = vmatpush2.msra.mxu0 0.0
        %1112 = vmatprep.subr.mxu0 0.0
        %1113 = vmatpush2.msra.mxu0 0.0
        %1114 = vmatprep.subr.mxu0 0.0
        %1115 = vmatpush2.msra.mxu0 0.0
        %1116 = vmatprep.subr.mxu0 0.0
        %1117 = vmatpush2.msra.mxu0 0.0
        %1118 = vmatprep.subr.mxu0 0.0
        %1119 = vmatpush2.msra.mxu0 0.0
        %1120 = vmatprep.subr.mxu0 0.0
        %1121 = vmatpush2.msra.mxu0 0.0
        %1122 = vmatprep.subr.mxu0 0.0
        %1123 = vmatpush2.msra.mxu0 0.0
        %1124 = vmatprep.subr.mxu0 0.0
        %1125 = vmatpush2.msra.mxu0 0.0
        %1126 = vmatprep.subr.mxu0 0.0
        %1127 = vmatpush2.msra.mxu0 0.0
        %1128 = vmatprep.subr.mxu0 0.0
        %1129 = vmatpush2.msra.mxu0 0.0
        %1130 = vmatprep.subr.mxu0 0.0
        %1131 = vmatpush2.msra.mxu0 0.0
        %1132 = vmatprep.subr.mxu0 0.0
        %1133 = vmatpush2.msra.mxu0 0.0
        %1134 = vmatprep.subr.mxu0 0.0
        %1135 = vmatpush2.msra.mxu0 0.0
        %1136 = vmatprep.subr.mxu0 0.0
        %1137 = vmatpush2.msra.mxu0 0.0
        %1138 = vmatprep.subr.mxu0 0.0
        %1139 = vmatpush2.msra.mxu0 0.0
        %1140 = vmatprep.subr.mxu0 0.0
        %1141 = vmatpush2.msra.mxu0 0.0
        %1142 = vmatprep.mubr.f32.mxu0 0.0
        %1143 = vmatmul.mubr.f32.gmra.mxu0 %v1005
        %v1144 = vpop.f32.mrf.mxu0
        %v1145 = vadd.f32 %v1066, %v1144
        %v1146 = vpop.f32.mrf.mxu0
        %v1147 = vadd.f32 %v1070, %v1146
        %1148 = vmatprep.mubr.f32.mxu0 0.0
        %1149 = vmatmul.mubr.f32.gmra.mxu0 %v1006
        %v1150 = vpop.f32.mrf.mxu0
        %v1151 = vadd.f32 %v1066, %v1150
        %v1152 = vpop.f32.mrf.mxu0
        %v1153 = vadd.f32 %v1070, %v1152
        %1154 = vmatprep.mubr.f32.mxu0 0.0
        %1155 = vmatmul.mubr.f32.gmra.mxu0 %v1007
        %v1156 = vpop.f32.mrf.mxu0
        %v1157 = vadd.f32 %v1066, %v1156
        %v1158 = vpop.f32.mrf.mxu0
        %v1159 = vadd.f32 %v1070, %v1158
        %1160 = vmatprep.mubr.f32.mxu0 0.0
        %1161 = vmatmul.mubr.f32.gmra.mxu0 %v1008
        %v1162 = vpop.f32.mrf.mxu0
        %v1163 = vadd.f32 %v1066, %v1162
        %v1164 = vpop.f32.mrf.mxu0
        %v1165 = vadd.f32 %v1070, %v1164
        %1166 = vmatprep.mubr.f32.mxu0 0.0
        %1167 = vmatmul.mubr.f32.gmra.mxu0 %v1009
        %v1168 = vpop.f32.mrf.mxu0
        %v1169 = vadd.f32 %v1066, %v1168
        %v1170 = vpop.f32.mrf.mxu0
        %v1171 = vadd.f32 %v1070, %v1170
        %1172 = vmatprep.mubr.f32.mxu0 0.0
        %1173 = vmatmul.mubr.f32.gmra.mxu0 %v1010
        %v1174 = vpop.f32.mrf.mxu0
        %v1175 = vadd.f32 %v1066, %v1174
        %v1176 = vpop.f32.mrf.mxu0
        %v1177 = vadd.f32 %v1070, %v1176
        %1178 = vmatprep.mubr.f32.mxu0 0.0
        %1179 = vmatmul.mubr.f32.gmra.mxu0 %v1011
        %v1180 = vpop.f32.mrf.mxu0
        %v1181 = vadd.f32 %v1066, %v1180
        %v1182 = vpop.f32.mrf.mxu0
        %v1183 = vadd.f32 %v1070, %v1182
        %1184 = vmatprep.mubr.f32.mxu0 0.0
        %1185 = vmatmul.mubr.f32.gmra.mxu0 %v1012
        %v1186 = vpop.f32.mrf.mxu0
        %v1187 = vadd.f32 %v1066, %v1186
        %v1188 = vpop.f32.mrf.mxu0
        %v1189 = vadd.f32 %v1070, %v1188
        %1190 = vdwg.mxu0
        %1191 = vmatprep.subr.mxu0 0.0
        %1192 = vmatpush1.msra.mxu0 %v1060
        %1193 = vmatprep.subr.mxu0 0.0
        %1194 = vmatpush1.msra.mxu0 %v1057
        %1195 = vmatprep.subr.mxu0 0.0
        %1196 = vmatpush1.msra.mxu0 %v1054
        %1197 = vmatprep.subr.mxu0 0.0
        %1198 = vmatpush1.msra.mxu0 %v1051
        %1199 = vmatprep.subr.mxu0 0.0
        %1200 = vmatpush1.msra.mxu0 %v1048
        %1201 = vmatprep.subr.mxu0 0.0
        %1202 = vmatpush1.msra.mxu0 %v1045
        %1203 = vmatprep.subr.mxu0 0.0
        %1204 = vmatpush1.msra.mxu0 %v1042
        %1205 = vmatprep.subr.mxu0 0.0
        %1206 = vmatpush1.msra.mxu0 %v1039
        %1207 = vmatprep.subr.mxu0 0.0
        %1208 = vmatpush1.msra.mxu0 %v1036
        %1209 = vmatprep.subr.mxu0 0.0
        %1210 = vmatpush1.msra.mxu0 %v1033
        %1211 = vmatprep.subr.mxu0 0.0
        %1212 = vmatpush1.msra.mxu0 %v1030
        %1213 = vmatprep.subr.mxu0 0.0
        %1214 = vmatpush1.msra.mxu0 %v1027
        %1215 = vmatprep.subr.mxu0 0.0
        %1216 = vmatpush1.msra.mxu0 %v1024
        %1217 = vmatprep.subr.mxu0 0.0
        %1218 = vmatpush1.msra.mxu0 %v1021
        %1219 = vmatprep.subr.mxu0 0.0
        %1220 = vmatpush1.msra.mxu0 %v1018
        %1221 = vmatprep.subr.mxu0 0.0
        %1222 = vmatpush1.msra.mxu0 %v1015
        %1223 = vmatprep.subr.mxu0 0.0
        %1224 = vmatpush2.msra.mxu0 0.0
        %1225 = vmatprep.subr.mxu0 0.0
        %1226 = vmatpush2.msra.mxu0 0.0
        %1227 = vmatprep.subr.mxu0 0.0
        %1228 = vmatpush2.msra.mxu0 0.0
        %1229 = vmatprep.subr.mxu0 0.0
        %1230 = vmatpush2.msra.mxu0 0.0
        %1231 = vmatprep.subr.mxu0 0.0
        %1232 = vmatpush2.msra.mxu0 0.0
        %1233 = vmatprep.subr.mxu0 0.0
        %1234 = vmatpush2.msra.mxu0 0.0
        %1235 = vmatprep.subr.mxu0 0.0
        %1236 = vmatpush2.msra.mxu0 0.0
        %1237 = vmatprep.subr.mxu0 0.0
        %1238 = vmatpush2.msra.mxu0 0.0
        %1239 = vmatprep.subr.mxu0 0.0
        %1240 = vmatpush2.msra.mxu0 0.0
        %1241 = vmatprep.subr.mxu0 0.0
        %1242 = vmatpush2.msra.mxu0 0.0
        %1243 = vmatprep.subr.mxu0 0.0
        %1244 = vmatpush2.msra.mxu0 0.0
        %1245 = vmatprep.subr.mxu0 0.0
        %1246 = vmatpush2.msra.mxu0 0.0
        %1247 = vmatprep.subr.mxu0 0.0
        %1248 = vmatpush2.msra.mxu0 0.0
        %1249 = vmatprep.subr.mxu0 0.0
        %1250 = vmatpush2.msra.mxu0 0.0
        %1251 = vmatprep.subr.mxu0 0.0
        %1252 = vmatpush2.msra.mxu0 0.0
        %1253 = vmatprep.subr.mxu0 0.0
        %1254 = vmatpush2.msra.mxu0 0.0
        %1255 = vmatprep.mubr.f32.mxu0 0.0
        %1256 = vmatmul.mubr.f32.gmra.mxu0 %v1005
        %v1257 = vpop.f32.mrf.mxu0
        %v1258 = vadd.f32 %v1074, %v1257
        %v1259 = vpop.f32.mrf.mxu0
        %1260 = vmatprep.mubr.f32.mxu0 0.0
        %1261 = vmatmul.mubr.f32.gmra.mxu0 %v1006
        %v1262 = vpop.f32.mrf.mxu0
        %v1263 = vadd.f32 %v1074, %v1262
        %v1264 = vpop.f32.mrf.mxu0
        %1265 = vmatprep.mubr.f32.mxu0 0.0
        %1266 = vmatmul.mubr.f32.gmra.mxu0 %v1007
        %v1267 = vpop.f32.mrf.mxu0
        %v1268 = vadd.f32 %v1074, %v1267
        %v1269 = vpop.f32.mrf.mxu0
        %1270 = vmatprep.mubr.f32.mxu0 0.0
        %1271 = vmatmul.mubr.f32.gmra.mxu0 %v1008
        %v1272 = vpop.f32.mrf.mxu0
        %v1273 = vadd.f32 %v1074, %v1272
        %v1274 = vpop.f32.mrf.mxu0
        %1275 = vmatprep.mubr.f32.mxu0 0.0
        %1276 = vmatmul.mubr.f32.gmra.mxu0 %v1009
        %v1277 = vpop.f32.mrf.mxu0
        %v1278 = vadd.f32 %v1074, %v1277
        %v1279 = vpop.f32.mrf.mxu0
        %1280 = vmatprep.mubr.f32.mxu0 0.0
        %1281 = vmatmul.mubr.f32.gmra.mxu0 %v1010
        %v1282 = vpop.f32.mrf.mxu0
        %v1283 = vadd.f32 %v1074, %v1282
        %v1284 = vpop.f32.mrf.mxu0
        %1285 = vmatprep.mubr.f32.mxu0 0.0
        %1286 = vmatmul.mubr.f32.gmra.mxu0 %v1011
        %v1287 = vpop.f32.mrf.mxu0
        %v1288 = vadd.f32 %v1074, %v1287
        %v1289 = vpop.f32.mrf.mxu0
        %1290 = vmatprep.mubr.f32.mxu0 0.0
        %1291 = vmatmul.mubr.f32.gmra.mxu0 %v1012
        %v1292 = vpop.f32.mrf.mxu0
        %v1293 = vadd.f32 %v1074, %v1292
        %v1294 = vpop.f32.mrf.mxu0
        %1295 = vdwg.mxu0
        %v1296 = vmul.f32 %v1147, %v789
        %v1297 = vmul.f32 %v1153, %v790
        %v1298 = vmul.f32 %v1159, %v791
        %v1299 = vmul.f32 %v1165, %v792
        %v1300 = vmul.f32 %v1171, %v793
        %v1301 = vmul.f32 %v1177, %v794
        %v1302 = vmul.f32 %v1183, %v795
        %v1303 = vmul.f32 %v1189, %v796
        %v1304 = vadd.f32 %v1258, %v1296
        %v1305 = vadd.f32 %v1263, %v1297
        %v1306 = vadd.f32 %v1268, %v1298
        %v1307 = vadd.f32 %v1273, %v1299
        %v1308 = vadd.f32 %v1278, %v1300
        %v1309 = vadd.f32 %v1283, %v1301
        %v1310 = vadd.f32 %v1288, %v1302
        %v1311 = vadd.f32 %v1293, %v1303
        %1312 = vst [vmem:[%s455] sm:$0xff] %v1304
        %1313 = vst [vmem:[%s455 + $0x8] sm:$0xff] %v1305
        %1314 = vst [vmem:[%s455 + $0x10] sm:$0xff] %v1306
        %1315 = vst [vmem:[%s455 + $0x18] sm:$0xff] %v1307
        %1316 = vst [vmem:[%s455 + $0x20] sm:$0xff] %v1308
        %1317 = vst [vmem:[%s455 + $0x28] sm:$0xff] %v1309
        %1318 = vst [vmem:[%s455 + $0x30] sm:$0xff] %v1310
        %1319 = vst [vmem:[%s455 + $0x38] sm:$0xff] %v1311
        %v1320 = vmul.f32 %v599, %v1145
        %v1321 = vmul.f32 %v605, %v1151
        %v1322 = vmul.f32 %v611, %v1157
        %v1323 = vmul.f32 %v617, %v1163
        %v1324 = vmul.f32 %v623, %v1169
        %v1325 = vmul.f32 %v629, %v1175
        %v1326 = vmul.f32 %v635, %v1181
        %v1327 = vmul.f32 %v641, %v1187
        %1328 = vst [vmem:[%s448] sm:$0xff] %v1320
        %1329 = vst [vmem:[%s448 + $0x8] sm:$0xff] %v1321
        %1330 = vst [vmem:[%s448 + $0x10] sm:$0xff] %v1322
        %1331 = vst [vmem:[%s448 + $0x18] sm:$0xff] %v1323
        %1332 = vst [vmem:[%s448 + $0x20] sm:$0xff] %v1324
        %1333 = vst [vmem:[%s448 + $0x28] sm:$0xff] %v1325
        %1334 = vst [vmem:[%s448 + $0x30] sm:$0xff] %v1326
        %1335 = vst [vmem:[%s448 + $0x38] sm:$0xff] %v1327
        %v1336 = vmul.f32 %v647, %v1145
        %v1337 = vmul.f32 %v653, %v1151
        %v1338 = vmul.f32 %v659, %v1157
        %v1339 = vmul.f32 %v665, %v1163
        %v1340 = vmul.f32 %v671, %v1169
        %v1341 = vmul.f32 %v677, %v1175
        %v1342 = vmul.f32 %v683, %v1181
        %v1343 = vmul.f32 %v689, %v1187
        %s1344 = scalar_lea.vmem %s448, 64 [#allocation11]
        %1345 = vst [vmem:[%s1344] sm:$0xff] %v1336
        %1346 = vst [vmem:[%s1344 + $0x8] sm:$0xff] %v1337
        %1347 = vst [vmem:[%s1344 + $0x10] sm:$0xff] %v1338
        %1348 = vst [vmem:[%s1344 + $0x18] sm:$0xff] %v1339
        %1349 = vst [vmem:[%s1344 + $0x20] sm:$0xff] %v1340
        %1350 = vst [vmem:[%s1344 + $0x28] sm:$0xff] %v1341
        %1351 = vst [vmem:[%s1344 + $0x30] sm:$0xff] %v1342
        %1352 = vst [vmem:[%s1344 + $0x38] sm:$0xff] %v1343
        %v1353 = vmul.f32 %v695, %v1145
        %v1354 = vmul.f32 %v701, %v1151
        %v1355 = vmul.f32 %v707, %v1157
        %v1356 = vmul.f32 %v713, %v1163
        %v1357 = vmul.f32 %v719, %v1169
        %v1358 = vmul.f32 %v725, %v1175
        %v1359 = vmul.f32 %v731, %v1181
        %v1360 = vmul.f32 %v737, %v1187
        %s1361 = scalar_lea.vmem %s448, 128 [#allocation11]
        %1362 = vst [vmem:[%s1361] sm:$0xff] %v1353
        %1363 = vst [vmem:[%s1361 + $0x8] sm:$0xff] %v1354
        %1364 = vst [vmem:[%s1361 + $0x10] sm:$0xff] %v1355
        %1365 = vst [vmem:[%s1361 + $0x18] sm:$0xff] %v1356
        %1366 = vst [vmem:[%s1361 + $0x20] sm:$0xff] %v1357
        %1367 = vst [vmem:[%s1361 + $0x28] sm:$0xff] %v1358
        %1368 = vst [vmem:[%s1361 + $0x30] sm:$0xff] %v1359
        %1369 = vst [vmem:[%s1361 + $0x38] sm:$0xff] %v1360
        %s1370 = sand.u32 %s198, 1
        %s1371 = scalar_lea.sflag [#allocation4], %s1370
        %s1372 = sand.u32 %s198, 1
        %s1373 = smul.addr %s1372, 192
        %s1374 = scalar_lea.vmem [#allocation11], %s1373
        %s1375 = sand.u32 %s224, 1
        %s1376 = scalar_lea.sflag [#allocation13], %s1375
        %s1377 = sand.u32 %s224, 1
        %s1378 = smul.addr %s1377, 64
        %s1379 = scalar_lea.vmem [#allocation12], %s1378
        // Predicated region
        $region69: #{tpu_custom_call.1} parent=47 // pred_check
          %p1380 = pneg %p208
        $region70: #{tpu_custom_call.1} parent=47 // pred_check_branch
          %1382 = sbr.rel (%p1380) target = $region72
        $region71: #{tpu_custom_call.1} parent=47 // pred_region
          #allocation17 [shape = 'u32[6]{0}', space=smem, size = 0x18, scoped, tag = 'DMA stride descriptor']
          %s1383 = smul.u32 8, %s33
          %s1384 = ssub.s32 25, %s1383
          %p1385 = scmp.lt.s32.totalorder %s1384, 8
          %s1386 = scalar_select %p1385, %s1384, 8
          %s1387 = smul.u32 384, %s1386
          %s1389 = ssub.s32 3072, %s1387
          %1390 = vsyncadd %s1371, %s1389
          %p1391 = scmp.ne.s32.totalorder 0, %s1387
          %s1392 = smul.addr %s1383, 128
          %s1393 = scalar_lea.hbm %s7, %s1392
          %s1394 = smul.u32 8, %s1386
          %s1395 = smul.u32 %s1394, 3
          %s1397 = sshll.u32 1, 14
          %s1398 = sxor.u32 4294967295, %s1397
          %s1401 = sshll.u32 7, 18
          %s1402 = sxor.u32 4294967295, %s1401
          %s1403 = sand.u32 0, %s1402
          %s1405 = sor.u32 %s1403, 0
          %s1406 = sshll.u32 %s1374, 4
          %s1407 = int_to_ptr.vmem [resolvable:$true] %s1406
          %s1408 = sshll.u32 %s1395, 4
          %1413 = sst [smem:[#allocation17]] 1024
          %s1414 = scalar_lea.smem [#allocation17], 1
          %1415 = sst [smem:[%s1414]] 3200
          %s1416 = scalar_lea.smem [#allocation17], 2
          %1417 = sst [smem:[%s1416]] %s1386
          %s1418 = scalar_lea.smem [#allocation17], 3
          %1419 = sst [smem:[%s1418]] 128
          %s1420 = scalar_lea.smem [#allocation17], 4
          %1421 = sst [smem:[%s1420]] 128
          %s1422 = scalar_lea.smem [#allocation17], 5
          %1423 = sst [smem:[%s1422]] 8
          %1425 = dma.general (%p1391), %s1407, %s1408, %s1393, %s1371, 131072, [#allocation17], %s1405, 0
        $region72: #{tpu_custom_call.1} parent=47 // pred_fallthru
          _
        // Predicated region
        $region73: #{tpu_custom_call.1} parent=47 // pred_check
          %p1426 = pneg %p234
        $region74: #{tpu_custom_call.1} parent=47 // pred_check_branch
          %1428 = sbr.rel (%p1426) target = $region76
        $region75: #{tpu_custom_call.1} parent=47 // pred_region
          %s1429 = smul.u32 8, %s33
          %s1430 = ssub.s32 25, %s1429
          %p1431 = scmp.lt.s32.totalorder %s1430, 8
          %s1432 = scalar_select %p1431, %s1430, 8
          %s1433 = smul.u32 128, %s1432
          %s1435 = ssub.s32 1024, %s1433
          %1436 = vsyncadd %s1376, %s1435
          %p1437 = scmp.ne.s32.totalorder 0, %s1433
          %s1438 = smul.addr %s1429, 128
          %s1439 = scalar_lea.hbm %s8, %s1438
          %s1440 = smul.u32 8, %s1432
          %s1441 = sshll.u32 %s1379, 4
          %s1442 = int_to_ptr.vmem [resolvable:$true] %s1441
          %s1443 = sshll.u32 %s1440, 4
          %1447 = dma.vmem_to_hbm [thread:$0]  (%p1437), %s1442, %s1443, %s1439, %s1376, 128, 128, 8
        $region76: #{tpu_custom_call.1} parent=47 // pred_fallthru
          _
      $region48: #{tpu_custom_call.1} parent=5 // pred_fallthru
        _
      %p1448 = scmp.le.s32.totalorder 2, %s28
      // Predicated region
      $region77: #{tpu_custom_call.1} parent=5 // pred_check
        %p1449 = pneg %p1448
      $region78: #{tpu_custom_call.1} parent=5 // pred_check_branch
        %1451 = sbr.rel (%p1449) target = $region80
      $region79: #{tpu_custom_call.1} parent=5 // pred_region
        %s1452 = ssub.s32 %s28, 2
        // Predicated region
        $region81: #{tpu_custom_call.1} parent=79 // pred_check
          %p1453 = pneg %p214
        $region82: #{tpu_custom_call.1} parent=79 // pred_check_branch
          %1455 = sbr.rel (%p1453) target = $region84
        $region83: #{tpu_custom_call.1} parent=79 // pred_region
          %s1456 = sand.u32 %s199, 1
          %s1457 = scalar_lea.sflag [#allocation4], %s1456
          %s1458 = sand.u32 %s199, 1
          %s1459 = smul.addr %s1458, 192
          %s1460 = scalar_lea.vmem [#allocation11], %s1459
          %1461 = dma.done %s1457, 3072
        $region84: #{tpu_custom_call.1} parent=79 // pred_fallthru
          _
        // Predicated region
        $region85: #{tpu_custom_call.1} parent=79 // pred_check
          %p1462 = pneg %p240
        $region86: #{tpu_custom_call.1} parent=79 // pred_check_branch
          %1464 = sbr.rel (%p1462) target = $region88
        $region87: #{tpu_custom_call.1} parent=79 // pred_region
          %s1465 = sand.u32 %s225, 1
          %s1466 = scalar_lea.sflag [#allocation13], %s1465
          %s1467 = sand.u32 %s225, 1
          %s1468 = smul.addr %s1467, 64
          %s1469 = scalar_lea.vmem [#allocation12], %s1468
          %1470 = dma.done %s1466, 1024
        $region88: #{tpu_custom_call.1} parent=79 // pred_fallthru
          _
      $region80: #{tpu_custom_call.1} parent=5 // pred_fallthru
        _
    $region6: #{tpu_custom_call.1} parent=1 // loop_footer
      %s32 = sadd.s32 1, %s28
    $region7: #{tpu_custom_call.1} parent=1 // loop_footer_branch
      %27 = sbr.rel target = $region3
    $region8: #{tpu_custom_call.1} parent=1 // loop_exit
      _
    %1471 = vsyncpa [#allocation3], 1
    %s1472 = scalar_lea.sflag [#allocation3], 1
    %1473 = vsyncpa %s1472, 1
    %1474 = vsyncpa [#allocation6], 1
    %s1475 = scalar_lea.sflag [#allocation6], 1
    %1476 = vsyncpa %s1475, 1
    %1477 = vsyncpa [#allocation9], 1
    %1478 = vsyncpa [#allocation4], 1
    %s1479 = scalar_lea.sflag [#allocation4], 1
    %1480 = vsyncpa %s1479, 1
    %1481 = vsyncpa [#allocation13], 1
    %s1482 = scalar_lea.sflag [#allocation13], 1
    %1483 = vsyncpa %s1482, 1

</llo_original>
